<compile_context>
chip_gen: v7x
topology: tpu7x:2x2x1
jax: 0.10.0
libtpu: 0.0.40
codegen_flags: <defaults>
</compile_context>

<pallas_src>
import functools

import jax
import jax.numpy as jnp
from jax.experimental import pallas as pl
from jax.experimental.pallas import tpu as pltpu


# ---------------------------------------------------------------------------
# Kernel 1: direct conv + fused BatchNorm statistics (one batch element/step).
# ---------------------------------------------------------------------------
def _conv_bnstats_kernel(x_ref, w_ref, o_ref, sum_ref, ssq_ref, xpad_ref, *,
                         padding, compute_dtype):
    """x_ref:(1,H,W,Cin)  w_ref:(K,K,Cin,Cout)  o_ref:(1,Ho,Wo,Cout)
    sum_ref/ssq_ref:(1,1,Cout)  xpad_ref: VMEM scratch (H+2P, W+2P, Cin)."""
    _, H, W, Cin = x_ref.shape
    K = w_ref.shape[0]
    Cout = w_ref.shape[3]
    _, Ho, Wo, _ = o_ref.shape
    P = padding

    # Zero-pad inside VMEM: avoids materializing (write + re-read) a padded
    # copy of the input in HBM before the kernel even starts.
    xpad_ref[...] = jnp.zeros_like(xpad_ref)
    xpad_ref[P:P + H, P:P + W, :] = x_ref[0]

    w = w_ref[...].astype(compute_dtype)   # no-op cast when already f32

    # K*K shifted taps, each a (Ho*Wo, Cin) x (Cin, Cout) MXU dot accumulated
    # in f32.  The padded input is VMEM-resident and Wo is a multiple of the
    # sublane tile, so the collapse reshape is a vreg relabeling, not a copy.
    # An explicit (Ho*Wo, K*K*Cin) im2col patch was rejected: at realistic
    # channel counts each tap is already a >=128-deep contraction and the
    # patch would cost K*K x the input VMEM; at the toy Cin=4 the MXU is
    # underutilized either way (a real fix is larger channels / Cout tiling).
    acc = jnp.zeros((Ho * Wo, Cout), jnp.float32)
    for kh in range(K):
        for kw in range(K):
            tap = xpad_ref[kh:kh + Ho, kw:kw + Wo, :].reshape(Ho * Wo, Cin)
            acc = acc + jnp.dot(tap.astype(compute_dtype), w[kh, kw],
                                preferred_element_type=jnp.float32)

    o_ref[0] = acc.reshape(Ho, Wo, Cout).astype(o_ref.dtype)

    # Fused BatchNorm statistics, taken from the live f32 accumulator so the
    # activation never has to be re-read from HBM for a separate stats pass.
    sum_ref[0] = jnp.sum(acc, axis=0, keepdims=True)
    ssq_ref[0] = jnp.sum(acc * acc, axis=0, keepdims=True)


# ---------------------------------------------------------------------------
# Kernel 2: BatchNorm apply (scale/shift) + LeakyReLU, lane-dense and tiled.
# ---------------------------------------------------------------------------
def _bn_apply_lrelu_kernel(y_ref, scale_ref, shift_ref, o_ref, *,
                           negative_slope):
    """y_ref/o_ref:(1,TH,Wo*Cout)  scale_ref/shift_ref:(1,1,Wo*Cout)."""
    z = y_ref[...] * scale_ref[...] + shift_ref[...]
    o_ref[...] = jnp.where(z >= 0, z, negative_slope * z).astype(o_ref.dtype)


def _pick_row_tile(Ho, lane_width, elem_bytes=4, target_bytes=2 * 1024 * 1024):
    """Sublane-aligned row tile that divides Ho, keeps one block O(MiB), and
    leaves >=2 row blocks when possible (both v7x TCs busy even at batch 1)."""
    if Ho % 8 != 0:
        return Ho
    cands = [t for t in range(8, Ho + 1, 8)
             if Ho % t == 0 and t * lane_width * elem_bytes <= target_bytes]
    if not cands:
        return 8
    multi = [t for t in cands if Ho // t >= 2]
    return max(multi) if multi else max(cands)


def conv_block_forward(x_nchw, w_oihw, gamma, beta, padding, *,
                       eps=1e-5, negative_slope=0.1, mxu_dtype=jnp.float32):
    """ConvBlock.forward: Conv2d(stride=1, bias=False) -> BatchNorm2d
    (training-mode batch stats) -> LeakyReLU(0.1)."""
    N, Cin, H, W = x_nchw.shape
    Cout, _, K, _ = w_oihw.shape
    P = int(padding)
    Ho = H + 2 * P - K + 1
    Wo = W + 2 * P - K + 1
    Hp, Wp = H + 2 * P, W + 2 * P
    WoC = Wo * Cout

    # Layout glue (once, at the boundary): NCHW -> NHWC, OIHW -> HWIO.
    x_nhwc = jnp.transpose(x_nchw, (0, 2, 3, 1))
    w_hwio = jnp.transpose(w_oihw, (2, 3, 1, 0))

    conv_kernel = functools.partial(_conv_bnstats_kernel, padding=P,
                                    compute_dtype=mxu_dtype)

    conv_y, sums, ssqs = pl.pallas_call(
        conv_kernel,
        grid=(N,),
        in_specs=[
            pl.BlockSpec((1, H, W, Cin), lambda n: (n, 0, 0, 0)),
            pl.BlockSpec((K, K, Cin, Cout), lambda n: (0, 0, 0, 0)),
        ],
        out_specs=(
            pl.BlockSpec((1, Ho, Wo, Cout), lambda n: (n, 0, 0, 0)),
            pl.BlockSpec((1, 1, Cout), lambda n: (n, 0, 0)),
            pl.BlockSpec((1, 1, Cout), lambda n: (n, 0, 0)),
        ),
        out_shape=(
            jax.ShapeDtypeStruct((N, Ho, Wo, Cout), jnp.float32),
            jax.ShapeDtypeStruct((N, 1, Cout), jnp.float32),
            jax.ShapeDtypeStruct((N, 1, Cout), jnp.float32),
        ),
        scratch_shapes=[pltpu.VMEM((Hp, Wp, Cin), jnp.float32)],
        compiler_params=pltpu.CompilerParams(
            dimension_semantics=("parallel",),      # batch -> both v7x TCs
            vmem_limit_bytes=32 * 1024 * 1024,      # explicit, fits all chips
        ),
    )(x_nhwc, w_hwio)

    # Fold fused statistics into per-channel scale/shift (O(N*Cout) glue).
    # Training-mode BatchNorm2d: biased variance over (N, Ho, Wo), eps=1e-5.
    # Single-pass E[x^2]-E[x]^2 with f32 accumulators; clamp for safety.
    count = N * Ho * Wo
    mean = jnp.sum(sums, axis=(0, 1)) / count
    ex2 = jnp.sum(ssqs, axis=(0, 1)) / count
    var = jnp.maximum(ex2 - mean * mean, 0.0)
    inv = jax.lax.rsqrt(var + eps)
    scale = gamma.astype(jnp.float32) * inv
    shift = beta.astype(jnp.float32) - mean * scale

    # Lane-dense view: (N,Ho,Wo,Cout) -> (N,Ho,Wo*Cout) is a free,
    # contiguity-preserving reshape; scale/shift are pre-tiled to match so the
    # apply pass does unmasked full-lane (>=128) loads/stores.
    y_flat = conv_y.reshape(N, Ho, WoC)
    scale_t = jnp.tile(scale, Wo).reshape(1, 1, WoC)
    shift_t = jnp.tile(shift, Wo).reshape(1, 1, WoC)

    row_tile = _pick_row_tile(Ho, WoC)
    apply_kernel = functools.partial(_bn_apply_lrelu_kernel,
                                     negative_slope=negative_slope)
    out_flat = pl.pallas_call(
        apply_kernel,
        grid=(N, Ho // row_tile),
        in_specs=[
            pl.BlockSpec((1, row_tile, WoC), lambda n, r: (n, r, 0)),
            pl.BlockSpec((1, 1, WoC), lambda n, r: (0, 0, 0)),
            pl.BlockSpec((1, 1, WoC), lambda n, r: (0, 0, 0)),
        ],
        out_specs=pl.BlockSpec((1, row_tile, WoC), lambda n, r: (n, r, 0)),
        out_shape=jax.ShapeDtypeStruct((N, Ho, WoC), jnp.float32),
        compiler_params=pltpu.CompilerParams(
            dimension_semantics=("parallel", "parallel"),
            vmem_limit_bytes=32 * 1024 * 1024,
        ),
    )(y_flat, scale_t, shift_t)

    out_nhwc = out_flat.reshape(N, Ho, Wo, Cout)
    return jnp.transpose(out_nhwc, (0, 3, 1, 2))   # back to NCHW


def _reference(x_nchw, w_oihw, gamma, beta, padding):
    """Pure-JAX reference of the PyTorch forward (for correctness check)."""
    P = padding
    y = jax.lax.conv_general_dilated(
        x_nchw, w_oihw, window_strides=(1, 1), padding=((P, P), (P, P)),
        dimension_numbers=("NCHW", "OIHW", "NCHW"))
    mean = jnp.mean(y, axis=(0, 2, 3), keepdims=True)
    var = jnp.var(y, axis=(0, 2, 3), keepdims=True)  # biased, like BN training
    z = (y - mean) * jax.lax.rsqrt(var + 1e-5)
    z = z * gamma.reshape(1, -1, 1, 1) + beta.reshape(1, -1, 1, 1)
    return jnp.where(z >= 0, z, 0.1 * z)


if __name__ == "__main__":
    # Small, module-consistent shapes: N=2, Cin=4, Cout=8, H=W=16, K=3, P=1.
    N, Cin, Cout, H, W, K, P = 2, 4, 8, 16, 16, 3, 1

    key = jax.random.PRNGKey(0)
    kx, kw = jax.random.split(key)
    x = jax.random.normal(kx, (N, Cin, H, W), dtype=jnp.float32)
    conv_w = 0.1 * jax.random.normal(kw, (Cout, Cin, K, K), dtype=jnp.float32)
    gamma = jnp.ones((Cout,), jnp.float32)   # nn.BatchNorm2d default weight
    beta = jnp.zeros((Cout,), jnp.float32)   # nn.BatchNorm2d default bias

    fwd = jax.jit(functools.partial(conv_block_forward, padding=P))
    out = jax.block_until_ready(fwd(x, conv_w, gamma, beta))

    ref = _reference(x, conv_w, gamma, beta, P)
    assert out.shape == (N, Cout, H, W)
    max_err = float(jnp.max(jnp.abs(out - ref)))
    assert jnp.allclose(out, ref, rtol=2e-4, atol=2e-4), max_err

    print("KERNEL_OK")
</pallas_src>

<mosaic_0001>
module attributes {stable_mosaic.version = 11 : i64} {
  func.func @_conv_bnstats_kernel(%arg0: i32, %arg1: memref<1x16x16x4xf32, #tpu.memory_space<vmem>>, %arg2: memref<3x3x4x8xf32, #tpu.memory_space<vmem>>, %arg3: memref<1x16x16x8xf32, #tpu.memory_space<vmem>>, %arg4: memref<1x1x8xf32, #tpu.memory_space<vmem>>, %arg5: memref<1x1x8xf32, #tpu.memory_space<vmem>>, %arg6: memref<18x18x4xf32, #tpu.memory_space<vmem>>) attributes {dimension_semantics = [#tpu.dimension_semantics<parallel>], iteration_bounds = array<i64: 2>, scalar_prefetch = 0 : i64, scratch_operands = 1 : i64, tpu.core_type = #tpu.core_type<tc>, window_params = [{transform_indices = @transform_0, window_bounds = array<i64: 1, 16, 16, 4>}, {pipeline_mode = #tpu.pipeline_mode<synchronous>, transform_indices = @transform_1, window_bounds = array<i64: 3, 3, 4, 8>}, {transform_indices = @transform_2, window_bounds = array<i64: 1, 16, 16, 8>}, {transform_indices = @transform_3, window_bounds = array<i64: 1, 1, 8>}, {transform_indices = @transform_4, window_bounds = array<i64: 1, 1, 8>}]} {
    %cst = arith.constant 0.000000e+00 : f32
    %0 = vector.broadcast %cst : f32 to vector<18x18x4xf32>
    %c0 = arith.constant 0 : index
    %c0_0 = arith.constant 0 : index
    %c0_1 = arith.constant 0 : index
    %1 = vector.load %arg6[%c0, %c0_0, %c0_1] : memref<18x18x4xf32, #tpu.memory_space<vmem>>, vector<18x18x4xf32>
    tpu.vector_store %arg6[%c0, %c0_0, %c0_1], %0 {strides = array<i32>} : memref<18x18x4xf32, #tpu.memory_space<vmem>>, vector<18x18x4xf32>,
    %c0_2 = arith.constant 0 : index
    %c0_3 = arith.constant 0 : index
    %c0_4 = arith.constant 0 : index
    %c0_5 = arith.constant 0 : index
    %2 = vector.load %arg1[%c0_2, %c0_3, %c0_4, %c0_5] : memref<1x16x16x4xf32, #tpu.memory_space<vmem>>, vector<1x16x16x4xf32>
    %3 = vector.shape_cast %2 : vector<1x16x16x4xf32> to vector<16x16x4xf32>
    %c1 = arith.constant 1 : index
    %c1_6 = arith.constant 1 : index
    %c0_7 = arith.constant 0 : index
    %4 = vector.load %arg6[%c1, %c1_6, %c0_7] : memref<18x18x4xf32, #tpu.memory_space<vmem>>, vector<16x16x4xf32>
    tpu.vector_store %arg6[%c1, %c1_6, %c0_7], %3 {strides = array<i32>} : memref<18x18x4xf32, #tpu.memory_space<vmem>>, vector<16x16x4xf32>,
    %c0_8 = arith.constant 0 : index
    %c0_9 = arith.constant 0 : index
    %c0_10 = arith.constant 0 : index
    %c0_11 = arith.constant 0 : index
    %5 = vector.load %arg2[%c0_8, %c0_9, %c0_10, %c0_11] : memref<3x3x4x8xf32, #tpu.memory_space<vmem>>, vector<3x3x4x8xf32>
    %cst_12 = arith.constant 0.000000e+00 : f32
    %6 = vector.broadcast %cst_12 : f32 to vector<256x8xf32>
    %c0_13 = arith.constant 0 : index
    %c0_14 = arith.constant 0 : index
    %c0_15 = arith.constant 0 : index
    %7 = vector.load %arg6[%c0_13, %c0_14, %c0_15] : memref<18x18x4xf32, #tpu.memory_space<vmem>>, vector<16x16x4xf32>
    %8 = vector.shape_cast %7 : vector<16x16x4xf32> to vector<256x4xf32>
    %9 = vector.extract_strided_slice %5 {offsets = [0, 0, 0, 0], sizes = [1, 1, 4, 8], strides = [1, 1, 1, 1]} : vector<3x3x4x8xf32> to vector<1x1x4x8xf32>
    %10 = vector.shape_cast %9 : vector<1x1x4x8xf32> to vector<4x8xf32>
    %cst_16 = arith.constant dense<0.000000e+00> : vector<256x8xf32>
    %11 = tpu.matmul %8, %10, %cst_16 {dimension_numbers = #tpu.dot_dimension_numbers<[1], [0], [0], [1], [0, 0, 1, 1], [], []>} : vector<256x4xf32>, vector<4x8xf32>, vector<256x8xf32> -> vector<256x8xf32>
    %12 = arith.addf %6, %11 : vector<256x8xf32>
    %c0_17 = arith.constant 0 : index
    %c1_18 = arith.constant 1 : index
    %c0_19 = arith.constant 0 : index
    %13 = vector.load %arg6[%c0_17, %c1_18, %c0_19] : memref<18x18x4xf32, #tpu.memory_space<vmem>>, vector<16x16x4xf32>
    %14 = vector.shape_cast %13 : vector<16x16x4xf32> to vector<256x4xf32>
    %15 = vector.extract_strided_slice %5 {offsets = [0, 1, 0, 0], sizes = [1, 1, 4, 8], strides = [1, 1, 1, 1]} : vector<3x3x4x8xf32> to vector<1x1x4x8xf32>
    %16 = vector.shape_cast %15 : vector<1x1x4x8xf32> to vector<4x8xf32>
    %cst_20 = arith.constant dense<0.000000e+00> : vector<256x8xf32>
    %17 = tpu.matmul %14, %16, %cst_20 {dimension_numbers = #tpu.dot_dimension_numbers<[1], [0], [0], [1], [0, 0, 1, 1], [], []>} : vector<256x4xf32>, vector<4x8xf32>, vector<256x8xf32> -> vector<256x8xf32>
    %18 = arith.addf %12, %17 : vector<256x8xf32>
    %c0_21 = arith.constant 0 : index
    %c2 = arith.constant 2 : index
    %c0_22 = arith.constant 0 : index
    %19 = vector.load %arg6[%c0_21, %c2, %c0_22] : memref<18x18x4xf32, #tpu.memory_space<vmem>>, vector<16x16x4xf32>
    %20 = vector.shape_cast %19 : vector<16x16x4xf32> to vector<256x4xf32>
    %21 = vector.extract_strided_slice %5 {offsets = [0, 2, 0, 0], sizes = [1, 1, 4, 8], strides = [1, 1, 1, 1]} : vector<3x3x4x8xf32> to vector<1x1x4x8xf32>
    %22 = vector.shape_cast %21 : vector<1x1x4x8xf32> to vector<4x8xf32>
    %cst_23 = arith.constant dense<0.000000e+00> : vector<256x8xf32>
    %23 = tpu.matmul %20, %22, %cst_23 {dimension_numbers = #tpu.dot_dimension_numbers<[1], [0], [0], [1], [0, 0, 1, 1], [], []>} : vector<256x4xf32>, vector<4x8xf32>, vector<256x8xf32> -> vector<256x8xf32>
    %24 = arith.addf %18, %23 : vector<256x8xf32>
    %c1_24 = arith.constant 1 : index
    %c0_25 = arith.constant 0 : index
    %c0_26 = arith.constant 0 : index
    %25 = vector.load %arg6[%c1_24, %c0_25, %c0_26] : memref<18x18x4xf32, #tpu.memory_space<vmem>>, vector<16x16x4xf32>
    %26 = vector.shape_cast %25 : vector<16x16x4xf32> to vector<256x4xf32>
    %27 = vector.extract_strided_slice %5 {offsets = [1, 0, 0, 0], sizes = [1, 1, 4, 8], strides = [1, 1, 1, 1]} : vector<3x3x4x8xf32> to vector<1x1x4x8xf32>
    %28 = vector.shape_cast %27 : vector<1x1x4x8xf32> to vector<4x8xf32>
    %cst_27 = arith.constant dense<0.000000e+00> : vector<256x8xf32>
    %29 = tpu.matmul %26, %28, %cst_27 {dimension_numbers = #tpu.dot_dimension_numbers<[1], [0], [0], [1], [0, 0, 1, 1], [], []>} : vector<256x4xf32>, vector<4x8xf32>, vector<256x8xf32> -> vector<256x8xf32>
    %30 = arith.addf %24, %29 : vector<256x8xf32>
    %c1_28 = arith.constant 1 : index
    %c1_29 = arith.constant 1 : index
    %c0_30 = arith.constant 0 : index
    %31 = vector.load %arg6[%c1_28, %c1_29, %c0_30] : memref<18x18x4xf32, #tpu.memory_space<vmem>>, vector<16x16x4xf32>
    %32 = vector.shape_cast %31 : vector<16x16x4xf32> to vector<256x4xf32>
    %33 = vector.extract_strided_slice %5 {offsets = [1, 1, 0, 0], sizes = [1, 1, 4, 8], strides = [1, 1, 1, 1]} : vector<3x3x4x8xf32> to vector<1x1x4x8xf32>
    %34 = vector.shape_cast %33 : vector<1x1x4x8xf32> to vector<4x8xf32>
    %cst_31 = arith.constant dense<0.000000e+00> : vector<256x8xf32>
    %35 = tpu.matmul %32, %34, %cst_31 {dimension_numbers = #tpu.dot_dimension_numbers<[1], [0], [0], [1], [0, 0, 1, 1], [], []>} : vector<256x4xf32>, vector<4x8xf32>, vector<256x8xf32> -> vector<256x8xf32>
    %36 = arith.addf %30, %35 : vector<256x8xf32>
    %c1_32 = arith.constant 1 : index
    %c2_33 = arith.constant 2 : index
    %c0_34 = arith.constant 0 : index
    %37 = vector.load %arg6[%c1_32, %c2_33, %c0_34] : memref<18x18x4xf32, #tpu.memory_space<vmem>>, vector<16x16x4xf32>
    %38 = vector.shape_cast %37 : vector<16x16x4xf32> to vector<256x4xf32>
    %39 = vector.extract_strided_slice %5 {offsets = [1, 2, 0, 0], sizes = [1, 1, 4, 8], strides = [1, 1, 1, 1]} : vector<3x3x4x8xf32> to vector<1x1x4x8xf32>
    %40 = vector.shape_cast %39 : vector<1x1x4x8xf32> to vector<4x8xf32>
    %cst_35 = arith.constant dense<0.000000e+00> : vector<256x8xf32>
    %41 = tpu.matmul %38, %40, %cst_35 {dimension_numbers = #tpu.dot_dimension_numbers<[1], [0], [0], [1], [0, 0, 1, 1], [], []>} : vector<256x4xf32>, vector<4x8xf32>, vector<256x8xf32> -> vector<256x8xf32>
    %42 = arith.addf %36, %41 : vector<256x8xf32>
    %c2_36 = arith.constant 2 : index
    %c0_37 = arith.constant 0 : index
    %c0_38 = arith.constant 0 : index
    %43 = vector.load %arg6[%c2_36, %c0_37, %c0_38] : memref<18x18x4xf32, #tpu.memory_space<vmem>>, vector<16x16x4xf32>
    %44 = vector.shape_cast %43 : vector<16x16x4xf32> to vector<256x4xf32>
    %45 = vector.extract_strided_slice %5 {offsets = [2, 0, 0, 0], sizes = [1, 1, 4, 8], strides = [1, 1, 1, 1]} : vector<3x3x4x8xf32> to vector<1x1x4x8xf32>
    %46 = vector.shape_cast %45 : vector<1x1x4x8xf32> to vector<4x8xf32>
    %cst_39 = arith.constant dense<0.000000e+00> : vector<256x8xf32>
    %47 = tpu.matmul %44, %46, %cst_39 {dimension_numbers = #tpu.dot_dimension_numbers<[1], [0], [0], [1], [0, 0, 1, 1], [], []>} : vector<256x4xf32>, vector<4x8xf32>, vector<256x8xf32> -> vector<256x8xf32>
    %48 = arith.addf %42, %47 : vector<256x8xf32>
    %c2_40 = arith.constant 2 : index
    %c1_41 = arith.constant 1 : index
    %c0_42 = arith.constant 0 : index
    %49 = vector.load %arg6[%c2_40, %c1_41, %c0_42] : memref<18x18x4xf32, #tpu.memory_space<vmem>>, vector<16x16x4xf32>
    %50 = vector.shape_cast %49 : vector<16x16x4xf32> to vector<256x4xf32>
    %51 = vector.extract_strided_slice %5 {offsets = [2, 1, 0, 0], sizes = [1, 1, 4, 8], strides = [1, 1, 1, 1]} : vector<3x3x4x8xf32> to vector<1x1x4x8xf32>
    %52 = vector.shape_cast %51 : vector<1x1x4x8xf32> to vector<4x8xf32>
    %cst_43 = arith.constant dense<0.000000e+00> : vector<256x8xf32>
    %53 = tpu.matmul %50, %52, %cst_43 {dimension_numbers = #tpu.dot_dimension_numbers<[1], [0], [0], [1], [0, 0, 1, 1], [], []>} : vector<256x4xf32>, vector<4x8xf32>, vector<256x8xf32> -> vector<256x8xf32>
    %54 = arith.addf %48, %53 : vector<256x8xf32>
    %c2_44 = arith.constant 2 : index
    %c2_45 = arith.constant 2 : index
    %c0_46 = arith.constant 0 : index
    %55 = vector.load %arg6[%c2_44, %c2_45, %c0_46] : memref<18x18x4xf32, #tpu.memory_space<vmem>>, vector<16x16x4xf32>
    %56 = vector.shape_cast %55 : vector<16x16x4xf32> to vector<256x4xf32>
    %57 = vector.extract_strided_slice %5 {offsets = [2, 2, 0, 0], sizes = [1, 1, 4, 8], strides = [1, 1, 1, 1]} : vector<3x3x4x8xf32> to vector<1x1x4x8xf32>
    %58 = vector.shape_cast %57 : vector<1x1x4x8xf32> to vector<4x8xf32>
    %cst_47 = arith.constant dense<0.000000e+00> : vector<256x8xf32>
    %59 = tpu.matmul %56, %58, %cst_47 {dimension_numbers = #tpu.dot_dimension_numbers<[1], [0], [0], [1], [0, 0, 1, 1], [], []>} : vector<256x4xf32>, vector<4x8xf32>, vector<256x8xf32> -> vector<256x8xf32>
    %60 = arith.addf %54, %59 : vector<256x8xf32>
    %61 = vector.shape_cast %60 : vector<256x8xf32> to vector<16x16x8xf32>
    %c0_48 = arith.constant 0 : index
    %c0_49 = arith.constant 0 : index
    %c0_50 = arith.constant 0 : index
    %c0_51 = arith.constant 0 : index
    %62 = vector.load %arg3[%c0_48, %c0_49, %c0_50, %c0_51] : memref<1x16x16x8xf32, #tpu.memory_space<vmem>>, vector<1x16x16x8xf32>
    %63 = vector.shape_cast %62 : vector<1x16x16x8xf32> to vector<16x16x8xf32>
    %64 = vector.shape_cast %61 : vector<16x16x8xf32> to vector<1x16x16x8xf32>
    tpu.vector_store %arg3[%c0_48, %c0_49, %c0_50, %c0_51], %64 {strides = array<i32>} : memref<1x16x16x8xf32, #tpu.memory_space<vmem>>, vector<1x16x16x8xf32>,
    %cst_52 = arith.constant dense<0.000000e+00> : vector<8xf32>
    %65 = vector.multi_reduction <add>, %60, %cst_52 [0] : vector<256x8xf32> to vector<8xf32>
    %66 = vector.shape_cast %65 : vector<8xf32> to vector<1x8xf32>
    %c0_53 = arith.constant 0 : index
    %c0_54 = arith.constant 0 : index
    %c0_55 = arith.constant 0 : index
    %67 = vector.load %arg4[%c0_53, %c0_54, %c0_55] : memref<1x1x8xf32, #tpu.memory_space<vmem>>, vector<1x1x8xf32>
    %68 = vector.shape_cast %67 : vector<1x1x8xf32> to vector<1x8xf32>
    %69 = vector.shape_cast %66 : vector<1x8xf32> to vector<1x1x8xf32>
    tpu.vector_store %arg4[%c0_53, %c0_54, %c0_55], %69 {strides = array<i32>} : memref<1x1x8xf32, #tpu.memory_space<vmem>>, vector<1x1x8xf32>,
    %70 = arith.mulf %60, %60 : vector<256x8xf32>
    %cst_56 = arith.constant dense<0.000000e+00> : vector<8xf32>
    %71 = vector.multi_reduction <add>, %70, %cst_56 [0] : vector<256x8xf32> to vector<8xf32>
    %72 = vector.shape_cast %71 : vector<8xf32> to vector<1x8xf32>
    %c0_57 = arith.constant 0 : index
    %c0_58 = arith.constant 0 : index
    %c0_59 = arith.constant 0 : index
    %73 = vector.load %arg5[%c0_57, %c0_58, %c0_59] : memref<1x1x8xf32, #tpu.memory_space<vmem>>, vector<1x1x8xf32>
    %74 = vector.shape_cast %73 : vector<1x1x8xf32> to vector<1x8xf32>
    %75 = vector.shape_cast %72 : vector<1x8xf32> to vector<1x1x8xf32>
    tpu.vector_store %arg5[%c0_57, %c0_58, %c0_59], %75 {strides = array<i32>} : memref<1x1x8xf32, #tpu.memory_space<vmem>>, vector<1x1x8xf32>,
    return
  }
  func.func @transform_0(%arg0: i32) -> (i32, i32, i32, i32) {
    %c0_i32 = arith.constant 0 : i32
    %c0_i32_0 = arith.constant 0 : i32
    %c0_i32_1 = arith.constant 0 : i32
    %c0_i32_2 = arith.constant 0 : i32
    return %arg0, %c0_i32, %c0_i32_0, %c0_i32_1 : i32, i32, i32, i32
  }
  func.func @transform_1(%arg0: i32) -> (i32, i32, i32, i32) {
    %c0_i32 = arith.constant 0 : i32
    %c0_i32_0 = arith.constant 0 : i32
    %c0_i32_1 = arith.constant 0 : i32
    %c0_i32_2 = arith.constant 0 : i32
    %c0_i32_3 = arith.constant 0 : i32
    return %c0_i32, %c0_i32_0, %c0_i32_1, %c0_i32_2 : i32, i32, i32, i32
  }
  func.func @transform_2(%arg0: i32) -> (i32, i32, i32, i32) {
    %c0_i32 = arith.constant 0 : i32
    %c0_i32_0 = arith.constant 0 : i32
    %c0_i32_1 = arith.constant 0 : i32
    %c0_i32_2 = arith.constant 0 : i32
    return %arg0, %c0_i32, %c0_i32_0, %c0_i32_1 : i32, i32, i32, i32
  }
  func.func @transform_3(%arg0: i32) -> (i32, i32, i32) {
    %c0_i32 = arith.constant 0 : i32
    %c0_i32_0 = arith.constant 0 : i32
    %c0_i32_1 = arith.constant 0 : i32
    return %arg0, %c0_i32, %c0_i32_0 : i32, i32, i32
  }
  func.func @transform_4(%arg0: i32) -> (i32, i32, i32) {
    %c0_i32 = arith.constant 0 : i32
    %c0_i32_0 = arith.constant 0 : i32
    %c0_i32_1 = arith.constant 0 : i32
    return %arg0, %c0_i32, %c0_i32_0 : i32, i32, i32
  }
}

module attributes {stable_mosaic.version = 11 : i64} {
  func.func @_bn_apply_lrelu_kernel(%arg0: i32, %arg1: i32, %arg2: memref<1x8x128xf32, #tpu.memory_space<vmem>>, %arg3: memref<1x1x128xf32, #tpu.memory_space<vmem>>, %arg4: memref<1x1x128xf32, #tpu.memory_space<vmem>>, %arg5: memref<1x8x128xf32, #tpu.memory_space<vmem>>) attributes {dimension_semantics = [#tpu.dimension_semantics<parallel>, #tpu.dimension_semantics<parallel>], iteration_bounds = array<i64: 2, 2>, scalar_prefetch = 0 : i64, scratch_operands = 0 : i64, tpu.core_type = #tpu.core_type<tc>, window_params = [{transform_indices = @transform_0, window_bounds = array<i64: 1, 8, 128>}, {pipeline_mode = #tpu.pipeline_mode<synchronous>, transform_indices = @transform_1, window_bounds = array<i64: 1, 1, 128>}, {pipeline_mode = #tpu.pipeline_mode<synchronous>, transform_indices = @transform_2, window_bounds = array<i64: 1, 1, 128>}, {transform_indices = @transform_3, window_bounds = array<i64: 1, 8, 128>}]} {
    %c0 = arith.constant 0 : index
    %c0_0 = arith.constant 0 : index
    %c0_1 = arith.constant 0 : index
    %0 = vector.load %arg2[%c0, %c0_0, %c0_1] : memref<1x8x128xf32, #tpu.memory_space<vmem>>, vector<1x8x128xf32>
    %c0_2 = arith.constant 0 : index
    %c0_3 = arith.constant 0 : index
    %c0_4 = arith.constant 0 : index
    %1 = vector.load %arg3[%c0_2, %c0_3, %c0_4] : memref<1x1x128xf32, #tpu.memory_space<vmem>>, vector<1x1x128xf32>
    %2 = vector.broadcast %1 : vector<1x1x128xf32> to vector<1x8x128xf32>
    %3 = arith.mulf %0, %2 : vector<1x8x128xf32>
    %c0_5 = arith.constant 0 : index
    %c0_6 = arith.constant 0 : index
    %c0_7 = arith.constant 0 : index
    %4 = vector.load %arg4[%c0_5, %c0_6, %c0_7] : memref<1x1x128xf32, #tpu.memory_space<vmem>>, vector<1x1x128xf32>
    %5 = vector.broadcast %4 : vector<1x1x128xf32> to vector<1x8x128xf32>
    %6 = arith.addf %3, %5 : vector<1x8x128xf32>
    %cst = arith.constant 0.000000e+00 : f32
    %7 = vector.broadcast %cst : f32 to vector<1x8x128xf32>
    %8 = arith.cmpf oge, %6, %7 : vector<1x8x128xf32>
    %cst_8 = arith.constant 1.000000e-01 : f32
    %9 = vector.broadcast %cst_8 : f32 to vector<1x8x128xf32>
    %10 = arith.mulf %9, %6 : vector<1x8x128xf32>
    %11 = arith.select %8, %6, %10 : vector<1x8x128xi1>, vector<1x8x128xf32>
    %c0_9 = arith.constant 0 : index
    %c0_10 = arith.constant 0 : index
    %c0_11 = arith.constant 0 : index
    %12 = vector.load %arg5[%c0_9, %c0_10, %c0_11] : memref<1x8x128xf32, #tpu.memory_space<vmem>>, vector<1x8x128xf32>
    tpu.vector_store %arg5[%c0_9, %c0_10, %c0_11], %11 {strides = array<i32>} : memref<1x8x128xf32, #tpu.memory_space<vmem>>, vector<1x8x128xf32>,
    return
  }
  func.func @transform_0(%arg0: i32, %arg1: i32) -> (i32, i32, i32) {
    %c0_i32 = arith.constant 0 : i32
    %c0_i32_0 = arith.constant 0 : i32
    return %arg0, %arg1, %c0_i32 : i32, i32, i32
  }
  func.func @transform_1(%arg0: i32, %arg1: i32) -> (i32, i32, i32) {
    %c0_i32 = arith.constant 0 : i32
    %c0_i32_0 = arith.constant 0 : i32
    %c0_i32_1 = arith.constant 0 : i32
    %c0_i32_2 = arith.constant 0 : i32
    return %c0_i32, %c0_i32_0, %c0_i32_1 : i32, i32, i32
  }
  func.func @transform_2(%arg0: i32, %arg1: i32) -> (i32, i32, i32) {
    %c0_i32 = arith.constant 0 : i32
    %c0_i32_0 = arith.constant 0 : i32
    %c0_i32_1 = arith.constant 0 : i32
    %c0_i32_2 = arith.constant 0 : i32
    return %c0_i32, %c0_i32_0, %c0_i32_1 : i32, i32, i32
  }
  func.func @transform_3(%arg0: i32, %arg1: i32) -> (i32, i32, i32) {
    %c0_i32 = arith.constant 0 : i32
    %c0_i32_0 = arith.constant 0 : i32
    return %arg0, %arg1, %c0_i32 : i32, i32, i32
  }
}

</mosaic_0001>

<llo_original>
// kernel: tile.18
$region0: #{tile.18}
  #allocation0 [shape = 's32[1]{0}', space=sflag, size = 0x4, scoped, tag = 'scoped memory for tile.18']
  %s0 = inlined_call_operand.vmem [shape: f32[8], index: 0, kind: input, shape index: {}]
  %s1 = inlined_call_operand.vmem [shape: f32[16,8], index: 1, kind: output, shape index: {}]
  // Predicated region
  $region2: #{tile.18} parent=0 // pred_check
    _
  $region3: #{tile.18} parent=0 // pred_check_branch
    %3 = sbr.rel (0) target = $region5
  $region4: #{tile.18} parent=0 // pred_region
    _
  $region5: #{tile.18} parent=0 // pred_fallthru
    _
  %v4 = vld [vmem:[%s0] ss:$0 sm:$0xff]
  %5 = vst [vmem:[%s1] sm:$0xff] %v4
  %s6 = scalar_lea.vmem %s1, 8
  %7 = vst [vmem:[%s6] sm:$0xff] %v4

// kernel: tile.19
$region0: #{tile.19}
  %s0 = inlined_call_operand.vmem [shape: f32[16,8], index: 0, kind: input, shape index: {}]
  %s1 = inlined_call_operand.vmem [shape: f32[1,1,128], index: 1, kind: output, shape index: {}]
  $region1: #{tile.19} parent=0
    #allocation0 [shape = 'u8[4096]{0}', space=vmem, size = 0x1000, scoped, tag = 'scoped mem for output reshape']
    %v2 = vld [vmem:[%s0] sm:$0x1]
    %vm3 = vcmask 64512
    %4 = vst.msk [vmem:[#allocation0] sm:$0x1] %vm3, %v2
    %s5 = scalar_lea.vmem %s0, 15
    %v6 = vld [vmem:[%s5] sm:$0x1]
    %7 = vrot.lane.b32.xlu0 %v6, 120
    %v8 = vpop.permute.xlu0 %7
    %vm9 = vcmask 1048512
    %10 = vst.msk [vmem:[#allocation0] sm:$0x1] %vm9, %v8
    %s11 = scalar_lea.vmem %s0, 14
    %v12 = vld [vmem:[%s11] sm:$0x1]
    %13 = vrot.lane.b32.xlu0 %v12, 112
    %v14 = vpop.permute.xlu0 %13
    %vm15 = vcmask 982912
    %16 = vst.msk [vmem:[#allocation0] sm:$0x1] %vm15, %v14
    %s17 = scalar_lea.vmem %s0, 13
    %v18 = vld [vmem:[%s17] sm:$0x1]
    %19 = vrot.lane.b32.xlu0 %v18, 104
    %v20 = vpop.permute.xlu0 %19
    %vm21 = vcmask 917312
    %22 = vst.msk [vmem:[#allocation0] sm:$0x1] %vm21, %v20
    %s23 = scalar_lea.vmem %s0, 12
    %v24 = vld [vmem:[%s23] sm:$0x1]
    %25 = vrot.lane.b32.xlu0 %v24, 96
    %v26 = vpop.permute.xlu0 %25
    %vm27 = vcmask 851712
    %28 = vst.msk [vmem:[#allocation0] sm:$0x1] %vm27, %v26
    %s29 = scalar_lea.vmem %s0, 11
    %v30 = vld [vmem:[%s29] sm:$0x1]
    %31 = vrot.lane.b32.xlu0 %v30, 88
    %v32 = vpop.permute.xlu0 %31
    %vm33 = vcmask 786112
    %34 = vst.msk [vmem:[#allocation0] sm:$0x1] %vm33, %v32
    %s35 = scalar_lea.vmem %s0, 10
    %v36 = vld [vmem:[%s35] sm:$0x1]
    %37 = vrot.lane.b32.xlu0 %v36, 80
    %v38 = vpop.permute.xlu0 %37
    %vm39 = vcmask 720512
    %40 = vst.msk [vmem:[#allocation0] sm:$0x1] %vm39, %v38
    %s41 = scalar_lea.vmem %s0, 9
    %v42 = vld [vmem:[%s41] sm:$0x1]
    %43 = vrot.lane.b32.xlu0 %v42, 72
    %v44 = vpop.permute.xlu0 %43
    %vm45 = vcmask 654912
    %46 = vst.msk [vmem:[#allocation0] sm:$0x1] %vm45, %v44
    %s47 = scalar_lea.vmem %s0, 8
    %v48 = vld [vmem:[%s47] sm:$0x1]
    %49 = vrot.lane.b32.xlu0 %v48, 64
    %v50 = vpop.permute.xlu0 %49
    %vm51 = vcmask 589312
    %52 = vst.msk [vmem:[#allocation0] sm:$0x1] %vm51, %v50
    %s53 = scalar_lea.vmem %s0, 7
    %v54 = vld [vmem:[%s53] sm:$0x1]
    %55 = vrot.lane.b32.xlu0 %v54, 56
    %v56 = vpop.permute.xlu0 %55
    %vm57 = vcmask 523712
    %58 = vst.msk [vmem:[#allocation0] sm:$0x1] %vm57, %v56
    %s59 = scalar_lea.vmem %s0, 6
    %v60 = vld [vmem:[%s59] sm:$0x1]
    %61 = vrot.lane.b32.xlu0 %v60, 48
    %v62 = vpop.permute.xlu0 %61
    %vm63 = vcmask 458112
    %64 = vst.msk [vmem:[#allocation0] sm:$0x1] %vm63, %v62
    %s65 = scalar_lea.vmem %s0, 5
    %v66 = vld [vmem:[%s65] sm:$0x1]
    %67 = vrot.lane.b32.xlu0 %v66, 40
    %v68 = vpop.permute.xlu0 %67
    %vm69 = vcmask 392512
    %70 = vst.msk [vmem:[#allocation0] sm:$0x1] %vm69, %v68
    %s71 = scalar_lea.vmem %s0, 4
    %v72 = vld [vmem:[%s71] sm:$0x1]
    %73 = vrot.lane.b32.xlu0 %v72, 32
    %v74 = vpop.permute.xlu0 %73
    %vm75 = vcmask 326912
    %76 = vst.msk [vmem:[#allocation0] sm:$0x1] %vm75, %v74
    %s77 = scalar_lea.vmem %s0, 3
    %v78 = vld [vmem:[%s77] sm:$0x1]
    %79 = vrot.lane.b32.xlu0 %v78, 24
    %v80 = vpop.permute.xlu0 %79
    %vm81 = vcmask 261312
    %82 = vst.msk [vmem:[#allocation0] sm:$0x1] %vm81, %v80
    %s83 = scalar_lea.vmem %s0, 2
    %v84 = vld [vmem:[%s83] sm:$0x1]
    %85 = vrot.lane.b32.xlu0 %v84, 16
    %v86 = vpop.permute.xlu0 %85
    %vm87 = vcmask 195712
    %88 = vst.msk [vmem:[#allocation0] sm:$0x1] %vm87, %v86
    %s89 = scalar_lea.vmem %s0, 1
    %v90 = vld [vmem:[%s89] sm:$0x1]
    %91 = vrot.lane.b32.xlu0 %v90, 8
    %v92 = vpop.permute.xlu0 %91
    %vm93 = vcmask 130112
    %94 = vst.msk [vmem:[#allocation0] sm:$0x1] %vm93, %v92
    %s96 = sshllo.u32 0, 1
    %v98 = vld [vmem:[#allocation0] sm:%s96]
    %s99 = sshllo.u32 0, 1
    %100 = vst [vmem:[%s1] sm:%s99] %v98

// kernel: conv_block_forward.3
$region0: #{conv_block_forward.3}
  #allocation0 [shape = 'u32[]', space=smem, size = 0x4, offset = 0x4, fixed_abs, tag = 'smem constant byte address 0x4 - core index']
  #allocation1 [shape = 'u32[144,128]{1,0:T(1,128)}', space=vmem, size = 0x12000, scoped, tag = 'internal scratch']
  %s0 = inlined_call_operand.vmem [shape: f32[2,16,128], index: 0, kind: input, shape index: {}]
  %s1 = inlined_call_operand.vmem [shape: f32[1,1,128], index: 1, kind: input, shape index: {}]
  %s2 = inlined_call_operand.vmem [shape: f32[1,1,128], index: 2, kind: input, shape index: {}]
  %s3 = inlined_call_operand.vmem [shape: f32[2,16,128], index: 3, kind: output, shape index: {}]
  %s4 = sld [smem:[#allocation0]]
  $region45: #{conv_block_forward.3} parent=0
    _
  %s6 = ssub.s32 1, %s4
  %s7 = scalar_select 0, %s6, %s4
  loop: start=0, step=1, limit=6
  $region2: #{conv_block_forward.3} parent=0 // loop_pre_header
    _
  $region3: #{conv_block_forward.3} parent=0 // loop_header
    %s9 = sphi 0, %s13
    %p10 = scmp.ge.s32.totalorder %s9, 6
    %s16 = sphi 0, %s28
    %s17 = sphi 0, %s24
    %s18 = sphi 0, %s16
    %s19 = sphi 0, %s17
    %s20 = sphi 0, %s18
    %s21 = sphi 0, %s19
    %s33 = sphi 0, %s35
    %s36 = sphi 0, %s33
    %s37 = sphi 0, %s36
    %s53 = sphi 0, %s37
    %s57 = sphi 0, %s57
    %s59 = sphi 0, %s57
    %s60 = sphi 0, %s59
    %s74 = sphi 0, %s60
    %s78 = sphi 0, %s78
    %s80 = sphi 0, %s78
    %s81 = sphi 0, %s80
    %s95 = sphi 0, %s81
    %s103 = sphi 0, %s105
    %s106 = sphi 0, %s103
    %s107 = sphi 0, %s106
    %s123 = sphi 0, %s107
  $region4: #{conv_block_forward.3} parent=0 // loop_header_branch
    %12 = sbr.rel (%p10) target = $region8
  $region5: #{conv_block_forward.3} parent=0 // loop_body
    %s14 = ssub.s32 %s9, 1
    %s15 = ssub.s32 %s9, 2
    %s22 = sadd.s32 1, %s17
    %p23 = scmp.ge.s32.totalorder %s22, 2
    %s24 = scalar_select %p23, 0, %s22
    %s25 = sadd.s32 1, %s16
    %s26 = scalar_select %p23, %s25, %s16
    %p27 = scmp.ge.s32.totalorder %s26, 2
    %s28 = scalar_select %p27, 0, %s26
    %s29 = ssub.s32 %s16, %s28
    %s30 = ssub.s32 %s17, %s24
    %s31 = sor.u32 %s29, %s30
    %p32 = scmp.eq.s32.totalorder %s31, 0
    %s34 = sadd.s32 %s33, 1
    %s35 = scalar_select %p32, %s33, %s34
    %p38 = pneg %p32
    %p39 = scmp.eq.s32.totalorder %s9, 3
    %p40 = por %p38, %p39
    %p41 = scmp.ne.s32.totalorder %s33, %s36
    %p42 = scmp.eq.s32.totalorder %s9, 0
    %p43 = por %p41, %p42
    %p44 = scmp.ne.s32.totalorder %s33, %s36
    %p45 = scmp.eq.s32.totalorder %s14, 3
    %p46 = por %p44, %p45
    %p47 = scmp.ne.s32.totalorder %s36, %s37
    %p48 = scmp.eq.s32.totalorder %s14, 0
    %p49 = por %p47, %p48
    %p50 = scmp.ne.s32.totalorder %s36, %s37
    %p51 = scmp.eq.s32.totalorder %s15, 3
    %p52 = por %p50, %p51
    %p54 = scmp.ne.s32.totalorder %s37, %s53
    %p55 = scmp.eq.s32.totalorder %s15, 0
    %p56 = por %p54, %p55
    %s58 = sadd.s32 %s57, 1
    %p61 = scmp.eq.s32.totalorder %s9, 3
    %p62 = scmp.ne.s32.totalorder %s57, %s59
    %p63 = scmp.eq.s32.totalorder %s9, 0
    %p64 = por %p62, %p63
    %p65 = scmp.ne.s32.totalorder %s57, %s59
    %p66 = scmp.eq.s32.totalorder %s14, 3
    %p67 = por %p65, %p66
    %p68 = scmp.ne.s32.totalorder %s59, %s60
    %p69 = scmp.eq.s32.totalorder %s14, 0
    %p70 = por %p68, %p69
    %p71 = scmp.ne.s32.totalorder %s59, %s60
    %p72 = scmp.eq.s32.totalorder %s15, 3
    %p73 = por %p71, %p72
    %p75 = scmp.ne.s32.totalorder %s60, %s74
    %p76 = scmp.eq.s32.totalorder %s15, 0
    %p77 = por %p75, %p76
    %s79 = sadd.s32 %s78, 1
    %p82 = scmp.eq.s32.totalorder %s9, 3
    %p83 = scmp.ne.s32.totalorder %s78, %s80
    %p84 = scmp.eq.s32.totalorder %s9, 0
    %p85 = por %p83, %p84
    %p86 = scmp.ne.s32.totalorder %s78, %s80
    %p87 = scmp.eq.s32.totalorder %s14, 3
    %p88 = por %p86, %p87
    %p89 = scmp.ne.s32.totalorder %s80, %s81
    %p90 = scmp.eq.s32.totalorder %s14, 0
    %p91 = por %p89, %p90
    %p92 = scmp.ne.s32.totalorder %s80, %s81
    %p93 = scmp.eq.s32.totalorder %s15, 3
    %p94 = por %p92, %p93
    %p96 = scmp.ne.s32.totalorder %s81, %s95
    %p97 = scmp.eq.s32.totalorder %s15, 0
    %p98 = por %p96, %p97
    %s99 = ssub.s32 %s16, %s28
    %s100 = ssub.s32 %s17, %s24
    %s101 = sor.u32 %s99, %s100
    %p102 = scmp.eq.s32.totalorder %s101, 0
    %s104 = sadd.s32 %s103, 1
    %s105 = scalar_select %p102, %s103, %s104
    %p108 = pneg %p102
    %p109 = scmp.eq.s32.totalorder %s9, 3
    %p110 = por %p108, %p109
    %p111 = scmp.ne.s32.totalorder %s103, %s106
    %p112 = scmp.eq.s32.totalorder %s9, 0
    %p113 = por %p111, %p112
    %p114 = scmp.ne.s32.totalorder %s103, %s106
    %p115 = scmp.eq.s32.totalorder %s14, 3
    %p116 = por %p114, %p115
    %p117 = scmp.ne.s32.totalorder %s106, %s107
    %p118 = scmp.eq.s32.totalorder %s14, 0
    %p119 = por %p117, %p118
    %p120 = scmp.ne.s32.totalorder %s106, %s107
    %p121 = scmp.eq.s32.totalorder %s15, 3
    %p122 = por %p120, %p121
    %p124 = scmp.ne.s32.totalorder %s107, %s123
    %p125 = scmp.eq.s32.totalorder %s15, 0
    %p126 = por %p124, %p125
    %p127 = scmp.le.s32.totalorder 1, %s9
    %p128 = scmp.lt.s32.totalorder %s9, 5
    %p129 = pnand %p127, %p128
    %p130 = pneg %p129
    // Predicated region
    $region9: #{conv_block_forward.3} parent=5 // pred_check
      _
    $region10: #{conv_block_forward.3} parent=5 // pred_check_branch
      %132 = sbr.rel (%p129) target = $region12
    $region11: #{conv_block_forward.3} parent=5 // pred_region
      %s133 = ssub.s32 %s9, 1
      // Predicated region
      $region13: #{conv_block_forward.3} parent=11 // pred_check
        %p134 = pneg %p70
      $region14: #{conv_block_forward.3} parent=11 // pred_check_branch
        %136 = sbr.rel (%p134) target = $region16
      $region15: #{conv_block_forward.3} parent=11 // pred_region
        _
      $region16: #{conv_block_forward.3} parent=11 // pred_fallthru
        _
      // Predicated region
      $region17: #{conv_block_forward.3} parent=11 // pred_check
        %p137 = pneg %p91
      $region18: #{conv_block_forward.3} parent=11 // pred_check_branch
        %139 = sbr.rel (%p137) target = $region20
      $region19: #{conv_block_forward.3} parent=11 // pred_region
        _
      $region20: #{conv_block_forward.3} parent=11 // pred_fallthru
        _
    $region12: #{conv_block_forward.3} parent=5 // pred_fallthru
      _
    %p140 = scmp.lt.s32.totalorder %s9, 4
    // Predicated region
    $region21: #{conv_block_forward.3} parent=5 // pred_check
      %p141 = pneg %p140
    $region22: #{conv_block_forward.3} parent=5 // pred_check_branch
      %143 = sbr.rel (%p141) target = $region24
    $region23: #{conv_block_forward.3} parent=5 // pred_region
      // Predicated region
      $region25: #{conv_block_forward.3} parent=23 // pred_check
        %p144 = pneg %p43
      $region26: #{conv_block_forward.3} parent=23 // pred_check_branch
        %146 = sbr.rel (%p144) target = $region28
      $region27: #{conv_block_forward.3} parent=23 // pred_region
        %p147 = scmp.lt.s32.totalorder %s16, 1
        %s148 = scalar_select %p147, %s16, 1
        %p149 = scmp.lt.s32.totalorder %s17, 1
        %s150 = scalar_select %p149, %s17, 1
        %s151 = smul.addr %s148, 2
        %s152 = sadd.s32 %s150, %s151
        %s153 = smul.addr %s152, 8
        %s154 = scalar_lea.vmem %s0, %s153
      $region28: #{conv_block_forward.3} parent=23 // pred_fallthru
        _
    $region24: #{conv_block_forward.3} parent=5 // pred_fallthru
      _
    %p155 = scmp.le.s32.totalorder 1, %s9
    %p156 = scmp.lt.s32.totalorder %s9, 5
    %p157 = pnand %p155, %p156
    %p158 = pneg %p157
    // Predicated region
    $region29: #{conv_block_forward.3} parent=5 // pred_check
      _
    $region30: #{conv_block_forward.3} parent=5 // pred_check_branch
      %160 = sbr.rel (%p157) target = $region32
    $region31: #{conv_block_forward.3} parent=5 // pred_region
      %s161 = ssub.s32 %s9, 1
      %p162 = scmp.lt.s32.totalorder %s18, 1
      %s163 = scalar_select %p162, %s18, 1
      %p164 = scmp.lt.s32.totalorder %s19, 1
      %s165 = scalar_select %p164, %s19, 1
      %s166 = smul.addr %s163, 2
      %s167 = sadd.s32 %s165, %s166
      %s168 = smul.addr %s167, 8
      %s169 = scalar_lea.vmem %s0, %s168
      %p170 = pneg %p49
      %p171 = pneg %p46
      %p172 = pneg %p70
      %p173 = pneg %p67
      %p174 = pneg %p91
      %p175 = pneg %p88
      %p176 = pneg %p119
      %p177 = pneg %p116
      %p178 = scmp.lt.s32.totalorder %s18, 1
      %s179 = scalar_select %p178, %s18, 1
      %p180 = scmp.lt.s32.totalorder %s19, 1
      %s181 = scalar_select %p180, %s19, 1
      %s182 = smul.addr %s179, 2
      %s183 = sadd.s32 %s181, %s182
      %s184 = smul.addr %s183, 8
      %s185 = scalar_lea.vmem %s3, %s184
      %p186 = scmp.lt.s32.totalorder %s18, 1
      %s187 = scalar_select %p186, %s18, 1
      %p188 = scmp.lt.s32.totalorder %s19, 1
      %s189 = scalar_select %p188, %s19, 1
      %s190 = smul.addr %s187, 2
      %s191 = sadd.s32 %s189, %s190
      %s192 = smul.addr %s191, 8
      %s193 = scalar_lea.vmem %s0, %s192
      %p194 = scmp.lt.s32.totalorder %s18, 1
      %s195 = scalar_select %p194, %s18, 1
      %p196 = scmp.lt.s32.totalorder %s19, 1
      %s197 = scalar_select %p196, %s19, 1
      %s198 = smul.addr %s195, 2
      %s199 = sadd.s32 %s197, %s198
      %s200 = smul.addr %s199, 8
      %s201 = scalar_lea.vmem %s3, %s200
      %v202 = vld [vmem:[%s193] sm:$0xff]
      %v203 = vld [vmem:[%s1] sm:$0x1]
      %v205 = vlaneseq
      %v206 = vshrl.u32 %v205, 7
      %v207 = vsub.s32 0, %v206
      %v208 = vrot.slane %v203, %v207
      %v210 = vmul.f32 %v202, %v208
      %v211 = vld [vmem:[%s2] sm:$0x1]
      %v213 = vlaneseq
      %v214 = vshrl.u32 %v213, 7
      %v215 = vsub.s32 0, %v214
      %v216 = vrot.slane %v211, %v215
      %v218 = vadd.f32 %v210, %v216
      %vm219 = vcmp.ge.f32.partialorder %v218, 0.0
      %v220 = vmul.f32 %v218, 0.1
      %v221 = vsel %vm219, %v218, %v220
      %222 = vst [vmem:[%s201] sm:$0xff] %v221
      %p223 = scmp.lt.s32.totalorder %s18, 1
      %s224 = scalar_select %p223, %s18, 1
      %p225 = scmp.lt.s32.totalorder %s19, 1
      %s226 = scalar_select %p225, %s19, 1
      %s227 = smul.addr %s224, 2
      %s228 = sadd.s32 %s226, %s227
      %s229 = smul.addr %s228, 8
      %s230 = scalar_lea.vmem %s3, %s229
      // Predicated region
      $region33: #{conv_block_forward.3} parent=31 // pred_check
        %p231 = pneg %p116
      $region34: #{conv_block_forward.3} parent=31 // pred_check_branch
        %233 = sbr.rel (%p231) target = $region36
      $region35: #{conv_block_forward.3} parent=31 // pred_region
        _
      $region36: #{conv_block_forward.3} parent=31 // pred_fallthru
        _
    $region32: #{conv_block_forward.3} parent=5 // pred_fallthru
      _
    %p234 = scmp.le.s32.totalorder 2, %s9
    // Predicated region
    $region37: #{conv_block_forward.3} parent=5 // pred_check
      %p235 = pneg %p234
    $region38: #{conv_block_forward.3} parent=5 // pred_check_branch
      %237 = sbr.rel (%p235) target = $region40
    $region39: #{conv_block_forward.3} parent=5 // pred_region
      %s238 = ssub.s32 %s9, 2
      // Predicated region
      $region41: #{conv_block_forward.3} parent=39 // pred_check
        %p239 = pneg %p122
      $region42: #{conv_block_forward.3} parent=39 // pred_check_branch
        %241 = sbr.rel (%p239) target = $region44
      $region43: #{conv_block_forward.3} parent=39 // pred_region
        %p242 = scmp.lt.s32.totalorder %s20, 1
        %s243 = scalar_select %p242, %s20, 1
        %p244 = scmp.lt.s32.totalorder %s21, 1
        %s245 = scalar_select %p244, %s21, 1
        %s246 = smul.addr %s243, 2
        %s247 = sadd.s32 %s245, %s246
        %s248 = smul.addr %s247, 8
        %s249 = scalar_lea.vmem %s3, %s248
      $region44: #{conv_block_forward.3} parent=39 // pred_fallthru
        _
    $region40: #{conv_block_forward.3} parent=5 // pred_fallthru
      _
  $region6: #{conv_block_forward.3} parent=0 // loop_footer
    %s13 = sadd.s32 1, %s9
  $region7: #{conv_block_forward.3} parent=0 // loop_footer_branch
    %8 = sbr.rel target = $region3
  $region8: #{conv_block_forward.3} parent=0 // loop_exit
    _

// kernel: conv_block_forward.2
$region0: #{conv_block_forward.2}
  #allocation0 [shape = 'u32[]', space=smem, size = 0x4, offset = 0x4, fixed_abs, tag = 'smem constant byte address 0x4 - core index']
  #allocation1 [shape = 'u32[144,128]{1,0:T(1,128)}', space=vmem, size = 0x12000, scoped, tag = 'internal scratch']
  #allocation2 [shape = 'f32[18,18,4]{2,1,0:T(8,128)}', space=vmem, size = 0x36000, scoped, tag = 'scratch operand']
  %s0 = inlined_call_operand.vmem [shape: f32[2,16,16,4], index: 0, kind: input, shape index: {}]
  %s1 = inlined_call_operand.vmem [shape: f32[3,3,4,8], index: 1, kind: input, shape index: {}]
  %s2 = inlined_call_operand.vmem [shape: f32[2,16,16,8], index: 2, kind: output, shape index: {0}]
  %s3 = inlined_call_operand.vmem [shape: f32[2,1,8], index: 3, kind: output, shape index: {1}]
  %s4 = inlined_call_operand.vmem [shape: f32[2,1,8], index: 4, kind: output, shape index: {2}]
  %5 = xla_tuple %s2, %s3, %s4
  %s6 = sld [smem:[#allocation0]]
  $region57: #{conv_block_forward.2} parent=0
    _
  %s8 = ssub.s32 1, %s6
  %s9 = scalar_select 0, %s8, %s6
  loop: start=0, step=1, limit=4
  $region2: #{conv_block_forward.2} parent=0 // loop_pre_header
    _
  $region3: #{conv_block_forward.2} parent=0 // loop_header
    %s11 = sphi 0, %s15
    %p12 = scmp.ge.s32.totalorder %s11, 4
    %s21 = sphi 0, %s23
    %s24 = sphi 0, %s21
    %s25 = sphi 0, %s24
    %s41 = sphi 0, %s25
    %s45 = sphi 0, %s45
    %s47 = sphi 0, %s45
    %s48 = sphi 0, %s47
    %s62 = sphi 0, %s48
    %s68 = sphi 0, %s70
    %s71 = sphi 0, %s68
    %s72 = sphi 0, %s71
    %s88 = sphi 0, %s72
    %s94 = sphi 0, %s96
    %s97 = sphi 0, %s94
    %s98 = sphi 0, %s97
    %s114 = sphi 0, %s98
    %s120 = sphi 0, %s122
    %s123 = sphi 0, %s120
    %s124 = sphi 0, %s123
    %s140 = sphi 0, %s124
  $region4: #{conv_block_forward.2} parent=0 // loop_header_branch
    %14 = sbr.rel (%p12) target = $region8
  $region5: #{conv_block_forward.2} parent=0 // loop_body
    %s16 = ssub.s32 %s11, 1
    %s17 = ssub.s32 %s11, 2
    %s18 = sadd.s32 %s11, 1
    %s19 = ssub.s32 %s11, %s18
    %p20 = scmp.eq.s32.totalorder %s19, 0
    %s22 = sadd.s32 %s21, 1
    %s23 = scalar_select %p20, %s21, %s22
    %p26 = pneg %p20
    %p27 = scmp.eq.s32.totalorder %s11, 1
    %p28 = por %p26, %p27
    %p29 = scmp.ne.s32.totalorder %s21, %s24
    %p30 = scmp.eq.s32.totalorder %s11, 0
    %p31 = por %p29, %p30
    %p32 = scmp.ne.s32.totalorder %s21, %s24
    %p33 = scmp.eq.s32.totalorder %s16, 1
    %p34 = por %p32, %p33
    %p35 = scmp.ne.s32.totalorder %s24, %s25
    %p36 = scmp.eq.s32.totalorder %s16, 0
    %p37 = por %p35, %p36
    %p38 = scmp.ne.s32.totalorder %s24, %s25
    %p39 = scmp.eq.s32.totalorder %s17, 1
    %p40 = por %p38, %p39
    %p42 = scmp.ne.s32.totalorder %s25, %s41
    %p43 = scmp.eq.s32.totalorder %s17, 0
    %p44 = por %p42, %p43
    %s46 = sadd.s32 %s45, 1
    %p49 = scmp.eq.s32.totalorder %s11, 1
    %p50 = scmp.ne.s32.totalorder %s45, %s47
    %p51 = scmp.eq.s32.totalorder %s11, 0
    %p52 = por %p50, %p51
    %p53 = scmp.ne.s32.totalorder %s45, %s47
    %p54 = scmp.eq.s32.totalorder %s16, 1
    %p55 = por %p53, %p54
    %p56 = scmp.ne.s32.totalorder %s47, %s48
    %p57 = scmp.eq.s32.totalorder %s16, 0
    %p58 = por %p56, %p57
    %p59 = scmp.ne.s32.totalorder %s47, %s48
    %p60 = scmp.eq.s32.totalorder %s17, 1
    %p61 = por %p59, %p60
    %p63 = scmp.ne.s32.totalorder %s48, %s62
    %p64 = scmp.eq.s32.totalorder %s17, 0
    %p65 = por %p63, %p64
    %s66 = ssub.s32 %s11, %s18
    %p67 = scmp.eq.s32.totalorder %s66, 0
    %s69 = sadd.s32 %s68, 1
    %s70 = scalar_select %p67, %s68, %s69
    %p73 = pneg %p67
    %p74 = scmp.eq.s32.totalorder %s11, 1
    %p75 = por %p73, %p74
    %p76 = scmp.ne.s32.totalorder %s68, %s71
    %p77 = scmp.eq.s32.totalorder %s11, 0
    %p78 = por %p76, %p77
    %p79 = scmp.ne.s32.totalorder %s68, %s71
    %p80 = scmp.eq.s32.totalorder %s16, 1
    %p81 = por %p79, %p80
    %p82 = scmp.ne.s32.totalorder %s71, %s72
    %p83 = scmp.eq.s32.totalorder %s16, 0
    %p84 = por %p82, %p83
    %p85 = scmp.ne.s32.totalorder %s71, %s72
    %p86 = scmp.eq.s32.totalorder %s17, 1
    %p87 = por %p85, %p86
    %p89 = scmp.ne.s32.totalorder %s72, %s88
    %p90 = scmp.eq.s32.totalorder %s17, 0
    %p91 = por %p89, %p90
    %s92 = ssub.s32 %s11, %s18
    %p93 = scmp.eq.s32.totalorder %s92, 0
    %s95 = sadd.s32 %s94, 1
    %s96 = scalar_select %p93, %s94, %s95
    %p99 = pneg %p93
    %p100 = scmp.eq.s32.totalorder %s11, 1
    %p101 = por %p99, %p100
    %p102 = scmp.ne.s32.totalorder %s94, %s97
    %p103 = scmp.eq.s32.totalorder %s11, 0
    %p104 = por %p102, %p103
    %p105 = scmp.ne.s32.totalorder %s94, %s97
    %p106 = scmp.eq.s32.totalorder %s16, 1
    %p107 = por %p105, %p106
    %p108 = scmp.ne.s32.totalorder %s97, %s98
    %p109 = scmp.eq.s32.totalorder %s16, 0
    %p110 = por %p108, %p109
    %p111 = scmp.ne.s32.totalorder %s97, %s98
    %p112 = scmp.eq.s32.totalorder %s17, 1
    %p113 = por %p111, %p112
    %p115 = scmp.ne.s32.totalorder %s98, %s114
    %p116 = scmp.eq.s32.totalorder %s17, 0
    %p117 = por %p115, %p116
    %s118 = ssub.s32 %s11, %s18
    %p119 = scmp.eq.s32.totalorder %s118, 0
    %s121 = sadd.s32 %s120, 1
    %s122 = scalar_select %p119, %s120, %s121
    %p125 = pneg %p119
    %p126 = scmp.eq.s32.totalorder %s11, 1
    %p127 = por %p125, %p126
    %p128 = scmp.ne.s32.totalorder %s120, %s123
    %p129 = scmp.eq.s32.totalorder %s11, 0
    %p130 = por %p128, %p129
    %p131 = scmp.ne.s32.totalorder %s120, %s123
    %p132 = scmp.eq.s32.totalorder %s16, 1
    %p133 = por %p131, %p132
    %p134 = scmp.ne.s32.totalorder %s123, %s124
    %p135 = scmp.eq.s32.totalorder %s16, 0
    %p136 = por %p134, %p135
    %p137 = scmp.ne.s32.totalorder %s123, %s124
    %p138 = scmp.eq.s32.totalorder %s17, 1
    %p139 = por %p137, %p138
    %p141 = scmp.ne.s32.totalorder %s124, %s140
    %p142 = scmp.eq.s32.totalorder %s17, 0
    %p143 = por %p141, %p142
    %p144 = scmp.le.s32.totalorder 1, %s11
    %p145 = scmp.lt.s32.totalorder %s11, 3
    %p146 = pnand %p144, %p145
    %p147 = pneg %p146
    // Predicated region
    $region9: #{conv_block_forward.2} parent=5 // pred_check
      _
    $region10: #{conv_block_forward.2} parent=5 // pred_check_branch
      %149 = sbr.rel (%p146) target = $region12
    $region11: #{conv_block_forward.2} parent=5 // pred_region
      %s150 = ssub.s32 %s11, 1
      // Predicated region
      $region13: #{conv_block_forward.2} parent=11 // pred_check
        %p151 = pneg %p58
      $region14: #{conv_block_forward.2} parent=11 // pred_check_branch
        %153 = sbr.rel (%p151) target = $region16
      $region15: #{conv_block_forward.2} parent=11 // pred_region
        _
      $region16: #{conv_block_forward.2} parent=11 // pred_fallthru
        _
    $region12: #{conv_block_forward.2} parent=5 // pred_fallthru
      _
    %p154 = scmp.lt.s32.totalorder %s11, 2
    // Predicated region
    $region17: #{conv_block_forward.2} parent=5 // pred_check
      %p155 = pneg %p154
    $region18: #{conv_block_forward.2} parent=5 // pred_check_branch
      %157 = sbr.rel (%p155) target = $region20
    $region19: #{conv_block_forward.2} parent=5 // pred_region
      // Predicated region
      $region21: #{conv_block_forward.2} parent=19 // pred_check
        %p158 = pneg %p31
      $region22: #{conv_block_forward.2} parent=19 // pred_check_branch
        %160 = sbr.rel (%p158) target = $region24
      $region23: #{conv_block_forward.2} parent=19 // pred_region
        %p161 = scmp.lt.s32.totalorder %s11, 1
        %s162 = scalar_select %p161, %s11, 1
        %s163 = smul.addr %s162, 32
        %s164 = smul.addr %s163, 8
        %s165 = scalar_lea.vmem %s0, %s164
      $region24: #{conv_block_forward.2} parent=19 // pred_fallthru
        _
    $region20: #{conv_block_forward.2} parent=5 // pred_fallthru
      _
    %p166 = scmp.le.s32.totalorder 1, %s11
    %p167 = scmp.lt.s32.totalorder %s11, 3
    %p168 = pnand %p166, %p167
    %p169 = pneg %p168
    // Predicated region
    $region25: #{conv_block_forward.2} parent=5 // pred_check
      _
    $region26: #{conv_block_forward.2} parent=5 // pred_check_branch
      %171 = sbr.rel (%p168) target = $region28
    $region27: #{conv_block_forward.2} parent=5 // pred_region
      %s172 = ssub.s32 %s11, 1
      %p173 = scmp.lt.s32.totalorder %s16, 1
      %s174 = scalar_select %p173, %s16, 1
      %s175 = smul.addr %s174, 32
      %s176 = smul.addr %s175, 8
      %s177 = scalar_lea.vmem %s0, %s176
      %p178 = pneg %p37
      %p179 = pneg %p34
      %p180 = pneg %p58
      %p181 = pneg %p55
      %p182 = pneg %p84
      %p183 = pneg %p81
      %p184 = scmp.lt.s32.totalorder %s16, 1
      %s185 = scalar_select %p184, %s16, 1
      %s186 = smul.addr %s185, 32
      %s187 = smul.addr %s186, 8
      %s188 = scalar_lea.vmem %s2, %s187
      %p189 = pneg %p110
      %p190 = pneg %p107
      %p191 = scmp.lt.s32.totalorder %s16, 1
      %s192 = scalar_select %p191, %s16, 1
      %s193 = scalar_lea.vmem %s3, %s192
      %p194 = pneg %p136
      %p195 = pneg %p133
      %p196 = scmp.lt.s32.totalorder %s16, 1
      %s197 = scalar_select %p196, %s16, 1
      %s198 = scalar_lea.vmem %s4, %s197
      %p199 = scmp.lt.s32.totalorder %s16, 1
      %s200 = scalar_select %p199, %s16, 1
      %s201 = smul.addr %s200, 32
      %s202 = smul.addr %s201, 8
      %s203 = scalar_lea.vmem %s0, %s202
      %p204 = scmp.lt.s32.totalorder %s16, 1
      %s205 = scalar_select %p204, %s16, 1
      %s206 = smul.addr %s205, 32
      %s207 = smul.addr %s206, 8
      %s208 = scalar_lea.vmem %s2, %s207
      %p209 = scmp.lt.s32.totalorder %s16, 1
      %s210 = scalar_select %p209, %s16, 1
      %s211 = scalar_lea.vmem %s3, %s210
      %p212 = scmp.lt.s32.totalorder %s16, 1
      %s213 = scalar_select %p212, %s16, 1
      %s214 = scalar_lea.vmem %s4, %s213
      %vm215 = vcmask 31744
      %216 = vst.msk [vmem:[#allocation2] sm:$0xff] %vm215, 0.0
      %217 = vst.msk [vmem:[#allocation2 + $0x8] sm:$0xff] %vm215, 0.0
      %vm218 = vcmask 25600
      %219 = vst.msk [vmem:[#allocation2 + $0x10] sm:$0x3] %vm218, 0.0
      %220 = vst.msk [vmem:[#allocation2 + $0x18] sm:$0xff] %vm215, 0.0
      %221 = vst.msk [vmem:[#allocation2 + $0x20] sm:$0xff] %vm215, 0.0
      %222 = vst.msk [vmem:[#allocation2 + $0x28] sm:$0x3] %vm218, 0.0
      %223 = vst.msk [vmem:[#allocation2 + $0x30] sm:$0xff] %vm215, 0.0
      %224 = vst.msk [vmem:[#allocation2 + $0x38] sm:$0xff] %vm215, 0.0
      %225 = vst.msk [vmem:[#allocation2 + $0x40] sm:$0x3] %vm218, 0.0
      %226 = vst.msk [vmem:[#allocation2 + $0x48] sm:$0xff] %vm215, 0.0
      %227 = vst.msk [vmem:[#allocation2 + $0x50] sm:$0xff] %vm215, 0.0
      %228 = vst.msk [vmem:[#allocation2 + $0x58] sm:$0x3] %vm218, 0.0
      %229 = vst.msk [vmem:[#allocation2 + $0x60] sm:$0xff] %vm215, 0.0
      %230 = vst.msk [vmem:[#allocation2 + $0x68] sm:$0xff] %vm215, 0.0
      %231 = vst.msk [vmem:[#allocation2 + $0x70] sm:$0x3] %vm218, 0.0
      %232 = vst.msk [vmem:[#allocation2 + $0x78] sm:$0xff] %vm215, 0.0
      %233 = vst.msk [vmem:[#allocation2 + $0x80] sm:$0xff] %vm215, 0.0
      %234 = vst.msk [vmem:[#allocation2 + $0x88] sm:$0x3] %vm218, 0.0
      %235 = vst.msk [vmem:[#allocation2 + $0x90] sm:$0xff] %vm215, 0.0
      %236 = vst.msk [vmem:[#allocation2 + $0x98] sm:$0xff] %vm215, 0.0
      %237 = vst.msk [vmem:[#allocation2 + $0xa0] sm:$0x3] %vm218, 0.0
      %238 = vst.msk [vmem:[#allocation2 + $0xa8] sm:$0xff] %vm215, 0.0
      %239 = vst.msk [vmem:[#allocation2 + $0xb0] sm:$0xff] %vm215, 0.0
      %240 = vst.msk [vmem:[#allocation2 + $0xb8] sm:$0x3] %vm218, 0.0
      %241 = vst.msk [vmem:[#allocation2 + $0xc0] sm:$0xff] %vm215, 0.0
      %242 = vst.msk [vmem:[#allocation2 + $0xc8] sm:$0xff] %vm215, 0.0
      %243 = vst.msk [vmem:[#allocation2 + $0xd0] sm:$0x3] %vm218, 0.0
      %244 = vst.msk [vmem:[#allocation2 + $0xd8] sm:$0xff] %vm215, 0.0
      %245 = vst.msk [vmem:[#allocation2 + $0xe0] sm:$0xff] %vm215, 0.0
      %246 = vst.msk [vmem:[#allocation2 + $0xe8] sm:$0x3] %vm218, 0.0
      %247 = vst.msk [vmem:[#allocation2 + $0xf0] sm:$0xff] %vm215, 0.0
      %248 = vst.msk [vmem:[#allocation2 + $0xf8] sm:$0xff] %vm215, 0.0
      %249 = vst.msk [vmem:[#allocation2 + $0x100] sm:$0x3] %vm218, 0.0
      %250 = vst.msk [vmem:[#allocation2 + $0x108] sm:$0xff] %vm215, 0.0
      %251 = vst.msk [vmem:[#allocation2 + $0x110] sm:$0xff] %vm215, 0.0
      %252 = vst.msk [vmem:[#allocation2 + $0x118] sm:$0x3] %vm218, 0.0
      %253 = vst.msk [vmem:[#allocation2 + $0x120] sm:$0xff] %vm215, 0.0
      %254 = vst.msk [vmem:[#allocation2 + $0x128] sm:$0xff] %vm215, 0.0
      %255 = vst.msk [vmem:[#allocation2 + $0x130] sm:$0x3] %vm218, 0.0
      %256 = vst.msk [vmem:[#allocation2 + $0x138] sm:$0xff] %vm215, 0.0
      %257 = vst.msk [vmem:[#allocation2 + $0x140] sm:$0xff] %vm215, 0.0
      %258 = vst.msk [vmem:[#allocation2 + $0x148] sm:$0x3] %vm218, 0.0
      %259 = vst.msk [vmem:[#allocation2 + $0x150] sm:$0xff] %vm215, 0.0
      %260 = vst.msk [vmem:[#allocation2 + $0x158] sm:$0xff] %vm215, 0.0
      %261 = vst.msk [vmem:[#allocation2 + $0x160] sm:$0x3] %vm218, 0.0
      %262 = vst.msk [vmem:[#allocation2 + $0x168] sm:$0xff] %vm215, 0.0
      %263 = vst.msk [vmem:[#allocation2 + $0x170] sm:$0xff] %vm215, 0.0
      %264 = vst.msk [vmem:[#allocation2 + $0x178] sm:$0x3] %vm218, 0.0
      %265 = vst.msk [vmem:[#allocation2 + $0x180] sm:$0xff] %vm215, 0.0
      %266 = vst.msk [vmem:[#allocation2 + $0x188] sm:$0xff] %vm215, 0.0
      %267 = vst.msk [vmem:[#allocation2 + $0x190] sm:$0x3] %vm218, 0.0
      %268 = vst.msk [vmem:[#allocation2 + $0x198] sm:$0xff] %vm215, 0.0
      %269 = vst.msk [vmem:[#allocation2 + $0x1a0] sm:$0xff] %vm215, 0.0
      %270 = vst.msk [vmem:[#allocation2 + $0x1a8] sm:$0x3] %vm218, 0.0
      %v271 = vld [vmem:[%s203] sm:$0xff]
      %v272 = vld [vmem:[%s203 + $0x8] sm:$0xff]
      %v273 = vld [vmem:[%s203 + $0x10] sm:$0xff]
      %v274 = vld [vmem:[%s203 + $0x18] sm:$0xff]
      %v275 = vld [vmem:[%s203 + $0x20] sm:$0xff]
      %v276 = vld [vmem:[%s203 + $0x28] sm:$0xff]
      %v277 = vld [vmem:[%s203 + $0x30] sm:$0xff]
      %v278 = vld [vmem:[%s203 + $0x38] sm:$0xff]
      %v279 = vld [vmem:[%s203 + $0x40] sm:$0xff]
      %v280 = vld [vmem:[%s203 + $0x48] sm:$0xff]
      %v281 = vld [vmem:[%s203 + $0x50] sm:$0xff]
      %v282 = vld [vmem:[%s203 + $0x58] sm:$0xff]
      %v283 = vld [vmem:[%s203 + $0x60] sm:$0xff]
      %v284 = vld [vmem:[%s203 + $0x68] sm:$0xff]
      %v285 = vld [vmem:[%s203 + $0x70] sm:$0xff]
      %v286 = vld [vmem:[%s203 + $0x78] sm:$0xff]
      %v287 = vld [vmem:[%s203 + $0x80] sm:$0xff]
      %v288 = vld [vmem:[%s203 + $0x88] sm:$0xff]
      %v289 = vld [vmem:[%s203 + $0x90] sm:$0xff]
      %v290 = vld [vmem:[%s203 + $0x98] sm:$0xff]
      %v291 = vld [vmem:[%s203 + $0xa0] sm:$0xff]
      %v292 = vld [vmem:[%s203 + $0xa8] sm:$0xff]
      %v293 = vld [vmem:[%s203 + $0xb0] sm:$0xff]
      %v294 = vld [vmem:[%s203 + $0xb8] sm:$0xff]
      %v295 = vld [vmem:[%s203 + $0xc0] sm:$0xff]
      %v296 = vld [vmem:[%s203 + $0xc8] sm:$0xff]
      %v297 = vld [vmem:[%s203 + $0xd0] sm:$0xff]
      %v298 = vld [vmem:[%s203 + $0xd8] sm:$0xff]
      %v299 = vld [vmem:[%s203 + $0xe0] sm:$0xff]
      %v300 = vld [vmem:[%s203 + $0xe8] sm:$0xff]
      %v301 = vld [vmem:[%s203 + $0xf0] sm:$0xff]
      %v302 = vld [vmem:[%s203 + $0xf8] sm:$0xff]
      %s303 = scalar_lea.vmem [#allocation2], 24
      %304 = vst.msk [vmem:[%s303 + $0x1] sm:$0xff] %vm215, %v271
      %305 = vst.msk [vmem:[%s303 + $0x9] sm:$0xff] %vm215, %v272
      %306 = vst.msk [vmem:[%s303 + $0x19] sm:$0xff] %vm215, %v273
      %307 = vst.msk [vmem:[%s303 + $0x21] sm:$0xff] %vm215, %v274
      %308 = vst.msk [vmem:[%s303 + $0x31] sm:$0xff] %vm215, %v275
      %309 = vst.msk [vmem:[%s303 + $0x39] sm:$0xff] %vm215, %v276
      %310 = vst.msk [vmem:[%s303 + $0x49] sm:$0xff] %vm215, %v277
      %311 = vst.msk [vmem:[%s303 + $0x51] sm:$0xff] %vm215, %v278
      %312 = vst.msk [vmem:[%s303 + $0x61] sm:$0xff] %vm215, %v279
      %313 = vst.msk [vmem:[%s303 + $0x69] sm:$0xff] %vm215, %v280
      %314 = vst.msk [vmem:[%s303 + $0x79] sm:$0xff] %vm215, %v281
      %315 = vst.msk [vmem:[%s303 + $0x81] sm:$0xff] %vm215, %v282
      %316 = vst.msk [vmem:[%s303 + $0x91] sm:$0xff] %vm215, %v283
      %317 = vst.msk [vmem:[%s303 + $0x99] sm:$0xff] %vm215, %v284
      %318 = vst.msk [vmem:[%s303 + $0xa9] sm:$0xff] %vm215, %v285
      %319 = vst.msk [vmem:[%s303 + $0xb1] sm:$0xff] %vm215, %v286
      %320 = vst.msk [vmem:[%s303 + $0xc1] sm:$0xff] %vm215, %v287
      %321 = vst.msk [vmem:[%s303 + $0xc9] sm:$0xff] %vm215, %v288
      %322 = vst.msk [vmem:[%s303 + $0xd9] sm:$0xff] %vm215, %v289
      %323 = vst.msk [vmem:[%s303 + $0xe1] sm:$0xff] %vm215, %v290
      %324 = vst.msk [vmem:[%s303 + $0xf1] sm:$0xff] %vm215, %v291
      %325 = vst.msk [vmem:[%s303 + $0xf9] sm:$0xff] %vm215, %v292
      %326 = vst.msk [vmem:[%s303 + $0x109] sm:$0xff] %vm215, %v293
      %327 = vst.msk [vmem:[%s303 + $0x111] sm:$0xff] %vm215, %v294
      %328 = vst.msk [vmem:[%s303 + $0x121] sm:$0xff] %vm215, %v295
      %329 = vst.msk [vmem:[%s303 + $0x129] sm:$0xff] %vm215, %v296
      %330 = vst.msk [vmem:[%s303 + $0x139] sm:$0xff] %vm215, %v297
      %331 = vst.msk [vmem:[%s303 + $0x141] sm:$0xff] %vm215, %v298
      %332 = vst.msk [vmem:[%s303 + $0x151] sm:$0xff] %vm215, %v299
      %333 = vst.msk [vmem:[%s303 + $0x159] sm:$0xff] %vm215, %v300
      %334 = vst.msk [vmem:[%s303 + $0x169] sm:$0xff] %vm215, %v301
      %335 = vst.msk [vmem:[%s303 + $0x171] sm:$0xff] %vm215, %v302
      %v336 = vld [vmem:[%s1] sm:$0xf]
      %v337 = vld [vmem:[%s1 + $0x4] sm:$0xf]
      %v338 = vld [vmem:[%s1 + $0x8] sm:$0xf]
      %v339 = vld [vmem:[%s1 + $0xc] sm:$0xf]
      %v340 = vld [vmem:[%s1 + $0x10] sm:$0xf]
      %v341 = vld [vmem:[%s1 + $0x14] sm:$0xf]
      %v342 = vld [vmem:[%s1 + $0x18] sm:$0xf]
      %v343 = vld [vmem:[%s1 + $0x1c] sm:$0xf]
      %v344 = vld [vmem:[%s1 + $0x20] sm:$0xf]
      %v345 = vld [vmem:[#allocation2] sm:$0xff]
      %v346 = vld [vmem:[#allocation2 + $0x8] sm:$0xff]
      %v347 = vld [vmem:[#allocation2 + $0x18] sm:$0xff]
      %v348 = vld [vmem:[#allocation2 + $0x20] sm:$0xff]
      %v349 = vld [vmem:[#allocation2 + $0x30] sm:$0xff]
      %v350 = vld [vmem:[#allocation2 + $0x38] sm:$0xff]
      %v351 = vld [vmem:[#allocation2 + $0x48] sm:$0xff]
      %v352 = vld [vmem:[#allocation2 + $0x50] sm:$0xff]
      %v353 = vld [vmem:[#allocation2 + $0x60] sm:$0xff]
      %v354 = vld [vmem:[#allocation2 + $0x68] sm:$0xff]
      %v355 = vld [vmem:[#allocation2 + $0x78] sm:$0xff]
      %v356 = vld [vmem:[#allocation2 + $0x80] sm:$0xff]
      %v357 = vld [vmem:[#allocation2 + $0x90] sm:$0xff]
      %v358 = vld [vmem:[#allocation2 + $0x98] sm:$0xff]
      %v359 = vld [vmem:[#allocation2 + $0xa8] sm:$0xff]
      %v360 = vld [vmem:[#allocation2 + $0xb0] sm:$0xff]
      %v361 = vld [vmem:[#allocation2 + $0xc0] sm:$0xff]
      %v362 = vld [vmem:[#allocation2 + $0xc8] sm:$0xff]
      %v363 = vld [vmem:[#allocation2 + $0xd8] sm:$0xff]
      %v364 = vld [vmem:[#allocation2 + $0xe0] sm:$0xff]
      %v365 = vld [vmem:[#allocation2 + $0xf0] sm:$0xff]
      %v366 = vld [vmem:[#allocation2 + $0xf8] sm:$0xff]
      %v367 = vld [vmem:[#allocation2 + $0x108] sm:$0xff]
      %v368 = vld [vmem:[#allocation2 + $0x110] sm:$0xff]
      %v369 = vld [vmem:[#allocation2 + $0x120] sm:$0xff]
      %v370 = vld [vmem:[#allocation2 + $0x128] sm:$0xff]
      %v371 = vld [vmem:[#allocation2 + $0x138] sm:$0xff]
      %v372 = vld [vmem:[#allocation2 + $0x140] sm:$0xff]
      %v373 = vld [vmem:[#allocation2 + $0x150] sm:$0xff]
      %v374 = vld [vmem:[#allocation2 + $0x158] sm:$0xff]
      %v375 = vld [vmem:[#allocation2 + $0x168] sm:$0xff]
      %v376 = vld [vmem:[#allocation2 + $0x170] sm:$0xff]
      %v377 = vld [vmem:[#allocation2 + $0x1] sm:$0xff]
      %v378 = vld [vmem:[#allocation2 + $0x9] sm:$0xff]
      %v379 = vld [vmem:[#allocation2 + $0x19] sm:$0xff]
      %v380 = vld [vmem:[#allocation2 + $0x21] sm:$0xff]
      %v381 = vld [vmem:[#allocation2 + $0x31] sm:$0xff]
      %v382 = vld [vmem:[#allocation2 + $0x39] sm:$0xff]
      %v383 = vld [vmem:[#allocation2 + $0x49] sm:$0xff]
      %v384 = vld [vmem:[#allocation2 + $0x51] sm:$0xff]
      %v385 = vld [vmem:[#allocation2 + $0x61] sm:$0xff]
      %v386 = vld [vmem:[#allocation2 + $0x69] sm:$0xff]
      %v387 = vld [vmem:[#allocation2 + $0x79] sm:$0xff]
      %v388 = vld [vmem:[#allocation2 + $0x81] sm:$0xff]
      %v389 = vld [vmem:[#allocation2 + $0x91] sm:$0xff]
      %v390 = vld [vmem:[#allocation2 + $0x99] sm:$0xff]
      %v391 = vld [vmem:[#allocation2 + $0xa9] sm:$0xff]
      %v392 = vld [vmem:[#allocation2 + $0xb1] sm:$0xff]
      %v393 = vld [vmem:[#allocation2 + $0xc1] sm:$0xff]
      %v394 = vld [vmem:[#allocation2 + $0xc9] sm:$0xff]
      %v395 = vld [vmem:[#allocation2 + $0xd9] sm:$0xff]
      %v396 = vld [vmem:[#allocation2 + $0xe1] sm:$0xff]
      %v397 = vld [vmem:[#allocation2 + $0xf1] sm:$0xff]
      %v398 = vld [vmem:[#allocation2 + $0xf9] sm:$0xff]
      %v399 = vld [vmem:[#allocation2 + $0x109] sm:$0xff]
      %v400 = vld [vmem:[#allocation2 + $0x111] sm:$0xff]
      %v401 = vld [vmem:[#allocation2 + $0x121] sm:$0xff]
      %v402 = vld [vmem:[#allocation2 + $0x129] sm:$0xff]
      %v403 = vld [vmem:[#allocation2 + $0x139] sm:$0xff]
      %v404 = vld [vmem:[#allocation2 + $0x141] sm:$0xff]
      %v405 = vld [vmem:[#allocation2 + $0x151] sm:$0xff]
      %v406 = vld [vmem:[#allocation2 + $0x159] sm:$0xff]
      %v407 = vld [vmem:[#allocation2 + $0x169] sm:$0xff]
      %v408 = vld [vmem:[#allocation2 + $0x171] sm:$0xff]
      %v410 = vsel %vm215, %v377, 0
      %v413 = vsel %vm215, %v378, 0
      %v416 = vsel %vm215, %v379, 0
      %v419 = vsel %vm215, %v380, 0
      %v422 = vsel %vm215, %v381, 0
      %v425 = vsel %vm215, %v382, 0
      %v428 = vsel %vm215, %v383, 0
      %v431 = vsel %vm215, %v384, 0
      %v434 = vsel %vm215, %v385, 0
      %v437 = vsel %vm215, %v386, 0
      %v440 = vsel %vm215, %v387, 0
      %v443 = vsel %vm215, %v388, 0
      %v446 = vsel %vm215, %v389, 0
      %v449 = vsel %vm215, %v390, 0
      %v452 = vsel %vm215, %v391, 0
      %v455 = vsel %vm215, %v392, 0
      %v458 = vsel %vm215, %v393, 0
      %v461 = vsel %vm215, %v394, 0
      %v464 = vsel %vm215, %v395, 0
      %v467 = vsel %vm215, %v396, 0
      %v470 = vsel %vm215, %v397, 0
      %v473 = vsel %vm215, %v398, 0
      %v476 = vsel %vm215, %v399, 0
      %v479 = vsel %vm215, %v400, 0
      %v482 = vsel %vm215, %v401, 0
      %v485 = vsel %vm215, %v402, 0
      %v488 = vsel %vm215, %v403, 0
      %v491 = vsel %vm215, %v404, 0
      %v494 = vsel %vm215, %v405, 0
      %v497 = vsel %vm215, %v406, 0
      %v500 = vsel %vm215, %v407, 0
      %v503 = vsel %vm215, %v408, 0
      %vm505 = vcmask 1043456
      %v507 = vsel %vm505, %v337, 0
      %509 = vmatprep.subr.mxu0 0.0
      %510 = vmatpush1.msra.mxu0 %v507
      %511 = vmatprep.subr.mxu0 0.0
      %512 = vmatpush1.msra.mxu0 0.0
      %513 = vmatprep.subr.mxu0 0.0
      %514 = vmatpush1.msra.mxu0 0.0
      %515 = vmatprep.subr.mxu0 0.0
      %516 = vmatpush1.msra.mxu0 0.0
      %517 = vmatprep.subr.mxu0 0.0
      %518 = vmatpush1.msra.mxu0 0.0
      %519 = vmatprep.subr.mxu0 0.0
      %520 = vmatpush1.msra.mxu0 0.0
      %521 = vmatprep.subr.mxu0 0.0
      %522 = vmatpush1.msra.mxu0 0.0
      %523 = vmatprep.subr.mxu0 0.0
      %524 = vmatpush1.msra.mxu0 0.0
      %525 = vmatprep.subr.mxu0 0.0
      %526 = vmatpush1.msra.mxu0 0.0
      %527 = vmatprep.subr.mxu0 0.0
      %528 = vmatpush1.msra.mxu0 0.0
      %529 = vmatprep.subr.mxu0 0.0
      %530 = vmatpush1.msra.mxu0 0.0
      %531 = vmatprep.subr.mxu0 0.0
      %532 = vmatpush1.msra.mxu0 0.0
      %533 = vmatprep.subr.mxu0 0.0
      %534 = vmatpush1.msra.mxu0 0.0
      %535 = vmatprep.subr.mxu0 0.0
      %536 = vmatpush1.msra.mxu0 0.0
      %537 = vmatprep.subr.mxu0 0.0
      %538 = vmatpush1.msra.mxu0 0.0
      %539 = vmatprep.subr.mxu0 0.0
      %540 = vmatpush1.msra.mxu0 0.0
      %541 = vmatprep.subr.mxu0 0.0
      %542 = vmatpush1.msra.mxu0 0.0
      %543 = vmatprep.subr.mxu0 0.0
      %544 = vmatpush1.msra.mxu0 0.0
      %545 = vmatprep.subr.mxu0 0.0
      %546 = vmatpush1.msra.mxu0 0.0
      %547 = vmatprep.subr.mxu0 0.0
      %548 = vmatpush1.msra.mxu0 0.0
      %549 = vmatprep.subr.mxu0 0.0
      %550 = vmatpush1.msra.mxu0 0.0
      %551 = vmatprep.subr.mxu0 0.0
      %552 = vmatpush1.msra.mxu0 0.0
      %553 = vmatprep.subr.mxu0 0.0
      %554 = vmatpush1.msra.mxu0 0.0
      %555 = vmatprep.subr.mxu0 0.0
      %556 = vmatpush1.msra.mxu0 0.0
      %557 = vmatprep.subr.mxu0 0.0
      %558 = vmatpush1.msra.mxu0 0.0
      %559 = vmatprep.subr.mxu0 0.0
      %560 = vmatpush1.msra.mxu0 0.0
      %561 = vmatprep.subr.mxu0 0.0
      %562 = vmatpush1.msra.mxu0 0.0
      %563 = vmatprep.subr.mxu0 0.0
      %564 = vmatpush1.msra.mxu0 0.0
      %565 = vmatprep.subr.mxu0 0.0
      %566 = vmatpush1.msra.mxu0 0.0
      %567 = vmatprep.subr.mxu0 0.0
      %568 = vmatpush1.msra.mxu0 0.0
      %569 = vmatprep.subr.mxu0 0.0
      %570 = vmatpush1.msra.mxu0 0.0
      %571 = vmatprep.subr.mxu0 0.0
      %572 = vmatpush1.msra.mxu0 0.0
      %573 = vmatprep.mubr.f32.mxu0 0.0
      %574 = vmatmul.mubr.f32.gmra.mrb[0].mxu0 %v410
      %v575 = vpop.f32.mrb[0].mxu0
      %v576 = vadd.f32 0.0, %v575
      %v577 = vpop.f32.mrb[0].mxu0
      %578 = vmatprep.mubr.f32.mxu0 0.0
      %579 = vmatmul.mubr.f32.gmra.mrb[0].mxu0 %v413
      %v580 = vpop.f32.mrb[0].mxu0
      %v581 = vadd.f32 0.0, %v580
      %v582 = vpop.f32.mrb[0].mxu0
      %583 = vmatprep.mubr.f32.mxu0 0.0
      %584 = vmatmul.mubr.f32.gmra.mrb[0].mxu0 %v416
      %v585 = vpop.f32.mrb[0].mxu0
      %v586 = vadd.f32 0.0, %v585
      %v587 = vpop.f32.mrb[0].mxu0
      %588 = vmatprep.mubr.f32.mxu0 0.0
      %589 = vmatmul.mubr.f32.gmra.mrb[0].mxu0 %v419
      %v590 = vpop.f32.mrb[0].mxu0
      %v591 = vadd.f32 0.0, %v590
      %v592 = vpop.f32.mrb[0].mxu0
      %593 = vmatprep.mubr.f32.mxu0 0.0
      %594 = vmatmul.mubr.f32.gmra.mrb[0].mxu0 %v422
      %v595 = vpop.f32.mrb[0].mxu0
      %v596 = vadd.f32 0.0, %v595
      %v597 = vpop.f32.mrb[0].mxu0
      %598 = vmatprep.mubr.f32.mxu0 0.0
      %599 = vmatmul.mubr.f32.gmra.mrb[0].mxu0 %v425
      %v600 = vpop.f32.mrb[0].mxu0
      %v601 = vadd.f32 0.0, %v600
      %v602 = vpop.f32.mrb[0].mxu0
      %603 = vmatprep.mubr.f32.mxu0 0.0
      %604 = vmatmul.mubr.f32.gmra.mrb[0].mxu0 %v428
      %v605 = vpop.f32.mrb[0].mxu0
      %v606 = vadd.f32 0.0, %v605
      %v607 = vpop.f32.mrb[0].mxu0
      %608 = vmatprep.mubr.f32.mxu0 0.0
      %609 = vmatmul.mubr.f32.gmra.mrb[0].mxu0 %v431
      %v610 = vpop.f32.mrb[0].mxu0
      %v611 = vadd.f32 0.0, %v610
      %v612 = vpop.f32.mrb[0].mxu0
      %613 = vmatprep.mubr.f32.mxu0 0.0
      %614 = vmatmul.mubr.f32.gmra.mrb[0].mxu0 %v434
      %v615 = vpop.f32.mrb[0].mxu0
      %v616 = vadd.f32 0.0, %v615
      %v617 = vpop.f32.mrb[0].mxu0
      %618 = vmatprep.mubr.f32.mxu0 0.0
      %619 = vmatmul.mubr.f32.gmra.mrb[0].mxu0 %v437
      %v620 = vpop.f32.mrb[0].mxu0
      %v621 = vadd.f32 0.0, %v620
      %v622 = vpop.f32.mrb[0].mxu0
      %623 = vmatprep.mubr.f32.mxu0 0.0
      %624 = vmatmul.mubr.f32.gmra.mrb[0].mxu0 %v440
      %v625 = vpop.f32.mrb[0].mxu0
      %v626 = vadd.f32 0.0, %v625
      %v627 = vpop.f32.mrb[0].mxu0
      %628 = vmatprep.mubr.f32.mxu0 0.0
      %629 = vmatmul.mubr.f32.gmra.mrb[0].mxu0 %v443
      %v630 = vpop.f32.mrb[0].mxu0
      %v631 = vadd.f32 0.0, %v630
      %v632 = vpop.f32.mrb[0].mxu0
      %633 = vmatprep.mubr.f32.mxu0 0.0
      %634 = vmatmul.mubr.f32.gmra.mrb[0].mxu0 %v446
      %v635 = vpop.f32.mrb[0].mxu0
      %v636 = vadd.f32 0.0, %v635
      %v637 = vpop.f32.mrb[0].mxu0
      %638 = vmatprep.mubr.f32.mxu0 0.0
      %639 = vmatmul.mubr.f32.gmra.mrb[0].mxu0 %v449
      %v640 = vpop.f32.mrb[0].mxu0
      %v641 = vadd.f32 0.0, %v640
      %v642 = vpop.f32.mrb[0].mxu0
      %643 = vmatprep.mubr.f32.mxu0 0.0
      %644 = vmatmul.mubr.f32.gmra.mrb[0].mxu0 %v452
      %v645 = vpop.f32.mrb[0].mxu0
      %v646 = vadd.f32 0.0, %v645
      %v647 = vpop.f32.mrb[0].mxu0
      %648 = vmatprep.mubr.f32.mxu0 0.0
      %649 = vmatmul.mubr.f32.gmra.mrb[0].mxu0 %v455
      %v650 = vpop.f32.mrb[0].mxu0
      %v651 = vadd.f32 0.0, %v650
      %v652 = vpop.f32.mrb[0].mxu0
      %653 = vmatprep.mubr.f32.mxu0 0.0
      %654 = vmatmul.mubr.f32.gmra.mrb[0].mxu0 %v458
      %v655 = vpop.f32.mrb[0].mxu0
      %v656 = vadd.f32 0.0, %v655
      %v657 = vpop.f32.mrb[0].mxu0
      %658 = vmatprep.mubr.f32.mxu0 0.0
      %659 = vmatmul.mubr.f32.gmra.mrb[0].mxu0 %v461
      %v660 = vpop.f32.mrb[0].mxu0
      %v661 = vadd.f32 0.0, %v660
      %v662 = vpop.f32.mrb[0].mxu0
      %663 = vmatprep.mubr.f32.mxu0 0.0
      %664 = vmatmul.mubr.f32.gmra.mrb[0].mxu0 %v464
      %v665 = vpop.f32.mrb[0].mxu0
      %v666 = vadd.f32 0.0, %v665
      %v667 = vpop.f32.mrb[0].mxu0
      %668 = vmatprep.mubr.f32.mxu0 0.0
      %669 = vmatmul.mubr.f32.gmra.mrb[0].mxu0 %v467
      %v670 = vpop.f32.mrb[0].mxu0
      %v671 = vadd.f32 0.0, %v670
      %v672 = vpop.f32.mrb[0].mxu0
      %673 = vmatprep.mubr.f32.mxu0 0.0
      %674 = vmatmul.mubr.f32.gmra.mrb[0].mxu0 %v470
      %v675 = vpop.f32.mrb[0].mxu0
      %v676 = vadd.f32 0.0, %v675
      %v677 = vpop.f32.mrb[0].mxu0
      %678 = vmatprep.mubr.f32.mxu0 0.0
      %679 = vmatmul.mubr.f32.gmra.mrb[0].mxu0 %v473
      %v680 = vpop.f32.mrb[0].mxu0
      %v681 = vadd.f32 0.0, %v680
      %v682 = vpop.f32.mrb[0].mxu0
      %683 = vmatprep.mubr.f32.mxu0 0.0
      %684 = vmatmul.mubr.f32.gmra.mrb[0].mxu0 %v476
      %v685 = vpop.f32.mrb[0].mxu0
      %v686 = vadd.f32 0.0, %v685
      %v687 = vpop.f32.mrb[0].mxu0
      %688 = vmatprep.mubr.f32.mxu0 0.0
      %689 = vmatmul.mubr.f32.gmra.mrb[0].mxu0 %v479
      %v690 = vpop.f32.mrb[0].mxu0
      %v691 = vadd.f32 0.0, %v690
      %v692 = vpop.f32.mrb[0].mxu0
      %693 = vmatprep.mubr.f32.mxu0 0.0
      %694 = vmatmul.mubr.f32.gmra.mrb[0].mxu0 %v482
      %v695 = vpop.f32.mrb[0].mxu0
      %v696 = vadd.f32 0.0, %v695
      %v697 = vpop.f32.mrb[0].mxu0
      %698 = vmatprep.mubr.f32.mxu0 0.0
      %699 = vmatmul.mubr.f32.gmra.mrb[0].mxu0 %v485
      %v700 = vpop.f32.mrb[0].mxu0
      %v701 = vadd.f32 0.0, %v700
      %v702 = vpop.f32.mrb[0].mxu0
      %703 = vmatprep.mubr.f32.mxu0 0.0
      %704 = vmatmul.mubr.f32.gmra.mrb[0].mxu0 %v488
      %v705 = vpop.f32.mrb[0].mxu0
      %v706 = vadd.f32 0.0, %v705
      %v707 = vpop.f32.mrb[0].mxu0
      %708 = vmatprep.mubr.f32.mxu0 0.0
      %709 = vmatmul.mubr.f32.gmra.mrb[0].mxu0 %v491
      %v710 = vpop.f32.mrb[0].mxu0
      %v711 = vadd.f32 0.0, %v710
      %v712 = vpop.f32.mrb[0].mxu0
      %713 = vmatprep.mubr.f32.mxu0 0.0
      %714 = vmatmul.mubr.f32.gmra.mrb[0].mxu0 %v494
      %v715 = vpop.f32.mrb[0].mxu0
      %v716 = vadd.f32 0.0, %v715
      %v717 = vpop.f32.mrb[0].mxu0
      %718 = vmatprep.mubr.f32.mxu0 0.0
      %719 = vmatmul.mubr.f32.gmra.mrb[0].mxu0 %v497
      %v720 = vpop.f32.mrb[0].mxu0
      %v721 = vadd.f32 0.0, %v720
      %v722 = vpop.f32.mrb[0].mxu0
      %723 = vmatprep.mubr.f32.mxu0 0.0
      %724 = vmatmul.mubr.f32.gmra.mrb[0].mxu0 %v500
      %v725 = vpop.f32.mrb[0].mxu0
      %v726 = vadd.f32 0.0, %v725
      %v727 = vpop.f32.mrb[0].mxu0
      %728 = vmatprep.mubr.f32.mxu0 0.0
      %729 = vmatmul.mubr.f32.gmra.mrb[0].mxu0 %v503
      %v730 = vpop.f32.mrb[0].mxu0
      %v731 = vadd.f32 0.0, %v730
      %v732 = vpop.f32.mrb[0].mxu0
      %733 = vdwg.mxu0
      %v735 = vsel %vm215, %v345, 0
      %v738 = vsel %vm215, %v346, 0
      %v741 = vsel %vm215, %v347, 0
      %v744 = vsel %vm215, %v348, 0
      %v747 = vsel %vm215, %v349, 0
      %v750 = vsel %vm215, %v350, 0
      %v753 = vsel %vm215, %v351, 0
      %v756 = vsel %vm215, %v352, 0
      %v759 = vsel %vm215, %v353, 0
      %v762 = vsel %vm215, %v354, 0
      %v765 = vsel %vm215, %v355, 0
      %v768 = vsel %vm215, %v356, 0
      %v771 = vsel %vm215, %v357, 0
      %v774 = vsel %vm215, %v358, 0
      %v777 = vsel %vm215, %v359, 0
      %v780 = vsel %vm215, %v360, 0
      %v783 = vsel %vm215, %v361, 0
      %v786 = vsel %vm215, %v362, 0
      %v789 = vsel %vm215, %v363, 0
      %v792 = vsel %vm215, %v364, 0
      %v795 = vsel %vm215, %v365, 0
      %v798 = vsel %vm215, %v366, 0
      %v801 = vsel %vm215, %v367, 0
      %v804 = vsel %vm215, %v368, 0
      %v807 = vsel %vm215, %v369, 0
      %v810 = vsel %vm215, %v370, 0
      %v813 = vsel %vm215, %v371, 0
      %v816 = vsel %vm215, %v372, 0
      %v819 = vsel %vm215, %v373, 0
      %v822 = vsel %vm215, %v374, 0
      %v825 = vsel %vm215, %v375, 0
      %v828 = vsel %vm215, %v376, 0
      %v831 = vsel %vm505, %v336, 0
      %833 = vmatprep.subr.mxu0 0.0
      %834 = vmatpush1.msra.mxu0 %v831
      %835 = vmatprep.subr.mxu0 0.0
      %836 = vmatpush1.msra.mxu0 0.0
      %837 = vmatprep.subr.mxu0 0.0
      %838 = vmatpush1.msra.mxu0 0.0
      %839 = vmatprep.subr.mxu0 0.0
      %840 = vmatpush1.msra.mxu0 0.0
      %841 = vmatprep.subr.mxu0 0.0
      %842 = vmatpush1.msra.mxu0 0.0
      %843 = vmatprep.subr.mxu0 0.0
      %844 = vmatpush1.msra.mxu0 0.0
      %845 = vmatprep.subr.mxu0 0.0
      %846 = vmatpush1.msra.mxu0 0.0
      %847 = vmatprep.subr.mxu0 0.0
      %848 = vmatpush1.msra.mxu0 0.0
      %849 = vmatprep.subr.mxu0 0.0
      %850 = vmatpush1.msra.mxu0 0.0
      %851 = vmatprep.subr.mxu0 0.0
      %852 = vmatpush1.msra.mxu0 0.0
      %853 = vmatprep.subr.mxu0 0.0
      %854 = vmatpush1.msra.mxu0 0.0
      %855 = vmatprep.subr.mxu0 0.0
      %856 = vmatpush1.msra.mxu0 0.0
      %857 = vmatprep.subr.mxu0 0.0
      %858 = vmatpush1.msra.mxu0 0.0
      %859 = vmatprep.subr.mxu0 0.0
      %860 = vmatpush1.msra.mxu0 0.0
      %861 = vmatprep.subr.mxu0 0.0
      %862 = vmatpush1.msra.mxu0 0.0
      %863 = vmatprep.subr.mxu0 0.0
      %864 = vmatpush1.msra.mxu0 0.0
      %865 = vmatprep.subr.mxu0 0.0
      %866 = vmatpush1.msra.mxu0 0.0
      %867 = vmatprep.subr.mxu0 0.0
      %868 = vmatpush1.msra.mxu0 0.0
      %869 = vmatprep.subr.mxu0 0.0
      %870 = vmatpush1.msra.mxu0 0.0
      %871 = vmatprep.subr.mxu0 0.0
      %872 = vmatpush1.msra.mxu0 0.0
      %873 = vmatprep.subr.mxu0 0.0
      %874 = vmatpush1.msra.mxu0 0.0
      %875 = vmatprep.subr.mxu0 0.0
      %876 = vmatpush1.msra.mxu0 0.0
      %877 = vmatprep.subr.mxu0 0.0
      %878 = vmatpush1.msra.mxu0 0.0
      %879 = vmatprep.subr.mxu0 0.0
      %880 = vmatpush1.msra.mxu0 0.0
      %881 = vmatprep.subr.mxu0 0.0
      %882 = vmatpush1.msra.mxu0 0.0
      %883 = vmatprep.subr.mxu0 0.0
      %884 = vmatpush1.msra.mxu0 0.0
      %885 = vmatprep.subr.mxu0 0.0
      %886 = vmatpush1.msra.mxu0 0.0
      %887 = vmatprep.subr.mxu0 0.0
      %888 = vmatpush1.msra.mxu0 0.0
      %889 = vmatprep.subr.mxu0 0.0
      %890 = vmatpush1.msra.mxu0 0.0
      %891 = vmatprep.subr.mxu0 0.0
      %892 = vmatpush1.msra.mxu0 0.0
      %893 = vmatprep.subr.mxu0 0.0
      %894 = vmatpush1.msra.mxu0 0.0
      %895 = vmatprep.subr.mxu0 0.0
      %896 = vmatpush1.msra.mxu0 0.0
      %897 = vmatprep.mubr.f32.mxu0 0.0
      %898 = vmatmul.mubr.f32.gmra.mrb[0].mxu0 %v735
      %v899 = vpop.f32.mrb[0].mxu0
      %v900 = vadd.f32 %v576, %v899
      %v901 = vpop.f32.mrb[0].mxu0
      %902 = vmatprep.mubr.f32.mxu0 0.0
      %903 = vmatmul.mubr.f32.gmra.mrb[0].mxu0 %v738
      %v904 = vpop.f32.mrb[0].mxu0
      %v905 = vadd.f32 %v581, %v904
      %v906 = vpop.f32.mrb[0].mxu0
      %907 = vmatprep.mubr.f32.mxu0 0.0
      %908 = vmatmul.mubr.f32.gmra.mrb[0].mxu0 %v741
      %v909 = vpop.f32.mrb[0].mxu0
      %v910 = vadd.f32 %v586, %v909
      %v911 = vpop.f32.mrb[0].mxu0
      %912 = vmatprep.mubr.f32.mxu0 0.0
      %913 = vmatmul.mubr.f32.gmra.mrb[0].mxu0 %v744
      %v914 = vpop.f32.mrb[0].mxu0
      %v915 = vadd.f32 %v591, %v914
      %v916 = vpop.f32.mrb[0].mxu0
      %917 = vmatprep.mubr.f32.mxu0 0.0
      %918 = vmatmul.mubr.f32.gmra.mrb[0].mxu0 %v747
      %v919 = vpop.f32.mrb[0].mxu0
      %v920 = vadd.f32 %v596, %v919
      %v921 = vpop.f32.mrb[0].mxu0
      %922 = vmatprep.mubr.f32.mxu0 0.0
      %923 = vmatmul.mubr.f32.gmra.mrb[0].mxu0 %v750
      %v924 = vpop.f32.mrb[0].mxu0
      %v925 = vadd.f32 %v601, %v924
      %v926 = vpop.f32.mrb[0].mxu0
      %927 = vmatprep.mubr.f32.mxu0 0.0
      %928 = vmatmul.mubr.f32.gmra.mrb[0].mxu0 %v753
      %v929 = vpop.f32.mrb[0].mxu0
      %v930 = vadd.f32 %v606, %v929
      %v931 = vpop.f32.mrb[0].mxu0
      %932 = vmatprep.mubr.f32.mxu0 0.0
      %933 = vmatmul.mubr.f32.gmra.mrb[0].mxu0 %v756
      %v934 = vpop.f32.mrb[0].mxu0
      %v935 = vadd.f32 %v611, %v934
      %v936 = vpop.f32.mrb[0].mxu0
      %937 = vmatprep.mubr.f32.mxu0 0.0
      %938 = vmatmul.mubr.f32.gmra.mrb[0].mxu0 %v759
      %v939 = vpop.f32.mrb[0].mxu0
      %v940 = vadd.f32 %v616, %v939
      %v941 = vpop.f32.mrb[0].mxu0
      %942 = vmatprep.mubr.f32.mxu0 0.0
      %943 = vmatmul.mubr.f32.gmra.mrb[0].mxu0 %v762
      %v944 = vpop.f32.mrb[0].mxu0
      %v945 = vadd.f32 %v621, %v944
      %v946 = vpop.f32.mrb[0].mxu0
      %947 = vmatprep.mubr.f32.mxu0 0.0
      %948 = vmatmul.mubr.f32.gmra.mrb[0].mxu0 %v765
      %v949 = vpop.f32.mrb[0].mxu0
      %v950 = vadd.f32 %v626, %v949
      %v951 = vpop.f32.mrb[0].mxu0
      %952 = vmatprep.mubr.f32.mxu0 0.0
      %953 = vmatmul.mubr.f32.gmra.mrb[0].mxu0 %v768
      %v954 = vpop.f32.mrb[0].mxu0
      %v955 = vadd.f32 %v631, %v954
      %v956 = vpop.f32.mrb[0].mxu0
      %957 = vmatprep.mubr.f32.mxu0 0.0
      %958 = vmatmul.mubr.f32.gmra.mrb[0].mxu0 %v771
      %v959 = vpop.f32.mrb[0].mxu0
      %v960 = vadd.f32 %v636, %v959
      %v961 = vpop.f32.mrb[0].mxu0
      %962 = vmatprep.mubr.f32.mxu0 0.0
      %963 = vmatmul.mubr.f32.gmra.mrb[0].mxu0 %v774
      %v964 = vpop.f32.mrb[0].mxu0
      %v965 = vadd.f32 %v641, %v964
      %v966 = vpop.f32.mrb[0].mxu0
      %967 = vmatprep.mubr.f32.mxu0 0.0
      %968 = vmatmul.mubr.f32.gmra.mrb[0].mxu0 %v777
      %v969 = vpop.f32.mrb[0].mxu0
      %v970 = vadd.f32 %v646, %v969
      %v971 = vpop.f32.mrb[0].mxu0
      %972 = vmatprep.mubr.f32.mxu0 0.0
      %973 = vmatmul.mubr.f32.gmra.mrb[0].mxu0 %v780
      %v974 = vpop.f32.mrb[0].mxu0
      %v975 = vadd.f32 %v651, %v974
      %v976 = vpop.f32.mrb[0].mxu0
      %977 = vmatprep.mubr.f32.mxu0 0.0
      %978 = vmatmul.mubr.f32.gmra.mrb[0].mxu0 %v783
      %v979 = vpop.f32.mrb[0].mxu0
      %v980 = vadd.f32 %v656, %v979
      %v981 = vpop.f32.mrb[0].mxu0
      %982 = vmatprep.mubr.f32.mxu0 0.0
      %983 = vmatmul.mubr.f32.gmra.mrb[0].mxu0 %v786
      %v984 = vpop.f32.mrb[0].mxu0
      %v985 = vadd.f32 %v661, %v984
      %v986 = vpop.f32.mrb[0].mxu0
      %987 = vmatprep.mubr.f32.mxu0 0.0
      %988 = vmatmul.mubr.f32.gmra.mrb[0].mxu0 %v789
      %v989 = vpop.f32.mrb[0].mxu0
      %v990 = vadd.f32 %v666, %v989
      %v991 = vpop.f32.mrb[0].mxu0
      %992 = vmatprep.mubr.f32.mxu0 0.0
      %993 = vmatmul.mubr.f32.gmra.mrb[0].mxu0 %v792
      %v994 = vpop.f32.mrb[0].mxu0
      %v995 = vadd.f32 %v671, %v994
      %v996 = vpop.f32.mrb[0].mxu0
      %997 = vmatprep.mubr.f32.mxu0 0.0
      %998 = vmatmul.mubr.f32.gmra.mrb[0].mxu0 %v795
      %v999 = vpop.f32.mrb[0].mxu0
      %v1000 = vadd.f32 %v676, %v999
      %v1001 = vpop.f32.mrb[0].mxu0
      %1002 = vmatprep.mubr.f32.mxu0 0.0
      %1003 = vmatmul.mubr.f32.gmra.mrb[0].mxu0 %v798
      %v1004 = vpop.f32.mrb[0].mxu0
      %v1005 = vadd.f32 %v681, %v1004
      %v1006 = vpop.f32.mrb[0].mxu0
      %1007 = vmatprep.mubr.f32.mxu0 0.0
      %1008 = vmatmul.mubr.f32.gmra.mrb[0].mxu0 %v801
      %v1009 = vpop.f32.mrb[0].mxu0
      %v1010 = vadd.f32 %v686, %v1009
      %v1011 = vpop.f32.mrb[0].mxu0
      %1012 = vmatprep.mubr.f32.mxu0 0.0
      %1013 = vmatmul.mubr.f32.gmra.mrb[0].mxu0 %v804
      %v1014 = vpop.f32.mrb[0].mxu0
      %v1015 = vadd.f32 %v691, %v1014
      %v1016 = vpop.f32.mrb[0].mxu0
      %1017 = vmatprep.mubr.f32.mxu0 0.0
      %1018 = vmatmul.mubr.f32.gmra.mrb[0].mxu0 %v807
      %v1019 = vpop.f32.mrb[0].mxu0
      %v1020 = vadd.f32 %v696, %v1019
      %v1021 = vpop.f32.mrb[0].mxu0
      %1022 = vmatprep.mubr.f32.mxu0 0.0
      %1023 = vmatmul.mubr.f32.gmra.mrb[0].mxu0 %v810
      %v1024 = vpop.f32.mrb[0].mxu0
      %v1025 = vadd.f32 %v701, %v1024
      %v1026 = vpop.f32.mrb[0].mxu0
      %1027 = vmatprep.mubr.f32.mxu0 0.0
      %1028 = vmatmul.mubr.f32.gmra.mrb[0].mxu0 %v813
      %v1029 = vpop.f32.mrb[0].mxu0
      %v1030 = vadd.f32 %v706, %v1029
      %v1031 = vpop.f32.mrb[0].mxu0
      %1032 = vmatprep.mubr.f32.mxu0 0.0
      %1033 = vmatmul.mubr.f32.gmra.mrb[0].mxu0 %v816
      %v1034 = vpop.f32.mrb[0].mxu0
      %v1035 = vadd.f32 %v711, %v1034
      %v1036 = vpop.f32.mrb[0].mxu0
      %1037 = vmatprep.mubr.f32.mxu0 0.0
      %1038 = vmatmul.mubr.f32.gmra.mrb[0].mxu0 %v819
      %v1039 = vpop.f32.mrb[0].mxu0
      %v1040 = vadd.f32 %v716, %v1039
      %v1041 = vpop.f32.mrb[0].mxu0
      %1042 = vmatprep.mubr.f32.mxu0 0.0
      %1043 = vmatmul.mubr.f32.gmra.mrb[0].mxu0 %v822
      %v1044 = vpop.f32.mrb[0].mxu0
      %v1045 = vadd.f32 %v721, %v1044
      %v1046 = vpop.f32.mrb[0].mxu0
      %1047 = vmatprep.mubr.f32.mxu0 0.0
      %1048 = vmatmul.mubr.f32.gmra.mrb[0].mxu0 %v825
      %v1049 = vpop.f32.mrb[0].mxu0
      %v1050 = vadd.f32 %v726, %v1049
      %v1051 = vpop.f32.mrb[0].mxu0
      %1052 = vmatprep.mubr.f32.mxu0 0.0
      %1053 = vmatmul.mubr.f32.gmra.mrb[0].mxu0 %v828
      %v1054 = vpop.f32.mrb[0].mxu0
      %v1055 = vadd.f32 %v731, %v1054
      %v1056 = vpop.f32.mrb[0].mxu0
      %1057 = vdwg.mxu0
      %v1058 = vld [vmem:[#allocation2 + $0x2] sm:$0xff]
      %v1059 = vld [vmem:[#allocation2 + $0xa] sm:$0xff]
      %v1060 = vld [vmem:[#allocation2 + $0x1a] sm:$0xff]
      %v1061 = vld [vmem:[#allocation2 + $0x22] sm:$0xff]
      %v1062 = vld [vmem:[#allocation2 + $0x32] sm:$0xff]
      %v1063 = vld [vmem:[#allocation2 + $0x3a] sm:$0xff]
      %v1064 = vld [vmem:[#allocation2 + $0x4a] sm:$0xff]
      %v1065 = vld [vmem:[#allocation2 + $0x52] sm:$0xff]
      %v1066 = vld [vmem:[#allocation2 + $0x62] sm:$0xff]
      %v1067 = vld [vmem:[#allocation2 + $0x6a] sm:$0xff]
      %v1068 = vld [vmem:[#allocation2 + $0x7a] sm:$0xff]
      %v1069 = vld [vmem:[#allocation2 + $0x82] sm:$0xff]
      %v1070 = vld [vmem:[#allocation2 + $0x92] sm:$0xff]
      %v1071 = vld [vmem:[#allocation2 + $0x9a] sm:$0xff]
      %v1072 = vld [vmem:[#allocation2 + $0xaa] sm:$0xff]
      %v1073 = vld [vmem:[#allocation2 + $0xb2] sm:$0xff]
      %v1074 = vld [vmem:[#allocation2 + $0xc2] sm:$0xff]
      %v1075 = vld [vmem:[#allocation2 + $0xca] sm:$0xff]
      %v1076 = vld [vmem:[#allocation2 + $0xda] sm:$0xff]
      %v1077 = vld [vmem:[#allocation2 + $0xe2] sm:$0xff]
      %v1078 = vld [vmem:[#allocation2 + $0xf2] sm:$0xff]
      %v1079 = vld [vmem:[#allocation2 + $0xfa] sm:$0xff]
      %v1080 = vld [vmem:[#allocation2 + $0x10a] sm:$0xff]
      %v1081 = vld [vmem:[#allocation2 + $0x112] sm:$0xff]
      %v1082 = vld [vmem:[#allocation2 + $0x122] sm:$0xff]
      %v1083 = vld [vmem:[#allocation2 + $0x12a] sm:$0xff]
      %v1084 = vld [vmem:[#allocation2 + $0x13a] sm:$0xff]
      %v1085 = vld [vmem:[#allocation2 + $0x142] sm:$0xff]
      %v1086 = vld [vmem:[#allocation2 + $0x152] sm:$0xff]
      %v1087 = vld [vmem:[#allocation2 + $0x15a] sm:$0xff]
      %v1088 = vld [vmem:[#allocation2 + $0x16a] sm:$0xff]
      %v1089 = vld [vmem:[#allocation2 + $0x172] sm:$0xff]
      %v1091 = vsel %vm215, %v1058, 0
      %v1094 = vsel %vm215, %v1059, 0
      %v1097 = vsel %vm215, %v1060, 0
      %v1100 = vsel %vm215, %v1061, 0
      %v1103 = vsel %vm215, %v1062, 0
      %v1106 = vsel %vm215, %v1063, 0
      %v1109 = vsel %vm215, %v1064, 0
      %v1112 = vsel %vm215, %v1065, 0
      %v1115 = vsel %vm215, %v1066, 0
      %v1118 = vsel %vm215, %v1067, 0
      %v1121 = vsel %vm215, %v1068, 0
      %v1124 = vsel %vm215, %v1069, 0
      %v1127 = vsel %vm215, %v1070, 0
      %v1130 = vsel %vm215, %v1071, 0
      %v1133 = vsel %vm215, %v1072, 0
      %v1136 = vsel %vm215, %v1073, 0
      %v1139 = vsel %vm215, %v1074, 0
      %v1142 = vsel %vm215, %v1075, 0
      %v1145 = vsel %vm215, %v1076, 0
      %v1148 = vsel %vm215, %v1077, 0
      %v1151 = vsel %vm215, %v1078, 0
      %v1154 = vsel %vm215, %v1079, 0
      %v1157 = vsel %vm215, %v1080, 0
      %v1160 = vsel %vm215, %v1081, 0
      %v1163 = vsel %vm215, %v1082, 0
      %v1166 = vsel %vm215, %v1083, 0
      %v1169 = vsel %vm215, %v1084, 0
      %v1172 = vsel %vm215, %v1085, 0
      %v1175 = vsel %vm215, %v1086, 0
      %v1178 = vsel %vm215, %v1087, 0
      %v1181 = vsel %vm215, %v1088, 0
      %v1184 = vsel %vm215, %v1089, 0
      %v1187 = vsel %vm505, %v338, 0
      %1189 = vmatprep.subr.mxu0 0.0
      %1190 = vmatpush1.msra.mxu0 %v1187
      %1191 = vmatprep.subr.mxu0 0.0
      %1192 = vmatpush1.msra.mxu0 0.0
      %1193 = vmatprep.subr.mxu0 0.0
      %1194 = vmatpush1.msra.mxu0 0.0
      %1195 = vmatprep.subr.mxu0 0.0
      %1196 = vmatpush1.msra.mxu0 0.0
      %1197 = vmatprep.subr.mxu0 0.0
      %1198 = vmatpush1.msra.mxu0 0.0
      %1199 = vmatprep.subr.mxu0 0.0
      %1200 = vmatpush1.msra.mxu0 0.0
      %1201 = vmatprep.subr.mxu0 0.0
      %1202 = vmatpush1.msra.mxu0 0.0
      %1203 = vmatprep.subr.mxu0 0.0
      %1204 = vmatpush1.msra.mxu0 0.0
      %1205 = vmatprep.subr.mxu0 0.0
      %1206 = vmatpush1.msra.mxu0 0.0
      %1207 = vmatprep.subr.mxu0 0.0
      %1208 = vmatpush1.msra.mxu0 0.0
      %1209 = vmatprep.subr.mxu0 0.0
      %1210 = vmatpush1.msra.mxu0 0.0
      %1211 = vmatprep.subr.mxu0 0.0
      %1212 = vmatpush1.msra.mxu0 0.0
      %1213 = vmatprep.subr.mxu0 0.0
      %1214 = vmatpush1.msra.mxu0 0.0
      %1215 = vmatprep.subr.mxu0 0.0
      %1216 = vmatpush1.msra.mxu0 0.0
      %1217 = vmatprep.subr.mxu0 0.0
      %1218 = vmatpush1.msra.mxu0 0.0
      %1219 = vmatprep.subr.mxu0 0.0
      %1220 = vmatpush1.msra.mxu0 0.0
      %1221 = vmatprep.subr.mxu0 0.0
      %1222 = vmatpush1.msra.mxu0 0.0
      %1223 = vmatprep.subr.mxu0 0.0
      %1224 = vmatpush1.msra.mxu0 0.0
      %1225 = vmatprep.subr.mxu0 0.0
      %1226 = vmatpush1.msra.mxu0 0.0
      %1227 = vmatprep.subr.mxu0 0.0
      %1228 = vmatpush1.msra.mxu0 0.0
      %1229 = vmatprep.subr.mxu0 0.0
      %1230 = vmatpush1.msra.mxu0 0.0
      %1231 = vmatprep.subr.mxu0 0.0
      %1232 = vmatpush1.msra.mxu0 0.0
      %1233 = vmatprep.subr.mxu0 0.0
      %1234 = vmatpush1.msra.mxu0 0.0
      %1235 = vmatprep.subr.mxu0 0.0
      %1236 = vmatpush1.msra.mxu0 0.0
      %1237 = vmatprep.subr.mxu0 0.0
      %1238 = vmatpush1.msra.mxu0 0.0
      %1239 = vmatprep.subr.mxu0 0.0
      %1240 = vmatpush1.msra.mxu0 0.0
      %1241 = vmatprep.subr.mxu0 0.0
      %1242 = vmatpush1.msra.mxu0 0.0
      %1243 = vmatprep.subr.mxu0 0.0
      %1244 = vmatpush1.msra.mxu0 0.0
      %1245 = vmatprep.subr.mxu0 0.0
      %1246 = vmatpush1.msra.mxu0 0.0
      %1247 = vmatprep.subr.mxu0 0.0
      %1248 = vmatpush1.msra.mxu0 0.0
      %1249 = vmatprep.subr.mxu0 0.0
      %1250 = vmatpush1.msra.mxu0 0.0
      %1251 = vmatprep.subr.mxu0 0.0
      %1252 = vmatpush1.msra.mxu0 0.0
      %1253 = vmatprep.mubr.f32.mxu0 0.0
      %1254 = vmatmul.mubr.f32.gmra.mrb[0].mxu0 %v1091
      %v1255 = vpop.f32.mrb[0].mxu0
      %v1256 = vadd.f32 0.0, %v1255
      %v1257 = vpop.f32.mrb[0].mxu0
      %1258 = vmatprep.mubr.f32.mxu0 0.0
      %1259 = vmatmul.mubr.f32.gmra.mrb[0].mxu0 %v1094
      %v1260 = vpop.f32.mrb[0].mxu0
      %v1261 = vadd.f32 0.0, %v1260
      %v1262 = vpop.f32.mrb[0].mxu0
      %1263 = vmatprep.mubr.f32.mxu0 0.0
      %1264 = vmatmul.mubr.f32.gmra.mrb[0].mxu0 %v1097
      %v1265 = vpop.f32.mrb[0].mxu0
      %v1266 = vadd.f32 0.0, %v1265
      %v1267 = vpop.f32.mrb[0].mxu0
      %1268 = vmatprep.mubr.f32.mxu0 0.0
      %1269 = vmatmul.mubr.f32.gmra.mrb[0].mxu0 %v1100
      %v1270 = vpop.f32.mrb[0].mxu0
      %v1271 = vadd.f32 0.0, %v1270
      %v1272 = vpop.f32.mrb[0].mxu0
      %1273 = vmatprep.mubr.f32.mxu0 0.0
      %1274 = vmatmul.mubr.f32.gmra.mrb[0].mxu0 %v1103
      %v1275 = vpop.f32.mrb[0].mxu0
      %v1276 = vadd.f32 0.0, %v1275
      %v1277 = vpop.f32.mrb[0].mxu0
      %1278 = vmatprep.mubr.f32.mxu0 0.0
      %1279 = vmatmul.mubr.f32.gmra.mrb[0].mxu0 %v1106
      %v1280 = vpop.f32.mrb[0].mxu0
      %v1281 = vadd.f32 0.0, %v1280
      %v1282 = vpop.f32.mrb[0].mxu0
      %1283 = vmatprep.mubr.f32.mxu0 0.0
      %1284 = vmatmul.mubr.f32.gmra.mrb[0].mxu0 %v1109
      %v1285 = vpop.f32.mrb[0].mxu0
      %v1286 = vadd.f32 0.0, %v1285
      %v1287 = vpop.f32.mrb[0].mxu0
      %1288 = vmatprep.mubr.f32.mxu0 0.0
      %1289 = vmatmul.mubr.f32.gmra.mrb[0].mxu0 %v1112
      %v1290 = vpop.f32.mrb[0].mxu0
      %v1291 = vadd.f32 0.0, %v1290
      %v1292 = vpop.f32.mrb[0].mxu0
      %1293 = vmatprep.mubr.f32.mxu0 0.0
      %1294 = vmatmul.mubr.f32.gmra.mrb[0].mxu0 %v1115
      %v1295 = vpop.f32.mrb[0].mxu0
      %v1296 = vadd.f32 0.0, %v1295
      %v1297 = vpop.f32.mrb[0].mxu0
      %1298 = vmatprep.mubr.f32.mxu0 0.0
      %1299 = vmatmul.mubr.f32.gmra.mrb[0].mxu0 %v1118
      %v1300 = vpop.f32.mrb[0].mxu0
      %v1301 = vadd.f32 0.0, %v1300
      %v1302 = vpop.f32.mrb[0].mxu0
      %1303 = vmatprep.mubr.f32.mxu0 0.0
      %1304 = vmatmul.mubr.f32.gmra.mrb[0].mxu0 %v1121
      %v1305 = vpop.f32.mrb[0].mxu0
      %v1306 = vadd.f32 0.0, %v1305
      %v1307 = vpop.f32.mrb[0].mxu0
      %1308 = vmatprep.mubr.f32.mxu0 0.0
      %1309 = vmatmul.mubr.f32.gmra.mrb[0].mxu0 %v1124
      %v1310 = vpop.f32.mrb[0].mxu0
      %v1311 = vadd.f32 0.0, %v1310
      %v1312 = vpop.f32.mrb[0].mxu0
      %1313 = vmatprep.mubr.f32.mxu0 0.0
      %1314 = vmatmul.mubr.f32.gmra.mrb[0].mxu0 %v1127
      %v1315 = vpop.f32.mrb[0].mxu0
      %v1316 = vadd.f32 0.0, %v1315
      %v1317 = vpop.f32.mrb[0].mxu0
      %1318 = vmatprep.mubr.f32.mxu0 0.0
      %1319 = vmatmul.mubr.f32.gmra.mrb[0].mxu0 %v1130
      %v1320 = vpop.f32.mrb[0].mxu0
      %v1321 = vadd.f32 0.0, %v1320
      %v1322 = vpop.f32.mrb[0].mxu0
      %1323 = vmatprep.mubr.f32.mxu0 0.0
      %1324 = vmatmul.mubr.f32.gmra.mrb[0].mxu0 %v1133
      %v1325 = vpop.f32.mrb[0].mxu0
      %v1326 = vadd.f32 0.0, %v1325
      %v1327 = vpop.f32.mrb[0].mxu0
      %1328 = vmatprep.mubr.f32.mxu0 0.0
      %1329 = vmatmul.mubr.f32.gmra.mrb[0].mxu0 %v1136
      %v1330 = vpop.f32.mrb[0].mxu0
      %v1331 = vadd.f32 0.0, %v1330
      %v1332 = vpop.f32.mrb[0].mxu0
      %1333 = vmatprep.mubr.f32.mxu0 0.0
      %1334 = vmatmul.mubr.f32.gmra.mrb[0].mxu0 %v1139
      %v1335 = vpop.f32.mrb[0].mxu0
      %v1336 = vadd.f32 0.0, %v1335
      %v1337 = vpop.f32.mrb[0].mxu0
      %1338 = vmatprep.mubr.f32.mxu0 0.0
      %1339 = vmatmul.mubr.f32.gmra.mrb[0].mxu0 %v1142
      %v1340 = vpop.f32.mrb[0].mxu0
      %v1341 = vadd.f32 0.0, %v1340
      %v1342 = vpop.f32.mrb[0].mxu0
      %1343 = vmatprep.mubr.f32.mxu0 0.0
      %1344 = vmatmul.mubr.f32.gmra.mrb[0].mxu0 %v1145
      %v1345 = vpop.f32.mrb[0].mxu0
      %v1346 = vadd.f32 0.0, %v1345
      %v1347 = vpop.f32.mrb[0].mxu0
      %1348 = vmatprep.mubr.f32.mxu0 0.0
      %1349 = vmatmul.mubr.f32.gmra.mrb[0].mxu0 %v1148
      %v1350 = vpop.f32.mrb[0].mxu0
      %v1351 = vadd.f32 0.0, %v1350
      %v1352 = vpop.f32.mrb[0].mxu0
      %1353 = vmatprep.mubr.f32.mxu0 0.0
      %1354 = vmatmul.mubr.f32.gmra.mrb[0].mxu0 %v1151
      %v1355 = vpop.f32.mrb[0].mxu0
      %v1356 = vadd.f32 0.0, %v1355
      %v1357 = vpop.f32.mrb[0].mxu0
      %1358 = vmatprep.mubr.f32.mxu0 0.0
      %1359 = vmatmul.mubr.f32.gmra.mrb[0].mxu0 %v1154
      %v1360 = vpop.f32.mrb[0].mxu0
      %v1361 = vadd.f32 0.0, %v1360
      %v1362 = vpop.f32.mrb[0].mxu0
      %1363 = vmatprep.mubr.f32.mxu0 0.0
      %1364 = vmatmul.mubr.f32.gmra.mrb[0].mxu0 %v1157
      %v1365 = vpop.f32.mrb[0].mxu0
      %v1366 = vadd.f32 0.0, %v1365
      %v1367 = vpop.f32.mrb[0].mxu0
      %1368 = vmatprep.mubr.f32.mxu0 0.0
      %1369 = vmatmul.mubr.f32.gmra.mrb[0].mxu0 %v1160
      %v1370 = vpop.f32.mrb[0].mxu0
      %v1371 = vadd.f32 0.0, %v1370
      %v1372 = vpop.f32.mrb[0].mxu0
      %1373 = vmatprep.mubr.f32.mxu0 0.0
      %1374 = vmatmul.mubr.f32.gmra.mrb[0].mxu0 %v1163
      %v1375 = vpop.f32.mrb[0].mxu0
      %v1376 = vadd.f32 0.0, %v1375
      %v1377 = vpop.f32.mrb[0].mxu0
      %1378 = vmatprep.mubr.f32.mxu0 0.0
      %1379 = vmatmul.mubr.f32.gmra.mrb[0].mxu0 %v1166
      %v1380 = vpop.f32.mrb[0].mxu0
      %v1381 = vadd.f32 0.0, %v1380
      %v1382 = vpop.f32.mrb[0].mxu0
      %1383 = vmatprep.mubr.f32.mxu0 0.0
      %1384 = vmatmul.mubr.f32.gmra.mrb[0].mxu0 %v1169
      %v1385 = vpop.f32.mrb[0].mxu0
      %v1386 = vadd.f32 0.0, %v1385
      %v1387 = vpop.f32.mrb[0].mxu0
      %1388 = vmatprep.mubr.f32.mxu0 0.0
      %1389 = vmatmul.mubr.f32.gmra.mrb[0].mxu0 %v1172
      %v1390 = vpop.f32.mrb[0].mxu0
      %v1391 = vadd.f32 0.0, %v1390
      %v1392 = vpop.f32.mrb[0].mxu0
      %1393 = vmatprep.mubr.f32.mxu0 0.0
      %1394 = vmatmul.mubr.f32.gmra.mrb[0].mxu0 %v1175
      %v1395 = vpop.f32.mrb[0].mxu0
      %v1396 = vadd.f32 0.0, %v1395
      %v1397 = vpop.f32.mrb[0].mxu0
      %1398 = vmatprep.mubr.f32.mxu0 0.0
      %1399 = vmatmul.mubr.f32.gmra.mrb[0].mxu0 %v1178
      %v1400 = vpop.f32.mrb[0].mxu0
      %v1401 = vadd.f32 0.0, %v1400
      %v1402 = vpop.f32.mrb[0].mxu0
      %1403 = vmatprep.mubr.f32.mxu0 0.0
      %1404 = vmatmul.mubr.f32.gmra.mrb[0].mxu0 %v1181
      %v1405 = vpop.f32.mrb[0].mxu0
      %v1406 = vadd.f32 0.0, %v1405
      %v1407 = vpop.f32.mrb[0].mxu0
      %1408 = vmatprep.mubr.f32.mxu0 0.0
      %1409 = vmatmul.mubr.f32.gmra.mrb[0].mxu0 %v1184
      %v1410 = vpop.f32.mrb[0].mxu0
      %v1411 = vadd.f32 0.0, %v1410
      %v1412 = vpop.f32.mrb[0].mxu0
      %1413 = vdwg.mxu0
      %v1414 = vadd.f32 %v900, %v1256
      %v1415 = vadd.f32 %v905, %v1261
      %v1416 = vadd.f32 %v910, %v1266
      %v1417 = vadd.f32 %v915, %v1271
      %v1418 = vadd.f32 %v920, %v1276
      %v1419 = vadd.f32 %v925, %v1281
      %v1420 = vadd.f32 %v930, %v1286
      %v1421 = vadd.f32 %v935, %v1291
      %v1422 = vadd.f32 %v940, %v1296
      %v1423 = vadd.f32 %v945, %v1301
      %v1424 = vadd.f32 %v950, %v1306
      %v1425 = vadd.f32 %v955, %v1311
      %v1426 = vadd.f32 %v960, %v1316
      %v1427 = vadd.f32 %v965, %v1321
      %v1428 = vadd.f32 %v970, %v1326
      %v1429 = vadd.f32 %v975, %v1331
      %v1430 = vadd.f32 %v980, %v1336
      %v1431 = vadd.f32 %v985, %v1341
      %v1432 = vadd.f32 %v990, %v1346
      %v1433 = vadd.f32 %v995, %v1351
      %v1434 = vadd.f32 %v1000, %v1356
      %v1435 = vadd.f32 %v1005, %v1361
      %v1436 = vadd.f32 %v1010, %v1366
      %v1437 = vadd.f32 %v1015, %v1371
      %v1438 = vadd.f32 %v1020, %v1376
      %v1439 = vadd.f32 %v1025, %v1381
      %v1440 = vadd.f32 %v1030, %v1386
      %v1441 = vadd.f32 %v1035, %v1391
      %v1442 = vadd.f32 %v1040, %v1396
      %v1443 = vadd.f32 %v1045, %v1401
      %v1444 = vadd.f32 %v1050, %v1406
      %v1445 = vadd.f32 %v1055, %v1411
      %v1446 = vld [vmem:[%s303] sm:$0xff]
      %v1447 = vld [vmem:[%s303 + $0x8] sm:$0xff]
      %v1448 = vld [vmem:[%s303 + $0x18] sm:$0xff]
      %v1449 = vld [vmem:[%s303 + $0x20] sm:$0xff]
      %v1450 = vld [vmem:[%s303 + $0x30] sm:$0xff]
      %v1451 = vld [vmem:[%s303 + $0x38] sm:$0xff]
      %v1452 = vld [vmem:[%s303 + $0x48] sm:$0xff]
      %v1453 = vld [vmem:[%s303 + $0x50] sm:$0xff]
      %v1454 = vld [vmem:[%s303 + $0x60] sm:$0xff]
      %v1455 = vld [vmem:[%s303 + $0x68] sm:$0xff]
      %v1456 = vld [vmem:[%s303 + $0x78] sm:$0xff]
      %v1457 = vld [vmem:[%s303 + $0x80] sm:$0xff]
      %v1458 = vld [vmem:[%s303 + $0x90] sm:$0xff]
      %v1459 = vld [vmem:[%s303 + $0x98] sm:$0xff]
      %v1460 = vld [vmem:[%s303 + $0xa8] sm:$0xff]
      %v1461 = vld [vmem:[%s303 + $0xb0] sm:$0xff]
      %v1462 = vld [vmem:[%s303 + $0xc0] sm:$0xff]
      %v1463 = vld [vmem:[%s303 + $0xc8] sm:$0xff]
      %v1464 = vld [vmem:[%s303 + $0xd8] sm:$0xff]
      %v1465 = vld [vmem:[%s303 + $0xe0] sm:$0xff]
      %v1466 = vld [vmem:[%s303 + $0xf0] sm:$0xff]
      %v1467 = vld [vmem:[%s303 + $0xf8] sm:$0xff]
      %v1468 = vld [vmem:[%s303 + $0x108] sm:$0xff]
      %v1469 = vld [vmem:[%s303 + $0x110] sm:$0xff]
      %v1470 = vld [vmem:[%s303 + $0x120] sm:$0xff]
      %v1471 = vld [vmem:[%s303 + $0x128] sm:$0xff]
      %v1472 = vld [vmem:[%s303 + $0x138] sm:$0xff]
      %v1473 = vld [vmem:[%s303 + $0x140] sm:$0xff]
      %v1474 = vld [vmem:[%s303 + $0x150] sm:$0xff]
      %v1475 = vld [vmem:[%s303 + $0x158] sm:$0xff]
      %v1476 = vld [vmem:[%s303 + $0x168] sm:$0xff]
      %v1477 = vld [vmem:[%s303 + $0x170] sm:$0xff]
      %v1479 = vsel %vm215, %v1446, 0
      %v1482 = vsel %vm215, %v1447, 0
      %v1485 = vsel %vm215, %v1448, 0
      %v1488 = vsel %vm215, %v1449, 0
      %v1491 = vsel %vm215, %v1450, 0
      %v1494 = vsel %vm215, %v1451, 0
      %v1497 = vsel %vm215, %v1452, 0
      %v1500 = vsel %vm215, %v1453, 0
      %v1503 = vsel %vm215, %v1454, 0
      %v1506 = vsel %vm215, %v1455, 0
      %v1509 = vsel %vm215, %v1456, 0
      %v1512 = vsel %vm215, %v1457, 0
      %v1515 = vsel %vm215, %v1458, 0
      %v1518 = vsel %vm215, %v1459, 0
      %v1521 = vsel %vm215, %v1460, 0
      %v1524 = vsel %vm215, %v1461, 0
      %v1527 = vsel %vm215, %v1462, 0
      %v1530 = vsel %vm215, %v1463, 0
      %v1533 = vsel %vm215, %v1464, 0
      %v1536 = vsel %vm215, %v1465, 0
      %v1539 = vsel %vm215, %v1466, 0
      %v1542 = vsel %vm215, %v1467, 0
      %v1545 = vsel %vm215, %v1468, 0
      %v1548 = vsel %vm215, %v1469, 0
      %v1551 = vsel %vm215, %v1470, 0
      %v1554 = vsel %vm215, %v1471, 0
      %v1557 = vsel %vm215, %v1472, 0
      %v1560 = vsel %vm215, %v1473, 0
      %v1563 = vsel %vm215, %v1474, 0
      %v1566 = vsel %vm215, %v1475, 0
      %v1569 = vsel %vm215, %v1476, 0
      %v1572 = vsel %vm215, %v1477, 0
      %v1575 = vsel %vm505, %v339, 0
      %1577 = vmatprep.subr.mxu0 0.0
      %1578 = vmatpush1.msra.mxu0 %v1575
      %1579 = vmatprep.subr.mxu0 0.0
      %1580 = vmatpush1.msra.mxu0 0.0
      %1581 = vmatprep.subr.mxu0 0.0
      %1582 = vmatpush1.msra.mxu0 0.0
      %1583 = vmatprep.subr.mxu0 0.0
      %1584 = vmatpush1.msra.mxu0 0.0
      %1585 = vmatprep.subr.mxu0 0.0
      %1586 = vmatpush1.msra.mxu0 0.0
      %1587 = vmatprep.subr.mxu0 0.0
      %1588 = vmatpush1.msra.mxu0 0.0
      %1589 = vmatprep.subr.mxu0 0.0
      %1590 = vmatpush1.msra.mxu0 0.0
      %1591 = vmatprep.subr.mxu0 0.0
      %1592 = vmatpush1.msra.mxu0 0.0
      %1593 = vmatprep.subr.mxu0 0.0
      %1594 = vmatpush1.msra.mxu0 0.0
      %1595 = vmatprep.subr.mxu0 0.0
      %1596 = vmatpush1.msra.mxu0 0.0
      %1597 = vmatprep.subr.mxu0 0.0
      %1598 = vmatpush1.msra.mxu0 0.0
      %1599 = vmatprep.subr.mxu0 0.0
      %1600 = vmatpush1.msra.mxu0 0.0
      %1601 = vmatprep.subr.mxu0 0.0
      %1602 = vmatpush1.msra.mxu0 0.0
      %1603 = vmatprep.subr.mxu0 0.0
      %1604 = vmatpush1.msra.mxu0 0.0
      %1605 = vmatprep.subr.mxu0 0.0
      %1606 = vmatpush1.msra.mxu0 0.0
      %1607 = vmatprep.subr.mxu0 0.0
      %1608 = vmatpush1.msra.mxu0 0.0
      %1609 = vmatprep.subr.mxu0 0.0
      %1610 = vmatpush1.msra.mxu0 0.0
      %1611 = vmatprep.subr.mxu0 0.0
      %1612 = vmatpush1.msra.mxu0 0.0
      %1613 = vmatprep.subr.mxu0 0.0
      %1614 = vmatpush1.msra.mxu0 0.0
      %1615 = vmatprep.subr.mxu0 0.0
      %1616 = vmatpush1.msra.mxu0 0.0
      %1617 = vmatprep.subr.mxu0 0.0
      %1618 = vmatpush1.msra.mxu0 0.0
      %1619 = vmatprep.subr.mxu0 0.0
      %1620 = vmatpush1.msra.mxu0 0.0
      %1621 = vmatprep.subr.mxu0 0.0
      %1622 = vmatpush1.msra.mxu0 0.0
      %1623 = vmatprep.subr.mxu0 0.0
      %1624 = vmatpush1.msra.mxu0 0.0
      %1625 = vmatprep.subr.mxu0 0.0
      %1626 = vmatpush1.msra.mxu0 0.0
      %1627 = vmatprep.subr.mxu0 0.0
      %1628 = vmatpush1.msra.mxu0 0.0
      %1629 = vmatprep.subr.mxu0 0.0
      %1630 = vmatpush1.msra.mxu0 0.0
      %1631 = vmatprep.subr.mxu0 0.0
      %1632 = vmatpush1.msra.mxu0 0.0
      %1633 = vmatprep.subr.mxu0 0.0
      %1634 = vmatpush1.msra.mxu0 0.0
      %1635 = vmatprep.subr.mxu0 0.0
      %1636 = vmatpush1.msra.mxu0 0.0
      %1637 = vmatprep.subr.mxu0 0.0
      %1638 = vmatpush1.msra.mxu0 0.0
      %1639 = vmatprep.subr.mxu0 0.0
      %1640 = vmatpush1.msra.mxu0 0.0
      %1641 = vmatprep.mubr.f32.mxu0 0.0
      %1642 = vmatmul.mubr.f32.gmra.mrb[0].mxu0 %v1479
      %v1643 = vpop.f32.mrb[0].mxu0
      %v1644 = vadd.f32 0.0, %v1643
      %v1645 = vpop.f32.mrb[0].mxu0
      %1646 = vmatprep.mubr.f32.mxu0 0.0
      %1647 = vmatmul.mubr.f32.gmra.mrb[0].mxu0 %v1482
      %v1648 = vpop.f32.mrb[0].mxu0
      %v1649 = vadd.f32 0.0, %v1648
      %v1650 = vpop.f32.mrb[0].mxu0
      %1651 = vmatprep.mubr.f32.mxu0 0.0
      %1652 = vmatmul.mubr.f32.gmra.mrb[0].mxu0 %v1485
      %v1653 = vpop.f32.mrb[0].mxu0
      %v1654 = vadd.f32 0.0, %v1653
      %v1655 = vpop.f32.mrb[0].mxu0
      %1656 = vmatprep.mubr.f32.mxu0 0.0
      %1657 = vmatmul.mubr.f32.gmra.mrb[0].mxu0 %v1488
      %v1658 = vpop.f32.mrb[0].mxu0
      %v1659 = vadd.f32 0.0, %v1658
      %v1660 = vpop.f32.mrb[0].mxu0
      %1661 = vmatprep.mubr.f32.mxu0 0.0
      %1662 = vmatmul.mubr.f32.gmra.mrb[0].mxu0 %v1491
      %v1663 = vpop.f32.mrb[0].mxu0
      %v1664 = vadd.f32 0.0, %v1663
      %v1665 = vpop.f32.mrb[0].mxu0
      %1666 = vmatprep.mubr.f32.mxu0 0.0
      %1667 = vmatmul.mubr.f32.gmra.mrb[0].mxu0 %v1494
      %v1668 = vpop.f32.mrb[0].mxu0
      %v1669 = vadd.f32 0.0, %v1668
      %v1670 = vpop.f32.mrb[0].mxu0
      %1671 = vmatprep.mubr.f32.mxu0 0.0
      %1672 = vmatmul.mubr.f32.gmra.mrb[0].mxu0 %v1497
      %v1673 = vpop.f32.mrb[0].mxu0
      %v1674 = vadd.f32 0.0, %v1673
      %v1675 = vpop.f32.mrb[0].mxu0
      %1676 = vmatprep.mubr.f32.mxu0 0.0
      %1677 = vmatmul.mubr.f32.gmra.mrb[0].mxu0 %v1500
      %v1678 = vpop.f32.mrb[0].mxu0
      %v1679 = vadd.f32 0.0, %v1678
      %v1680 = vpop.f32.mrb[0].mxu0
      %1681 = vmatprep.mubr.f32.mxu0 0.0
      %1682 = vmatmul.mubr.f32.gmra.mrb[0].mxu0 %v1503
      %v1683 = vpop.f32.mrb[0].mxu0
      %v1684 = vadd.f32 0.0, %v1683
      %v1685 = vpop.f32.mrb[0].mxu0
      %1686 = vmatprep.mubr.f32.mxu0 0.0
      %1687 = vmatmul.mubr.f32.gmra.mrb[0].mxu0 %v1506
      %v1688 = vpop.f32.mrb[0].mxu0
      %v1689 = vadd.f32 0.0, %v1688
      %v1690 = vpop.f32.mrb[0].mxu0
      %1691 = vmatprep.mubr.f32.mxu0 0.0
      %1692 = vmatmul.mubr.f32.gmra.mrb[0].mxu0 %v1509
      %v1693 = vpop.f32.mrb[0].mxu0
      %v1694 = vadd.f32 0.0, %v1693
      %v1695 = vpop.f32.mrb[0].mxu0
      %1696 = vmatprep.mubr.f32.mxu0 0.0
      %1697 = vmatmul.mubr.f32.gmra.mrb[0].mxu0 %v1512
      %v1698 = vpop.f32.mrb[0].mxu0
      %v1699 = vadd.f32 0.0, %v1698
      %v1700 = vpop.f32.mrb[0].mxu0
      %1701 = vmatprep.mubr.f32.mxu0 0.0
      %1702 = vmatmul.mubr.f32.gmra.mrb[0].mxu0 %v1515
      %v1703 = vpop.f32.mrb[0].mxu0
      %v1704 = vadd.f32 0.0, %v1703
      %v1705 = vpop.f32.mrb[0].mxu0
      %1706 = vmatprep.mubr.f32.mxu0 0.0
      %1707 = vmatmul.mubr.f32.gmra.mrb[0].mxu0 %v1518
      %v1708 = vpop.f32.mrb[0].mxu0
      %v1709 = vadd.f32 0.0, %v1708
      %v1710 = vpop.f32.mrb[0].mxu0
      %1711 = vmatprep.mubr.f32.mxu0 0.0
      %1712 = vmatmul.mubr.f32.gmra.mrb[0].mxu0 %v1521
      %v1713 = vpop.f32.mrb[0].mxu0
      %v1714 = vadd.f32 0.0, %v1713
      %v1715 = vpop.f32.mrb[0].mxu0
      %1716 = vmatprep.mubr.f32.mxu0 0.0
      %1717 = vmatmul.mubr.f32.gmra.mrb[0].mxu0 %v1524
      %v1718 = vpop.f32.mrb[0].mxu0
      %v1719 = vadd.f32 0.0, %v1718
      %v1720 = vpop.f32.mrb[0].mxu0
      %1721 = vmatprep.mubr.f32.mxu0 0.0
      %1722 = vmatmul.mubr.f32.gmra.mrb[0].mxu0 %v1527
      %v1723 = vpop.f32.mrb[0].mxu0
      %v1724 = vadd.f32 0.0, %v1723
      %v1725 = vpop.f32.mrb[0].mxu0
      %1726 = vmatprep.mubr.f32.mxu0 0.0
      %1727 = vmatmul.mubr.f32.gmra.mrb[0].mxu0 %v1530
      %v1728 = vpop.f32.mrb[0].mxu0
      %v1729 = vadd.f32 0.0, %v1728
      %v1730 = vpop.f32.mrb[0].mxu0
      %1731 = vmatprep.mubr.f32.mxu0 0.0
      %1732 = vmatmul.mubr.f32.gmra.mrb[0].mxu0 %v1533
      %v1733 = vpop.f32.mrb[0].mxu0
      %v1734 = vadd.f32 0.0, %v1733
      %v1735 = vpop.f32.mrb[0].mxu0
      %1736 = vmatprep.mubr.f32.mxu0 0.0
      %1737 = vmatmul.mubr.f32.gmra.mrb[0].mxu0 %v1536
      %v1738 = vpop.f32.mrb[0].mxu0
      %v1739 = vadd.f32 0.0, %v1738
      %v1740 = vpop.f32.mrb[0].mxu0
      %1741 = vmatprep.mubr.f32.mxu0 0.0
      %1742 = vmatmul.mubr.f32.gmra.mrb[0].mxu0 %v1539
      %v1743 = vpop.f32.mrb[0].mxu0
      %v1744 = vadd.f32 0.0, %v1743
      %v1745 = vpop.f32.mrb[0].mxu0
      %1746 = vmatprep.mubr.f32.mxu0 0.0
      %1747 = vmatmul.mubr.f32.gmra.mrb[0].mxu0 %v1542
      %v1748 = vpop.f32.mrb[0].mxu0
      %v1749 = vadd.f32 0.0, %v1748
      %v1750 = vpop.f32.mrb[0].mxu0
      %1751 = vmatprep.mubr.f32.mxu0 0.0
      %1752 = vmatmul.mubr.f32.gmra.mrb[0].mxu0 %v1545
      %v1753 = vpop.f32.mrb[0].mxu0
      %v1754 = vadd.f32 0.0, %v1753
      %v1755 = vpop.f32.mrb[0].mxu0
      %1756 = vmatprep.mubr.f32.mxu0 0.0
      %1757 = vmatmul.mubr.f32.gmra.mrb[0].mxu0 %v1548
      %v1758 = vpop.f32.mrb[0].mxu0
      %v1759 = vadd.f32 0.0, %v1758
      %v1760 = vpop.f32.mrb[0].mxu0
      %1761 = vmatprep.mubr.f32.mxu0 0.0
      %1762 = vmatmul.mubr.f32.gmra.mrb[0].mxu0 %v1551
      %v1763 = vpop.f32.mrb[0].mxu0
      %v1764 = vadd.f32 0.0, %v1763
      %v1765 = vpop.f32.mrb[0].mxu0
      %1766 = vmatprep.mubr.f32.mxu0 0.0
      %1767 = vmatmul.mubr.f32.gmra.mrb[0].mxu0 %v1554
      %v1768 = vpop.f32.mrb[0].mxu0
      %v1769 = vadd.f32 0.0, %v1768
      %v1770 = vpop.f32.mrb[0].mxu0
      %1771 = vmatprep.mubr.f32.mxu0 0.0
      %1772 = vmatmul.mubr.f32.gmra.mrb[0].mxu0 %v1557
      %v1773 = vpop.f32.mrb[0].mxu0
      %v1774 = vadd.f32 0.0, %v1773
      %v1775 = vpop.f32.mrb[0].mxu0
      %1776 = vmatprep.mubr.f32.mxu0 0.0
      %1777 = vmatmul.mubr.f32.gmra.mrb[0].mxu0 %v1560
      %v1778 = vpop.f32.mrb[0].mxu0
      %v1779 = vadd.f32 0.0, %v1778
      %v1780 = vpop.f32.mrb[0].mxu0
      %1781 = vmatprep.mubr.f32.mxu0 0.0
      %1782 = vmatmul.mubr.f32.gmra.mrb[0].mxu0 %v1563
      %v1783 = vpop.f32.mrb[0].mxu0
      %v1784 = vadd.f32 0.0, %v1783
      %v1785 = vpop.f32.mrb[0].mxu0
      %1786 = vmatprep.mubr.f32.mxu0 0.0
      %1787 = vmatmul.mubr.f32.gmra.mrb[0].mxu0 %v1566
      %v1788 = vpop.f32.mrb[0].mxu0
      %v1789 = vadd.f32 0.0, %v1788
      %v1790 = vpop.f32.mrb[0].mxu0
      %1791 = vmatprep.mubr.f32.mxu0 0.0
      %1792 = vmatmul.mubr.f32.gmra.mrb[0].mxu0 %v1569
      %v1793 = vpop.f32.mrb[0].mxu0
      %v1794 = vadd.f32 0.0, %v1793
      %v1795 = vpop.f32.mrb[0].mxu0
      %1796 = vmatprep.mubr.f32.mxu0 0.0
      %1797 = vmatmul.mubr.f32.gmra.mrb[0].mxu0 %v1572
      %v1798 = vpop.f32.mrb[0].mxu0
      %v1799 = vadd.f32 0.0, %v1798
      %v1800 = vpop.f32.mrb[0].mxu0
      %1801 = vdwg.mxu0
      %v1802 = vadd.f32 %v1414, %v1644
      %v1803 = vadd.f32 %v1415, %v1649
      %v1804 = vadd.f32 %v1416, %v1654
      %v1805 = vadd.f32 %v1417, %v1659
      %v1806 = vadd.f32 %v1418, %v1664
      %v1807 = vadd.f32 %v1419, %v1669
      %v1808 = vadd.f32 %v1420, %v1674
      %v1809 = vadd.f32 %v1421, %v1679
      %v1810 = vadd.f32 %v1422, %v1684
      %v1811 = vadd.f32 %v1423, %v1689
      %v1812 = vadd.f32 %v1424, %v1694
      %v1813 = vadd.f32 %v1425, %v1699
      %v1814 = vadd.f32 %v1426, %v1704
      %v1815 = vadd.f32 %v1427, %v1709
      %v1816 = vadd.f32 %v1428, %v1714
      %v1817 = vadd.f32 %v1429, %v1719
      %v1818 = vadd.f32 %v1430, %v1724
      %v1819 = vadd.f32 %v1431, %v1729
      %v1820 = vadd.f32 %v1432, %v1734
      %v1821 = vadd.f32 %v1433, %v1739
      %v1822 = vadd.f32 %v1434, %v1744
      %v1823 = vadd.f32 %v1435, %v1749
      %v1824 = vadd.f32 %v1436, %v1754
      %v1825 = vadd.f32 %v1437, %v1759
      %v1826 = vadd.f32 %v1438, %v1764
      %v1827 = vadd.f32 %v1439, %v1769
      %v1828 = vadd.f32 %v1440, %v1774
      %v1829 = vadd.f32 %v1441, %v1779
      %v1830 = vadd.f32 %v1442, %v1784
      %v1831 = vadd.f32 %v1443, %v1789
      %v1832 = vadd.f32 %v1444, %v1794
      %v1833 = vadd.f32 %v1445, %v1799
      %v1834 = vld [vmem:[%s303 + $0x1] sm:$0xff]
      %v1835 = vld [vmem:[%s303 + $0x9] sm:$0xff]
      %v1836 = vld [vmem:[%s303 + $0x19] sm:$0xff]
      %v1837 = vld [vmem:[%s303 + $0x21] sm:$0xff]
      %v1838 = vld [vmem:[%s303 + $0x31] sm:$0xff]
      %v1839 = vld [vmem:[%s303 + $0x39] sm:$0xff]
      %v1840 = vld [vmem:[%s303 + $0x49] sm:$0xff]
      %v1841 = vld [vmem:[%s303 + $0x51] sm:$0xff]
      %v1842 = vld [vmem:[%s303 + $0x61] sm:$0xff]
      %v1843 = vld [vmem:[%s303 + $0x69] sm:$0xff]
      %v1844 = vld [vmem:[%s303 + $0x79] sm:$0xff]
      %v1845 = vld [vmem:[%s303 + $0x81] sm:$0xff]
      %v1846 = vld [vmem:[%s303 + $0x91] sm:$0xff]
      %v1847 = vld [vmem:[%s303 + $0x99] sm:$0xff]
      %v1848 = vld [vmem:[%s303 + $0xa9] sm:$0xff]
      %v1849 = vld [vmem:[%s303 + $0xb1] sm:$0xff]
      %v1850 = vld [vmem:[%s303 + $0xc1] sm:$0xff]
      %v1851 = vld [vmem:[%s303 + $0xc9] sm:$0xff]
      %v1852 = vld [vmem:[%s303 + $0xd9] sm:$0xff]
      %v1853 = vld [vmem:[%s303 + $0xe1] sm:$0xff]
      %v1854 = vld [vmem:[%s303 + $0xf1] sm:$0xff]
      %v1855 = vld [vmem:[%s303 + $0xf9] sm:$0xff]
      %v1856 = vld [vmem:[%s303 + $0x109] sm:$0xff]
      %v1857 = vld [vmem:[%s303 + $0x111] sm:$0xff]
      %v1858 = vld [vmem:[%s303 + $0x121] sm:$0xff]
      %v1859 = vld [vmem:[%s303 + $0x129] sm:$0xff]
      %v1860 = vld [vmem:[%s303 + $0x139] sm:$0xff]
      %v1861 = vld [vmem:[%s303 + $0x141] sm:$0xff]
      %v1862 = vld [vmem:[%s303 + $0x151] sm:$0xff]
      %v1863 = vld [vmem:[%s303 + $0x159] sm:$0xff]
      %v1864 = vld [vmem:[%s303 + $0x169] sm:$0xff]
      %v1865 = vld [vmem:[%s303 + $0x171] sm:$0xff]
      %v1867 = vsel %vm215, %v1834, 0
      %v1870 = vsel %vm215, %v1835, 0
      %v1873 = vsel %vm215, %v1836, 0
      %v1876 = vsel %vm215, %v1837, 0
      %v1879 = vsel %vm215, %v1838, 0
      %v1882 = vsel %vm215, %v1839, 0
      %v1885 = vsel %vm215, %v1840, 0
      %v1888 = vsel %vm215, %v1841, 0
      %v1891 = vsel %vm215, %v1842, 0
      %v1894 = vsel %vm215, %v1843, 0
      %v1897 = vsel %vm215, %v1844, 0
      %v1900 = vsel %vm215, %v1845, 0
      %v1903 = vsel %vm215, %v1846, 0
      %v1906 = vsel %vm215, %v1847, 0
      %v1909 = vsel %vm215, %v1848, 0
      %v1912 = vsel %vm215, %v1849, 0
      %v1915 = vsel %vm215, %v1850, 0
      %v1918 = vsel %vm215, %v1851, 0
      %v1921 = vsel %vm215, %v1852, 0
      %v1924 = vsel %vm215, %v1853, 0
      %v1927 = vsel %vm215, %v1854, 0
      %v1930 = vsel %vm215, %v1855, 0
      %v1933 = vsel %vm215, %v1856, 0
      %v1936 = vsel %vm215, %v1857, 0
      %v1939 = vsel %vm215, %v1858, 0
      %v1942 = vsel %vm215, %v1859, 0
      %v1945 = vsel %vm215, %v1860, 0
      %v1948 = vsel %vm215, %v1861, 0
      %v1951 = vsel %vm215, %v1862, 0
      %v1954 = vsel %vm215, %v1863, 0
      %v1957 = vsel %vm215, %v1864, 0
      %v1960 = vsel %vm215, %v1865, 0
      %v1963 = vsel %vm505, %v340, 0
      %1965 = vmatprep.subr.mxu0 0.0
      %1966 = vmatpush1.msra.mxu0 %v1963
      %1967 = vmatprep.subr.mxu0 0.0
      %1968 = vmatpush1.msra.mxu0 0.0
      %1969 = vmatprep.subr.mxu0 0.0
      %1970 = vmatpush1.msra.mxu0 0.0
      %1971 = vmatprep.subr.mxu0 0.0
      %1972 = vmatpush1.msra.mxu0 0.0
      %1973 = vmatprep.subr.mxu0 0.0
      %1974 = vmatpush1.msra.mxu0 0.0
      %1975 = vmatprep.subr.mxu0 0.0
      %1976 = vmatpush1.msra.mxu0 0.0
      %1977 = vmatprep.subr.mxu0 0.0
      %1978 = vmatpush1.msra.mxu0 0.0
      %1979 = vmatprep.subr.mxu0 0.0
      %1980 = vmatpush1.msra.mxu0 0.0
      %1981 = vmatprep.subr.mxu0 0.0
      %1982 = vmatpush1.msra.mxu0 0.0
      %1983 = vmatprep.subr.mxu0 0.0
      %1984 = vmatpush1.msra.mxu0 0.0
      %1985 = vmatprep.subr.mxu0 0.0
      %1986 = vmatpush1.msra.mxu0 0.0
      %1987 = vmatprep.subr.mxu0 0.0
      %1988 = vmatpush1.msra.mxu0 0.0
      %1989 = vmatprep.subr.mxu0 0.0
      %1990 = vmatpush1.msra.mxu0 0.0
      %1991 = vmatprep.subr.mxu0 0.0
      %1992 = vmatpush1.msra.mxu0 0.0
      %1993 = vmatprep.subr.mxu0 0.0
      %1994 = vmatpush1.msra.mxu0 0.0
      %1995 = vmatprep.subr.mxu0 0.0
      %1996 = vmatpush1.msra.mxu0 0.0
      %1997 = vmatprep.subr.mxu0 0.0
      %1998 = vmatpush1.msra.mxu0 0.0
      %1999 = vmatprep.subr.mxu0 0.0
      %2000 = vmatpush1.msra.mxu0 0.0
      %2001 = vmatprep.subr.mxu0 0.0
      %2002 = vmatpush1.msra.mxu0 0.0
      %2003 = vmatprep.subr.mxu0 0.0
      %2004 = vmatpush1.msra.mxu0 0.0
      %2005 = vmatprep.subr.mxu0 0.0
      %2006 = vmatpush1.msra.mxu0 0.0
      %2007 = vmatprep.subr.mxu0 0.0
      %2008 = vmatpush1.msra.mxu0 0.0
      %2009 = vmatprep.subr.mxu0 0.0
      %2010 = vmatpush1.msra.mxu0 0.0
      %2011 = vmatprep.subr.mxu0 0.0
      %2012 = vmatpush1.msra.mxu0 0.0
      %2013 = vmatprep.subr.mxu0 0.0
      %2014 = vmatpush1.msra.mxu0 0.0
      %2015 = vmatprep.subr.mxu0 0.0
      %2016 = vmatpush1.msra.mxu0 0.0
      %2017 = vmatprep.subr.mxu0 0.0
      %2018 = vmatpush1.msra.mxu0 0.0
      %2019 = vmatprep.subr.mxu0 0.0
      %2020 = vmatpush1.msra.mxu0 0.0
      %2021 = vmatprep.subr.mxu0 0.0
      %2022 = vmatpush1.msra.mxu0 0.0
      %2023 = vmatprep.subr.mxu0 0.0
      %2024 = vmatpush1.msra.mxu0 0.0
      %2025 = vmatprep.subr.mxu0 0.0
      %2026 = vmatpush1.msra.mxu0 0.0
      %2027 = vmatprep.subr.mxu0 0.0
      %2028 = vmatpush1.msra.mxu0 0.0
      %2029 = vmatprep.mubr.f32.mxu0 0.0
      %2030 = vmatmul.mubr.f32.gmra.mrb[0].mxu0 %v1867
      %v2031 = vpop.f32.mrb[0].mxu0
      %v2032 = vadd.f32 0.0, %v2031
      %v2033 = vpop.f32.mrb[0].mxu0
      %2034 = vmatprep.mubr.f32.mxu0 0.0
      %2035 = vmatmul.mubr.f32.gmra.mrb[0].mxu0 %v1870
      %v2036 = vpop.f32.mrb[0].mxu0
      %v2037 = vadd.f32 0.0, %v2036
      %v2038 = vpop.f32.mrb[0].mxu0
      %2039 = vmatprep.mubr.f32.mxu0 0.0
      %2040 = vmatmul.mubr.f32.gmra.mrb[0].mxu0 %v1873
      %v2041 = vpop.f32.mrb[0].mxu0
      %v2042 = vadd.f32 0.0, %v2041
      %v2043 = vpop.f32.mrb[0].mxu0
      %2044 = vmatprep.mubr.f32.mxu0 0.0
      %2045 = vmatmul.mubr.f32.gmra.mrb[0].mxu0 %v1876
      %v2046 = vpop.f32.mrb[0].mxu0
      %v2047 = vadd.f32 0.0, %v2046
      %v2048 = vpop.f32.mrb[0].mxu0
      %2049 = vmatprep.mubr.f32.mxu0 0.0
      %2050 = vmatmul.mubr.f32.gmra.mrb[0].mxu0 %v1879
      %v2051 = vpop.f32.mrb[0].mxu0
      %v2052 = vadd.f32 0.0, %v2051
      %v2053 = vpop.f32.mrb[0].mxu0
      %2054 = vmatprep.mubr.f32.mxu0 0.0
      %2055 = vmatmul.mubr.f32.gmra.mrb[0].mxu0 %v1882
      %v2056 = vpop.f32.mrb[0].mxu0
      %v2057 = vadd.f32 0.0, %v2056
      %v2058 = vpop.f32.mrb[0].mxu0
      %2059 = vmatprep.mubr.f32.mxu0 0.0
      %2060 = vmatmul.mubr.f32.gmra.mrb[0].mxu0 %v1885
      %v2061 = vpop.f32.mrb[0].mxu0
      %v2062 = vadd.f32 0.0, %v2061
      %v2063 = vpop.f32.mrb[0].mxu0
      %2064 = vmatprep.mubr.f32.mxu0 0.0
      %2065 = vmatmul.mubr.f32.gmra.mrb[0].mxu0 %v1888
      %v2066 = vpop.f32.mrb[0].mxu0
      %v2067 = vadd.f32 0.0, %v2066
      %v2068 = vpop.f32.mrb[0].mxu0
      %2069 = vmatprep.mubr.f32.mxu0 0.0
      %2070 = vmatmul.mubr.f32.gmra.mrb[0].mxu0 %v1891
      %v2071 = vpop.f32.mrb[0].mxu0
      %v2072 = vadd.f32 0.0, %v2071
      %v2073 = vpop.f32.mrb[0].mxu0
      %2074 = vmatprep.mubr.f32.mxu0 0.0
      %2075 = vmatmul.mubr.f32.gmra.mrb[0].mxu0 %v1894
      %v2076 = vpop.f32.mrb[0].mxu0
      %v2077 = vadd.f32 0.0, %v2076
      %v2078 = vpop.f32.mrb[0].mxu0
      %2079 = vmatprep.mubr.f32.mxu0 0.0
      %2080 = vmatmul.mubr.f32.gmra.mrb[0].mxu0 %v1897
      %v2081 = vpop.f32.mrb[0].mxu0
      %v2082 = vadd.f32 0.0, %v2081
      %v2083 = vpop.f32.mrb[0].mxu0
      %2084 = vmatprep.mubr.f32.mxu0 0.0
      %2085 = vmatmul.mubr.f32.gmra.mrb[0].mxu0 %v1900
      %v2086 = vpop.f32.mrb[0].mxu0
      %v2087 = vadd.f32 0.0, %v2086
      %v2088 = vpop.f32.mrb[0].mxu0
      %2089 = vmatprep.mubr.f32.mxu0 0.0
      %2090 = vmatmul.mubr.f32.gmra.mrb[0].mxu0 %v1903
      %v2091 = vpop.f32.mrb[0].mxu0
      %v2092 = vadd.f32 0.0, %v2091
      %v2093 = vpop.f32.mrb[0].mxu0
      %2094 = vmatprep.mubr.f32.mxu0 0.0
      %2095 = vmatmul.mubr.f32.gmra.mrb[0].mxu0 %v1906
      %v2096 = vpop.f32.mrb[0].mxu0
      %v2097 = vadd.f32 0.0, %v2096
      %v2098 = vpop.f32.mrb[0].mxu0
      %2099 = vmatprep.mubr.f32.mxu0 0.0
      %2100 = vmatmul.mubr.f32.gmra.mrb[0].mxu0 %v1909
      %v2101 = vpop.f32.mrb[0].mxu0
      %v2102 = vadd.f32 0.0, %v2101
      %v2103 = vpop.f32.mrb[0].mxu0
      %2104 = vmatprep.mubr.f32.mxu0 0.0
      %2105 = vmatmul.mubr.f32.gmra.mrb[0].mxu0 %v1912
      %v2106 = vpop.f32.mrb[0].mxu0
      %v2107 = vadd.f32 0.0, %v2106
      %v2108 = vpop.f32.mrb[0].mxu0
      %2109 = vmatprep.mubr.f32.mxu0 0.0
      %2110 = vmatmul.mubr.f32.gmra.mrb[0].mxu0 %v1915
      %v2111 = vpop.f32.mrb[0].mxu0
      %v2112 = vadd.f32 0.0, %v2111
      %v2113 = vpop.f32.mrb[0].mxu0
      %2114 = vmatprep.mubr.f32.mxu0 0.0
      %2115 = vmatmul.mubr.f32.gmra.mrb[0].mxu0 %v1918
      %v2116 = vpop.f32.mrb[0].mxu0
      %v2117 = vadd.f32 0.0, %v2116
      %v2118 = vpop.f32.mrb[0].mxu0
      %2119 = vmatprep.mubr.f32.mxu0 0.0
      %2120 = vmatmul.mubr.f32.gmra.mrb[0].mxu0 %v1921
      %v2121 = vpop.f32.mrb[0].mxu0
      %v2122 = vadd.f32 0.0, %v2121
      %v2123 = vpop.f32.mrb[0].mxu0
      %2124 = vmatprep.mubr.f32.mxu0 0.0
      %2125 = vmatmul.mubr.f32.gmra.mrb[0].mxu0 %v1924
      %v2126 = vpop.f32.mrb[0].mxu0
      %v2127 = vadd.f32 0.0, %v2126
      %v2128 = vpop.f32.mrb[0].mxu0
      %2129 = vmatprep.mubr.f32.mxu0 0.0
      %2130 = vmatmul.mubr.f32.gmra.mrb[0].mxu0 %v1927
      %v2131 = vpop.f32.mrb[0].mxu0
      %v2132 = vadd.f32 0.0, %v2131
      %v2133 = vpop.f32.mrb[0].mxu0
      %2134 = vmatprep.mubr.f32.mxu0 0.0
      %2135 = vmatmul.mubr.f32.gmra.mrb[0].mxu0 %v1930
      %v2136 = vpop.f32.mrb[0].mxu0
      %v2137 = vadd.f32 0.0, %v2136
      %v2138 = vpop.f32.mrb[0].mxu0
      %2139 = vmatprep.mubr.f32.mxu0 0.0
      %2140 = vmatmul.mubr.f32.gmra.mrb[0].mxu0 %v1933
      %v2141 = vpop.f32.mrb[0].mxu0
      %v2142 = vadd.f32 0.0, %v2141
      %v2143 = vpop.f32.mrb[0].mxu0
      %2144 = vmatprep.mubr.f32.mxu0 0.0
      %2145 = vmatmul.mubr.f32.gmra.mrb[0].mxu0 %v1936
      %v2146 = vpop.f32.mrb[0].mxu0
      %v2147 = vadd.f32 0.0, %v2146
      %v2148 = vpop.f32.mrb[0].mxu0
      %2149 = vmatprep.mubr.f32.mxu0 0.0
      %2150 = vmatmul.mubr.f32.gmra.mrb[0].mxu0 %v1939
      %v2151 = vpop.f32.mrb[0].mxu0
      %v2152 = vadd.f32 0.0, %v2151
      %v2153 = vpop.f32.mrb[0].mxu0
      %2154 = vmatprep.mubr.f32.mxu0 0.0
      %2155 = vmatmul.mubr.f32.gmra.mrb[0].mxu0 %v1942
      %v2156 = vpop.f32.mrb[0].mxu0
      %v2157 = vadd.f32 0.0, %v2156
      %v2158 = vpop.f32.mrb[0].mxu0
      %2159 = vmatprep.mubr.f32.mxu0 0.0
      %2160 = vmatmul.mubr.f32.gmra.mrb[0].mxu0 %v1945
      %v2161 = vpop.f32.mrb[0].mxu0
      %v2162 = vadd.f32 0.0, %v2161
      %v2163 = vpop.f32.mrb[0].mxu0
      %2164 = vmatprep.mubr.f32.mxu0 0.0
      %2165 = vmatmul.mubr.f32.gmra.mrb[0].mxu0 %v1948
      %v2166 = vpop.f32.mrb[0].mxu0
      %v2167 = vadd.f32 0.0, %v2166
      %v2168 = vpop.f32.mrb[0].mxu0
      %2169 = vmatprep.mubr.f32.mxu0 0.0
      %2170 = vmatmul.mubr.f32.gmra.mrb[0].mxu0 %v1951
      %v2171 = vpop.f32.mrb[0].mxu0
      %v2172 = vadd.f32 0.0, %v2171
      %v2173 = vpop.f32.mrb[0].mxu0
      %2174 = vmatprep.mubr.f32.mxu0 0.0
      %2175 = vmatmul.mubr.f32.gmra.mrb[0].mxu0 %v1954
      %v2176 = vpop.f32.mrb[0].mxu0
      %v2177 = vadd.f32 0.0, %v2176
      %v2178 = vpop.f32.mrb[0].mxu0
      %2179 = vmatprep.mubr.f32.mxu0 0.0
      %2180 = vmatmul.mubr.f32.gmra.mrb[0].mxu0 %v1957
      %v2181 = vpop.f32.mrb[0].mxu0
      %v2182 = vadd.f32 0.0, %v2181
      %v2183 = vpop.f32.mrb[0].mxu0
      %2184 = vmatprep.mubr.f32.mxu0 0.0
      %2185 = vmatmul.mubr.f32.gmra.mrb[0].mxu0 %v1960
      %v2186 = vpop.f32.mrb[0].mxu0
      %v2187 = vadd.f32 0.0, %v2186
      %v2188 = vpop.f32.mrb[0].mxu0
      %2189 = vdwg.mxu0
      %v2190 = vadd.f32 %v1802, %v2032
      %v2191 = vadd.f32 %v1803, %v2037
      %v2192 = vadd.f32 %v1804, %v2042
      %v2193 = vadd.f32 %v1805, %v2047
      %v2194 = vadd.f32 %v1806, %v2052
      %v2195 = vadd.f32 %v1807, %v2057
      %v2196 = vadd.f32 %v1808, %v2062
      %v2197 = vadd.f32 %v1809, %v2067
      %v2198 = vadd.f32 %v1810, %v2072
      %v2199 = vadd.f32 %v1811, %v2077
      %v2200 = vadd.f32 %v1812, %v2082
      %v2201 = vadd.f32 %v1813, %v2087
      %v2202 = vadd.f32 %v1814, %v2092
      %v2203 = vadd.f32 %v1815, %v2097
      %v2204 = vadd.f32 %v1816, %v2102
      %v2205 = vadd.f32 %v1817, %v2107
      %v2206 = vadd.f32 %v1818, %v2112
      %v2207 = vadd.f32 %v1819, %v2117
      %v2208 = vadd.f32 %v1820, %v2122
      %v2209 = vadd.f32 %v1821, %v2127
      %v2210 = vadd.f32 %v1822, %v2132
      %v2211 = vadd.f32 %v1823, %v2137
      %v2212 = vadd.f32 %v1824, %v2142
      %v2213 = vadd.f32 %v1825, %v2147
      %v2214 = vadd.f32 %v1826, %v2152
      %v2215 = vadd.f32 %v1827, %v2157
      %v2216 = vadd.f32 %v1828, %v2162
      %v2217 = vadd.f32 %v1829, %v2167
      %v2218 = vadd.f32 %v1830, %v2172
      %v2219 = vadd.f32 %v1831, %v2177
      %v2220 = vadd.f32 %v1832, %v2182
      %v2221 = vadd.f32 %v1833, %v2187
      %v2222 = vld [vmem:[%s303 + $0x2] sm:$0xff]
      %v2223 = vld [vmem:[%s303 + $0xa] sm:$0xff]
      %v2224 = vld [vmem:[%s303 + $0x1a] sm:$0xff]
      %v2225 = vld [vmem:[%s303 + $0x22] sm:$0xff]
      %v2226 = vld [vmem:[%s303 + $0x32] sm:$0xff]
      %v2227 = vld [vmem:[%s303 + $0x3a] sm:$0xff]
      %v2228 = vld [vmem:[%s303 + $0x4a] sm:$0xff]
      %v2229 = vld [vmem:[%s303 + $0x52] sm:$0xff]
      %v2230 = vld [vmem:[%s303 + $0x62] sm:$0xff]
      %v2231 = vld [vmem:[%s303 + $0x6a] sm:$0xff]
      %v2232 = vld [vmem:[%s303 + $0x7a] sm:$0xff]
      %v2233 = vld [vmem:[%s303 + $0x82] sm:$0xff]
      %v2234 = vld [vmem:[%s303 + $0x92] sm:$0xff]
      %v2235 = vld [vmem:[%s303 + $0x9a] sm:$0xff]
      %v2236 = vld [vmem:[%s303 + $0xaa] sm:$0xff]
      %v2237 = vld [vmem:[%s303 + $0xb2] sm:$0xff]
      %v2238 = vld [vmem:[%s303 + $0xc2] sm:$0xff]
      %v2239 = vld [vmem:[%s303 + $0xca] sm:$0xff]
      %v2240 = vld [vmem:[%s303 + $0xda] sm:$0xff]
      %v2241 = vld [vmem:[%s303 + $0xe2] sm:$0xff]
      %v2242 = vld [vmem:[%s303 + $0xf2] sm:$0xff]
      %v2243 = vld [vmem:[%s303 + $0xfa] sm:$0xff]
      %v2244 = vld [vmem:[%s303 + $0x10a] sm:$0xff]
      %v2245 = vld [vmem:[%s303 + $0x112] sm:$0xff]
      %v2246 = vld [vmem:[%s303 + $0x122] sm:$0xff]
      %v2247 = vld [vmem:[%s303 + $0x12a] sm:$0xff]
      %v2248 = vld [vmem:[%s303 + $0x13a] sm:$0xff]
      %v2249 = vld [vmem:[%s303 + $0x142] sm:$0xff]
      %v2250 = vld [vmem:[%s303 + $0x152] sm:$0xff]
      %v2251 = vld [vmem:[%s303 + $0x15a] sm:$0xff]
      %v2252 = vld [vmem:[%s303 + $0x16a] sm:$0xff]
      %v2253 = vld [vmem:[%s303 + $0x172] sm:$0xff]
      %v2255 = vsel %vm215, %v2222, 0
      %v2258 = vsel %vm215, %v2223, 0
      %v2261 = vsel %vm215, %v2224, 0
      %v2264 = vsel %vm215, %v2225, 0
      %v2267 = vsel %vm215, %v2226, 0
      %v2270 = vsel %vm215, %v2227, 0
      %v2273 = vsel %vm215, %v2228, 0
      %v2276 = vsel %vm215, %v2229, 0
      %v2279 = vsel %vm215, %v2230, 0
      %v2282 = vsel %vm215, %v2231, 0
      %v2285 = vsel %vm215, %v2232, 0
      %v2288 = vsel %vm215, %v2233, 0
      %v2291 = vsel %vm215, %v2234, 0
      %v2294 = vsel %vm215, %v2235, 0
      %v2297 = vsel %vm215, %v2236, 0
      %v2300 = vsel %vm215, %v2237, 0
      %v2303 = vsel %vm215, %v2238, 0
      %v2306 = vsel %vm215, %v2239, 0
      %v2309 = vsel %vm215, %v2240, 0
      %v2312 = vsel %vm215, %v2241, 0
      %v2315 = vsel %vm215, %v2242, 0
      %v2318 = vsel %vm215, %v2243, 0
      %v2321 = vsel %vm215, %v2244, 0
      %v2324 = vsel %vm215, %v2245, 0
      %v2327 = vsel %vm215, %v2246, 0
      %v2330 = vsel %vm215, %v2247, 0
      %v2333 = vsel %vm215, %v2248, 0
      %v2336 = vsel %vm215, %v2249, 0
      %v2339 = vsel %vm215, %v2250, 0
      %v2342 = vsel %vm215, %v2251, 0
      %v2345 = vsel %vm215, %v2252, 0
      %v2348 = vsel %vm215, %v2253, 0
      %v2351 = vsel %vm505, %v341, 0
      %2353 = vmatprep.subr.mxu0 0.0
      %2354 = vmatpush1.msra.mxu0 %v2351
      %2355 = vmatprep.subr.mxu0 0.0
      %2356 = vmatpush1.msra.mxu0 0.0
      %2357 = vmatprep.subr.mxu0 0.0
      %2358 = vmatpush1.msra.mxu0 0.0
      %2359 = vmatprep.subr.mxu0 0.0
      %2360 = vmatpush1.msra.mxu0 0.0
      %2361 = vmatprep.subr.mxu0 0.0
      %2362 = vmatpush1.msra.mxu0 0.0
      %2363 = vmatprep.subr.mxu0 0.0
      %2364 = vmatpush1.msra.mxu0 0.0
      %2365 = vmatprep.subr.mxu0 0.0
      %2366 = vmatpush1.msra.mxu0 0.0
      %2367 = vmatprep.subr.mxu0 0.0
      %2368 = vmatpush1.msra.mxu0 0.0
      %2369 = vmatprep.subr.mxu0 0.0
      %2370 = vmatpush1.msra.mxu0 0.0
      %2371 = vmatprep.subr.mxu0 0.0
      %2372 = vmatpush1.msra.mxu0 0.0
      %2373 = vmatprep.subr.mxu0 0.0
      %2374 = vmatpush1.msra.mxu0 0.0
      %2375 = vmatprep.subr.mxu0 0.0
      %2376 = vmatpush1.msra.mxu0 0.0
      %2377 = vmatprep.subr.mxu0 0.0
      %2378 = vmatpush1.msra.mxu0 0.0
      %2379 = vmatprep.subr.mxu0 0.0
      %2380 = vmatpush1.msra.mxu0 0.0
      %2381 = vmatprep.subr.mxu0 0.0
      %2382 = vmatpush1.msra.mxu0 0.0
      %2383 = vmatprep.subr.mxu0 0.0
      %2384 = vmatpush1.msra.mxu0 0.0
      %2385 = vmatprep.subr.mxu0 0.0
      %2386 = vmatpush1.msra.mxu0 0.0
      %2387 = vmatprep.subr.mxu0 0.0
      %2388 = vmatpush1.msra.mxu0 0.0
      %2389 = vmatprep.subr.mxu0 0.0
      %2390 = vmatpush1.msra.mxu0 0.0
      %2391 = vmatprep.subr.mxu0 0.0
      %2392 = vmatpush1.msra.mxu0 0.0
      %2393 = vmatprep.subr.mxu0 0.0
      %2394 = vmatpush1.msra.mxu0 0.0
      %2395 = vmatprep.subr.mxu0 0.0
      %2396 = vmatpush1.msra.mxu0 0.0
      %2397 = vmatprep.subr.mxu0 0.0
      %2398 = vmatpush1.msra.mxu0 0.0
      %2399 = vmatprep.subr.mxu0 0.0
      %2400 = vmatpush1.msra.mxu0 0.0
      %2401 = vmatprep.subr.mxu0 0.0
      %2402 = vmatpush1.msra.mxu0 0.0
      %2403 = vmatprep.subr.mxu0 0.0
      %2404 = vmatpush1.msra.mxu0 0.0
      %2405 = vmatprep.subr.mxu0 0.0
      %2406 = vmatpush1.msra.mxu0 0.0
      %2407 = vmatprep.subr.mxu0 0.0
      %2408 = vmatpush1.msra.mxu0 0.0
      %2409 = vmatprep.subr.mxu0 0.0
      %2410 = vmatpush1.msra.mxu0 0.0
      %2411 = vmatprep.subr.mxu0 0.0
      %2412 = vmatpush1.msra.mxu0 0.0
      %2413 = vmatprep.subr.mxu0 0.0
      %2414 = vmatpush1.msra.mxu0 0.0
      %2415 = vmatprep.subr.mxu0 0.0
      %2416 = vmatpush1.msra.mxu0 0.0
      %2417 = vmatprep.mubr.f32.mxu0 0.0
      %2418 = vmatmul.mubr.f32.gmra.mrb[0].mxu0 %v2255
      %v2419 = vpop.f32.mrb[0].mxu0
      %v2420 = vadd.f32 0.0, %v2419
      %v2421 = vpop.f32.mrb[0].mxu0
      %2422 = vmatprep.mubr.f32.mxu0 0.0
      %2423 = vmatmul.mubr.f32.gmra.mrb[0].mxu0 %v2258
      %v2424 = vpop.f32.mrb[0].mxu0
      %v2425 = vadd.f32 0.0, %v2424
      %v2426 = vpop.f32.mrb[0].mxu0
      %2427 = vmatprep.mubr.f32.mxu0 0.0
      %2428 = vmatmul.mubr.f32.gmra.mrb[0].mxu0 %v2261
      %v2429 = vpop.f32.mrb[0].mxu0
      %v2430 = vadd.f32 0.0, %v2429
      %v2431 = vpop.f32.mrb[0].mxu0
      %2432 = vmatprep.mubr.f32.mxu0 0.0
      %2433 = vmatmul.mubr.f32.gmra.mrb[0].mxu0 %v2264
      %v2434 = vpop.f32.mrb[0].mxu0
      %v2435 = vadd.f32 0.0, %v2434
      %v2436 = vpop.f32.mrb[0].mxu0
      %2437 = vmatprep.mubr.f32.mxu0 0.0
      %2438 = vmatmul.mubr.f32.gmra.mrb[0].mxu0 %v2267
      %v2439 = vpop.f32.mrb[0].mxu0
      %v2440 = vadd.f32 0.0, %v2439
      %v2441 = vpop.f32.mrb[0].mxu0
      %2442 = vmatprep.mubr.f32.mxu0 0.0
      %2443 = vmatmul.mubr.f32.gmra.mrb[0].mxu0 %v2270
      %v2444 = vpop.f32.mrb[0].mxu0
      %v2445 = vadd.f32 0.0, %v2444
      %v2446 = vpop.f32.mrb[0].mxu0
      %2447 = vmatprep.mubr.f32.mxu0 0.0
      %2448 = vmatmul.mubr.f32.gmra.mrb[0].mxu0 %v2273
      %v2449 = vpop.f32.mrb[0].mxu0
      %v2450 = vadd.f32 0.0, %v2449
      %v2451 = vpop.f32.mrb[0].mxu0
      %2452 = vmatprep.mubr.f32.mxu0 0.0
      %2453 = vmatmul.mubr.f32.gmra.mrb[0].mxu0 %v2276
      %v2454 = vpop.f32.mrb[0].mxu0
      %v2455 = vadd.f32 0.0, %v2454
      %v2456 = vpop.f32.mrb[0].mxu0
      %2457 = vmatprep.mubr.f32.mxu0 0.0
      %2458 = vmatmul.mubr.f32.gmra.mrb[0].mxu0 %v2279
      %v2459 = vpop.f32.mrb[0].mxu0
      %v2460 = vadd.f32 0.0, %v2459
      %v2461 = vpop.f32.mrb[0].mxu0
      %2462 = vmatprep.mubr.f32.mxu0 0.0
      %2463 = vmatmul.mubr.f32.gmra.mrb[0].mxu0 %v2282
      %v2464 = vpop.f32.mrb[0].mxu0
      %v2465 = vadd.f32 0.0, %v2464
      %v2466 = vpop.f32.mrb[0].mxu0
      %2467 = vmatprep.mubr.f32.mxu0 0.0
      %2468 = vmatmul.mubr.f32.gmra.mrb[0].mxu0 %v2285
      %v2469 = vpop.f32.mrb[0].mxu0
      %v2470 = vadd.f32 0.0, %v2469
      %v2471 = vpop.f32.mrb[0].mxu0
      %2472 = vmatprep.mubr.f32.mxu0 0.0
      %2473 = vmatmul.mubr.f32.gmra.mrb[0].mxu0 %v2288
      %v2474 = vpop.f32.mrb[0].mxu0
      %v2475 = vadd.f32 0.0, %v2474
      %v2476 = vpop.f32.mrb[0].mxu0
      %2477 = vmatprep.mubr.f32.mxu0 0.0
      %2478 = vmatmul.mubr.f32.gmra.mrb[0].mxu0 %v2291
      %v2479 = vpop.f32.mrb[0].mxu0
      %v2480 = vadd.f32 0.0, %v2479
      %v2481 = vpop.f32.mrb[0].mxu0
      %2482 = vmatprep.mubr.f32.mxu0 0.0
      %2483 = vmatmul.mubr.f32.gmra.mrb[0].mxu0 %v2294
      %v2484 = vpop.f32.mrb[0].mxu0
      %v2485 = vadd.f32 0.0, %v2484
      %v2486 = vpop.f32.mrb[0].mxu0
      %2487 = vmatprep.mubr.f32.mxu0 0.0
      %2488 = vmatmul.mubr.f32.gmra.mrb[0].mxu0 %v2297
      %v2489 = vpop.f32.mrb[0].mxu0
      %v2490 = vadd.f32 0.0, %v2489
      %v2491 = vpop.f32.mrb[0].mxu0
      %2492 = vmatprep.mubr.f32.mxu0 0.0
      %2493 = vmatmul.mubr.f32.gmra.mrb[0].mxu0 %v2300
      %v2494 = vpop.f32.mrb[0].mxu0
      %v2495 = vadd.f32 0.0, %v2494
      %v2496 = vpop.f32.mrb[0].mxu0
      %2497 = vmatprep.mubr.f32.mxu0 0.0
      %2498 = vmatmul.mubr.f32.gmra.mrb[0].mxu0 %v2303
      %v2499 = vpop.f32.mrb[0].mxu0
      %v2500 = vadd.f32 0.0, %v2499
      %v2501 = vpop.f32.mrb[0].mxu0
      %2502 = vmatprep.mubr.f32.mxu0 0.0
      %2503 = vmatmul.mubr.f32.gmra.mrb[0].mxu0 %v2306
      %v2504 = vpop.f32.mrb[0].mxu0
      %v2505 = vadd.f32 0.0, %v2504
      %v2506 = vpop.f32.mrb[0].mxu0
      %2507 = vmatprep.mubr.f32.mxu0 0.0
      %2508 = vmatmul.mubr.f32.gmra.mrb[0].mxu0 %v2309
      %v2509 = vpop.f32.mrb[0].mxu0
      %v2510 = vadd.f32 0.0, %v2509
      %v2511 = vpop.f32.mrb[0].mxu0
      %2512 = vmatprep.mubr.f32.mxu0 0.0
      %2513 = vmatmul.mubr.f32.gmra.mrb[0].mxu0 %v2312
      %v2514 = vpop.f32.mrb[0].mxu0
      %v2515 = vadd.f32 0.0, %v2514
      %v2516 = vpop.f32.mrb[0].mxu0
      %2517 = vmatprep.mubr.f32.mxu0 0.0
      %2518 = vmatmul.mubr.f32.gmra.mrb[0].mxu0 %v2315
      %v2519 = vpop.f32.mrb[0].mxu0
      %v2520 = vadd.f32 0.0, %v2519
      %v2521 = vpop.f32.mrb[0].mxu0
      %2522 = vmatprep.mubr.f32.mxu0 0.0
      %2523 = vmatmul.mubr.f32.gmra.mrb[0].mxu0 %v2318
      %v2524 = vpop.f32.mrb[0].mxu0
      %v2525 = vadd.f32 0.0, %v2524
      %v2526 = vpop.f32.mrb[0].mxu0
      %2527 = vmatprep.mubr.f32.mxu0 0.0
      %2528 = vmatmul.mubr.f32.gmra.mrb[0].mxu0 %v2321
      %v2529 = vpop.f32.mrb[0].mxu0
      %v2530 = vadd.f32 0.0, %v2529
      %v2531 = vpop.f32.mrb[0].mxu0
      %2532 = vmatprep.mubr.f32.mxu0 0.0
      %2533 = vmatmul.mubr.f32.gmra.mrb[0].mxu0 %v2324
      %v2534 = vpop.f32.mrb[0].mxu0
      %v2535 = vadd.f32 0.0, %v2534
      %v2536 = vpop.f32.mrb[0].mxu0
      %2537 = vmatprep.mubr.f32.mxu0 0.0
      %2538 = vmatmul.mubr.f32.gmra.mrb[0].mxu0 %v2327
      %v2539 = vpop.f32.mrb[0].mxu0
      %v2540 = vadd.f32 0.0, %v2539
      %v2541 = vpop.f32.mrb[0].mxu0
      %2542 = vmatprep.mubr.f32.mxu0 0.0
      %2543 = vmatmul.mubr.f32.gmra.mrb[0].mxu0 %v2330
      %v2544 = vpop.f32.mrb[0].mxu0
      %v2545 = vadd.f32 0.0, %v2544
      %v2546 = vpop.f32.mrb[0].mxu0
      %2547 = vmatprep.mubr.f32.mxu0 0.0
      %2548 = vmatmul.mubr.f32.gmra.mrb[0].mxu0 %v2333
      %v2549 = vpop.f32.mrb[0].mxu0
      %v2550 = vadd.f32 0.0, %v2549
      %v2551 = vpop.f32.mrb[0].mxu0
      %2552 = vmatprep.mubr.f32.mxu0 0.0
      %2553 = vmatmul.mubr.f32.gmra.mrb[0].mxu0 %v2336
      %v2554 = vpop.f32.mrb[0].mxu0
      %v2555 = vadd.f32 0.0, %v2554
      %v2556 = vpop.f32.mrb[0].mxu0
      %2557 = vmatprep.mubr.f32.mxu0 0.0
      %2558 = vmatmul.mubr.f32.gmra.mrb[0].mxu0 %v2339
      %v2559 = vpop.f32.mrb[0].mxu0
      %v2560 = vadd.f32 0.0, %v2559
      %v2561 = vpop.f32.mrb[0].mxu0
      %2562 = vmatprep.mubr.f32.mxu0 0.0
      %2563 = vmatmul.mubr.f32.gmra.mrb[0].mxu0 %v2342
      %v2564 = vpop.f32.mrb[0].mxu0
      %v2565 = vadd.f32 0.0, %v2564
      %v2566 = vpop.f32.mrb[0].mxu0
      %2567 = vmatprep.mubr.f32.mxu0 0.0
      %2568 = vmatmul.mubr.f32.gmra.mrb[0].mxu0 %v2345
      %v2569 = vpop.f32.mrb[0].mxu0
      %v2570 = vadd.f32 0.0, %v2569
      %v2571 = vpop.f32.mrb[0].mxu0
      %2572 = vmatprep.mubr.f32.mxu0 0.0
      %2573 = vmatmul.mubr.f32.gmra.mrb[0].mxu0 %v2348
      %v2574 = vpop.f32.mrb[0].mxu0
      %v2575 = vadd.f32 0.0, %v2574
      %v2576 = vpop.f32.mrb[0].mxu0
      %2577 = vdwg.mxu0
      %v2578 = vadd.f32 %v2190, %v2420
      %v2579 = vadd.f32 %v2191, %v2425
      %v2580 = vadd.f32 %v2192, %v2430
      %v2581 = vadd.f32 %v2193, %v2435
      %v2582 = vadd.f32 %v2194, %v2440
      %v2583 = vadd.f32 %v2195, %v2445
      %v2584 = vadd.f32 %v2196, %v2450
      %v2585 = vadd.f32 %v2197, %v2455
      %v2586 = vadd.f32 %v2198, %v2460
      %v2587 = vadd.f32 %v2199, %v2465
      %v2588 = vadd.f32 %v2200, %v2470
      %v2589 = vadd.f32 %v2201, %v2475
      %v2590 = vadd.f32 %v2202, %v2480
      %v2591 = vadd.f32 %v2203, %v2485
      %v2592 = vadd.f32 %v2204, %v2490
      %v2593 = vadd.f32 %v2205, %v2495
      %v2594 = vadd.f32 %v2206, %v2500
      %v2595 = vadd.f32 %v2207, %v2505
      %v2596 = vadd.f32 %v2208, %v2510
      %v2597 = vadd.f32 %v2209, %v2515
      %v2598 = vadd.f32 %v2210, %v2520
      %v2599 = vadd.f32 %v2211, %v2525
      %v2600 = vadd.f32 %v2212, %v2530
      %v2601 = vadd.f32 %v2213, %v2535
      %v2602 = vadd.f32 %v2214, %v2540
      %v2603 = vadd.f32 %v2215, %v2545
      %v2604 = vadd.f32 %v2216, %v2550
      %v2605 = vadd.f32 %v2217, %v2555
      %v2606 = vadd.f32 %v2218, %v2560
      %v2607 = vadd.f32 %v2219, %v2565
      %v2608 = vadd.f32 %v2220, %v2570
      %v2609 = vadd.f32 %v2221, %v2575
      %s2610 = scalar_lea.vmem [#allocation2], 48
      %v2611 = vld [vmem:[%s2610] sm:$0xff]
      %v2612 = vld [vmem:[%s2610 + $0x8] sm:$0xff]
      %v2613 = vld [vmem:[%s2610 + $0x18] sm:$0xff]
      %v2614 = vld [vmem:[%s2610 + $0x20] sm:$0xff]
      %v2615 = vld [vmem:[%s2610 + $0x30] sm:$0xff]
      %v2616 = vld [vmem:[%s2610 + $0x38] sm:$0xff]
      %v2617 = vld [vmem:[%s2610 + $0x48] sm:$0xff]
      %v2618 = vld [vmem:[%s2610 + $0x50] sm:$0xff]
      %v2619 = vld [vmem:[%s2610 + $0x60] sm:$0xff]
      %v2620 = vld [vmem:[%s2610 + $0x68] sm:$0xff]
      %v2621 = vld [vmem:[%s2610 + $0x78] sm:$0xff]
      %v2622 = vld [vmem:[%s2610 + $0x80] sm:$0xff]
      %v2623 = vld [vmem:[%s2610 + $0x90] sm:$0xff]
      %v2624 = vld [vmem:[%s2610 + $0x98] sm:$0xff]
      %v2625 = vld [vmem:[%s2610 + $0xa8] sm:$0xff]
      %v2626 = vld [vmem:[%s2610 + $0xb0] sm:$0xff]
      %v2627 = vld [vmem:[%s2610 + $0xc0] sm:$0xff]
      %v2628 = vld [vmem:[%s2610 + $0xc8] sm:$0xff]
      %v2629 = vld [vmem:[%s2610 + $0xd8] sm:$0xff]
      %v2630 = vld [vmem:[%s2610 + $0xe0] sm:$0xff]
      %v2631 = vld [vmem:[%s2610 + $0xf0] sm:$0xff]
      %v2632 = vld [vmem:[%s2610 + $0xf8] sm:$0xff]
      %v2633 = vld [vmem:[%s2610 + $0x108] sm:$0xff]
      %v2634 = vld [vmem:[%s2610 + $0x110] sm:$0xff]
      %v2635 = vld [vmem:[%s2610 + $0x120] sm:$0xff]
      %v2636 = vld [vmem:[%s2610 + $0x128] sm:$0xff]
      %v2637 = vld [vmem:[%s2610 + $0x138] sm:$0xff]
      %v2638 = vld [vmem:[%s2610 + $0x140] sm:$0xff]
      %v2639 = vld [vmem:[%s2610 + $0x150] sm:$0xff]
      %v2640 = vld [vmem:[%s2610 + $0x158] sm:$0xff]
      %v2641 = vld [vmem:[%s2610 + $0x168] sm:$0xff]
      %v2642 = vld [vmem:[%s2610 + $0x170] sm:$0xff]
      %v2644 = vsel %vm215, %v2611, 0
      %v2647 = vsel %vm215, %v2612, 0
      %v2650 = vsel %vm215, %v2613, 0
      %v2653 = vsel %vm215, %v2614, 0
      %v2656 = vsel %vm215, %v2615, 0
      %v2659 = vsel %vm215, %v2616, 0
      %v2662 = vsel %vm215, %v2617, 0
      %v2665 = vsel %vm215, %v2618, 0
      %v2668 = vsel %vm215, %v2619, 0
      %v2671 = vsel %vm215, %v2620, 0
      %v2674 = vsel %vm215, %v2621, 0
      %v2677 = vsel %vm215, %v2622, 0
      %v2680 = vsel %vm215, %v2623, 0
      %v2683 = vsel %vm215, %v2624, 0
      %v2686 = vsel %vm215, %v2625, 0
      %v2689 = vsel %vm215, %v2626, 0
      %v2692 = vsel %vm215, %v2627, 0
      %v2695 = vsel %vm215, %v2628, 0
      %v2698 = vsel %vm215, %v2629, 0
      %v2701 = vsel %vm215, %v2630, 0
      %v2704 = vsel %vm215, %v2631, 0
      %v2707 = vsel %vm215, %v2632, 0
      %v2710 = vsel %vm215, %v2633, 0
      %v2713 = vsel %vm215, %v2634, 0
      %v2716 = vsel %vm215, %v2635, 0
      %v2719 = vsel %vm215, %v2636, 0
      %v2722 = vsel %vm215, %v2637, 0
      %v2725 = vsel %vm215, %v2638, 0
      %v2728 = vsel %vm215, %v2639, 0
      %v2731 = vsel %vm215, %v2640, 0
      %v2734 = vsel %vm215, %v2641, 0
      %v2737 = vsel %vm215, %v2642, 0
      %v2740 = vsel %vm505, %v342, 0
      %2742 = vmatprep.subr.mxu0 0.0
      %2743 = vmatpush1.msra.mxu0 %v2740
      %2744 = vmatprep.subr.mxu0 0.0
      %2745 = vmatpush1.msra.mxu0 0.0
      %2746 = vmatprep.subr.mxu0 0.0
      %2747 = vmatpush1.msra.mxu0 0.0
      %2748 = vmatprep.subr.mxu0 0.0
      %2749 = vmatpush1.msra.mxu0 0.0
      %2750 = vmatprep.subr.mxu0 0.0
      %2751 = vmatpush1.msra.mxu0 0.0
      %2752 = vmatprep.subr.mxu0 0.0
      %2753 = vmatpush1.msra.mxu0 0.0
      %2754 = vmatprep.subr.mxu0 0.0
      %2755 = vmatpush1.msra.mxu0 0.0
      %2756 = vmatprep.subr.mxu0 0.0
      %2757 = vmatpush1.msra.mxu0 0.0
      %2758 = vmatprep.subr.mxu0 0.0
      %2759 = vmatpush1.msra.mxu0 0.0
      %2760 = vmatprep.subr.mxu0 0.0
      %2761 = vmatpush1.msra.mxu0 0.0
      %2762 = vmatprep.subr.mxu0 0.0
      %2763 = vmatpush1.msra.mxu0 0.0
      %2764 = vmatprep.subr.mxu0 0.0
      %2765 = vmatpush1.msra.mxu0 0.0
      %2766 = vmatprep.subr.mxu0 0.0
      %2767 = vmatpush1.msra.mxu0 0.0
      %2768 = vmatprep.subr.mxu0 0.0
      %2769 = vmatpush1.msra.mxu0 0.0
      %2770 = vmatprep.subr.mxu0 0.0
      %2771 = vmatpush1.msra.mxu0 0.0
      %2772 = vmatprep.subr.mxu0 0.0
      %2773 = vmatpush1.msra.mxu0 0.0
      %2774 = vmatprep.subr.mxu0 0.0
      %2775 = vmatpush1.msra.mxu0 0.0
      %2776 = vmatprep.subr.mxu0 0.0
      %2777 = vmatpush1.msra.mxu0 0.0
      %2778 = vmatprep.subr.mxu0 0.0
      %2779 = vmatpush1.msra.mxu0 0.0
      %2780 = vmatprep.subr.mxu0 0.0
      %2781 = vmatpush1.msra.mxu0 0.0
      %2782 = vmatprep.subr.mxu0 0.0
      %2783 = vmatpush1.msra.mxu0 0.0
      %2784 = vmatprep.subr.mxu0 0.0
      %2785 = vmatpush1.msra.mxu0 0.0
      %2786 = vmatprep.subr.mxu0 0.0
      %2787 = vmatpush1.msra.mxu0 0.0
      %2788 = vmatprep.subr.mxu0 0.0
      %2789 = vmatpush1.msra.mxu0 0.0
      %2790 = vmatprep.subr.mxu0 0.0
      %2791 = vmatpush1.msra.mxu0 0.0
      %2792 = vmatprep.subr.mxu0 0.0
      %2793 = vmatpush1.msra.mxu0 0.0
      %2794 = vmatprep.subr.mxu0 0.0
      %2795 = vmatpush1.msra.mxu0 0.0
      %2796 = vmatprep.subr.mxu0 0.0
      %2797 = vmatpush1.msra.mxu0 0.0
      %2798 = vmatprep.subr.mxu0 0.0
      %2799 = vmatpush1.msra.mxu0 0.0
      %2800 = vmatprep.subr.mxu0 0.0
      %2801 = vmatpush1.msra.mxu0 0.0
      %2802 = vmatprep.subr.mxu0 0.0
      %2803 = vmatpush1.msra.mxu0 0.0
      %2804 = vmatprep.subr.mxu0 0.0
      %2805 = vmatpush1.msra.mxu0 0.0
      %2806 = vmatprep.mubr.f32.mxu0 0.0
      %2807 = vmatmul.mubr.f32.gmra.mrb[0].mxu0 %v2644
      %v2808 = vpop.f32.mrb[0].mxu0
      %v2809 = vadd.f32 0.0, %v2808
      %v2810 = vpop.f32.mrb[0].mxu0
      %2811 = vmatprep.mubr.f32.mxu0 0.0
      %2812 = vmatmul.mubr.f32.gmra.mrb[0].mxu0 %v2647
      %v2813 = vpop.f32.mrb[0].mxu0
      %v2814 = vadd.f32 0.0, %v2813
      %v2815 = vpop.f32.mrb[0].mxu0
      %2816 = vmatprep.mubr.f32.mxu0 0.0
      %2817 = vmatmul.mubr.f32.gmra.mrb[0].mxu0 %v2650
      %v2818 = vpop.f32.mrb[0].mxu0
      %v2819 = vadd.f32 0.0, %v2818
      %v2820 = vpop.f32.mrb[0].mxu0
      %2821 = vmatprep.mubr.f32.mxu0 0.0
      %2822 = vmatmul.mubr.f32.gmra.mrb[0].mxu0 %v2653
      %v2823 = vpop.f32.mrb[0].mxu0
      %v2824 = vadd.f32 0.0, %v2823
      %v2825 = vpop.f32.mrb[0].mxu0
      %2826 = vmatprep.mubr.f32.mxu0 0.0
      %2827 = vmatmul.mubr.f32.gmra.mrb[0].mxu0 %v2656
      %v2828 = vpop.f32.mrb[0].mxu0
      %v2829 = vadd.f32 0.0, %v2828
      %v2830 = vpop.f32.mrb[0].mxu0
      %2831 = vmatprep.mubr.f32.mxu0 0.0
      %2832 = vmatmul.mubr.f32.gmra.mrb[0].mxu0 %v2659
      %v2833 = vpop.f32.mrb[0].mxu0
      %v2834 = vadd.f32 0.0, %v2833
      %v2835 = vpop.f32.mrb[0].mxu0
      %2836 = vmatprep.mubr.f32.mxu0 0.0
      %2837 = vmatmul.mubr.f32.gmra.mrb[0].mxu0 %v2662
      %v2838 = vpop.f32.mrb[0].mxu0
      %v2839 = vadd.f32 0.0, %v2838
      %v2840 = vpop.f32.mrb[0].mxu0
      %2841 = vmatprep.mubr.f32.mxu0 0.0
      %2842 = vmatmul.mubr.f32.gmra.mrb[0].mxu0 %v2665
      %v2843 = vpop.f32.mrb[0].mxu0
      %v2844 = vadd.f32 0.0, %v2843
      %v2845 = vpop.f32.mrb[0].mxu0
      %2846 = vmatprep.mubr.f32.mxu0 0.0
      %2847 = vmatmul.mubr.f32.gmra.mrb[0].mxu0 %v2668
      %v2848 = vpop.f32.mrb[0].mxu0
      %v2849 = vadd.f32 0.0, %v2848
      %v2850 = vpop.f32.mrb[0].mxu0
      %2851 = vmatprep.mubr.f32.mxu0 0.0
      %2852 = vmatmul.mubr.f32.gmra.mrb[0].mxu0 %v2671
      %v2853 = vpop.f32.mrb[0].mxu0
      %v2854 = vadd.f32 0.0, %v2853
      %v2855 = vpop.f32.mrb[0].mxu0
      %2856 = vmatprep.mubr.f32.mxu0 0.0
      %2857 = vmatmul.mubr.f32.gmra.mrb[0].mxu0 %v2674
      %v2858 = vpop.f32.mrb[0].mxu0
      %v2859 = vadd.f32 0.0, %v2858
      %v2860 = vpop.f32.mrb[0].mxu0
      %2861 = vmatprep.mubr.f32.mxu0 0.0
      %2862 = vmatmul.mubr.f32.gmra.mrb[0].mxu0 %v2677
      %v2863 = vpop.f32.mrb[0].mxu0
      %v2864 = vadd.f32 0.0, %v2863
      %v2865 = vpop.f32.mrb[0].mxu0
      %2866 = vmatprep.mubr.f32.mxu0 0.0
      %2867 = vmatmul.mubr.f32.gmra.mrb[0].mxu0 %v2680
      %v2868 = vpop.f32.mrb[0].mxu0
      %v2869 = vadd.f32 0.0, %v2868
      %v2870 = vpop.f32.mrb[0].mxu0
      %2871 = vmatprep.mubr.f32.mxu0 0.0
      %2872 = vmatmul.mubr.f32.gmra.mrb[0].mxu0 %v2683
      %v2873 = vpop.f32.mrb[0].mxu0
      %v2874 = vadd.f32 0.0, %v2873
      %v2875 = vpop.f32.mrb[0].mxu0
      %2876 = vmatprep.mubr.f32.mxu0 0.0
      %2877 = vmatmul.mubr.f32.gmra.mrb[0].mxu0 %v2686
      %v2878 = vpop.f32.mrb[0].mxu0
      %v2879 = vadd.f32 0.0, %v2878
      %v2880 = vpop.f32.mrb[0].mxu0
      %2881 = vmatprep.mubr.f32.mxu0 0.0
      %2882 = vmatmul.mubr.f32.gmra.mrb[0].mxu0 %v2689
      %v2883 = vpop.f32.mrb[0].mxu0
      %v2884 = vadd.f32 0.0, %v2883
      %v2885 = vpop.f32.mrb[0].mxu0
      %2886 = vmatprep.mubr.f32.mxu0 0.0
      %2887 = vmatmul.mubr.f32.gmra.mrb[0].mxu0 %v2692
      %v2888 = vpop.f32.mrb[0].mxu0
      %v2889 = vadd.f32 0.0, %v2888
      %v2890 = vpop.f32.mrb[0].mxu0
      %2891 = vmatprep.mubr.f32.mxu0 0.0
      %2892 = vmatmul.mubr.f32.gmra.mrb[0].mxu0 %v2695
      %v2893 = vpop.f32.mrb[0].mxu0
      %v2894 = vadd.f32 0.0, %v2893
      %v2895 = vpop.f32.mrb[0].mxu0
      %2896 = vmatprep.mubr.f32.mxu0 0.0
      %2897 = vmatmul.mubr.f32.gmra.mrb[0].mxu0 %v2698
      %v2898 = vpop.f32.mrb[0].mxu0
      %v2899 = vadd.f32 0.0, %v2898
      %v2900 = vpop.f32.mrb[0].mxu0
      %2901 = vmatprep.mubr.f32.mxu0 0.0
      %2902 = vmatmul.mubr.f32.gmra.mrb[0].mxu0 %v2701
      %v2903 = vpop.f32.mrb[0].mxu0
      %v2904 = vadd.f32 0.0, %v2903
      %v2905 = vpop.f32.mrb[0].mxu0
      %2906 = vmatprep.mubr.f32.mxu0 0.0
      %2907 = vmatmul.mubr.f32.gmra.mrb[0].mxu0 %v2704
      %v2908 = vpop.f32.mrb[0].mxu0
      %v2909 = vadd.f32 0.0, %v2908
      %v2910 = vpop.f32.mrb[0].mxu0
      %2911 = vmatprep.mubr.f32.mxu0 0.0
      %2912 = vmatmul.mubr.f32.gmra.mrb[0].mxu0 %v2707
      %v2913 = vpop.f32.mrb[0].mxu0
      %v2914 = vadd.f32 0.0, %v2913
      %v2915 = vpop.f32.mrb[0].mxu0
      %2916 = vmatprep.mubr.f32.mxu0 0.0
      %2917 = vmatmul.mubr.f32.gmra.mrb[0].mxu0 %v2710
      %v2918 = vpop.f32.mrb[0].mxu0
      %v2919 = vadd.f32 0.0, %v2918
      %v2920 = vpop.f32.mrb[0].mxu0
      %2921 = vmatprep.mubr.f32.mxu0 0.0
      %2922 = vmatmul.mubr.f32.gmra.mrb[0].mxu0 %v2713
      %v2923 = vpop.f32.mrb[0].mxu0
      %v2924 = vadd.f32 0.0, %v2923
      %v2925 = vpop.f32.mrb[0].mxu0
      %2926 = vmatprep.mubr.f32.mxu0 0.0
      %2927 = vmatmul.mubr.f32.gmra.mrb[0].mxu0 %v2716
      %v2928 = vpop.f32.mrb[0].mxu0
      %v2929 = vadd.f32 0.0, %v2928
      %v2930 = vpop.f32.mrb[0].mxu0
      %2931 = vmatprep.mubr.f32.mxu0 0.0
      %2932 = vmatmul.mubr.f32.gmra.mrb[0].mxu0 %v2719
      %v2933 = vpop.f32.mrb[0].mxu0
      %v2934 = vadd.f32 0.0, %v2933
      %v2935 = vpop.f32.mrb[0].mxu0
      %2936 = vmatprep.mubr.f32.mxu0 0.0
      %2937 = vmatmul.mubr.f32.gmra.mrb[0].mxu0 %v2722
      %v2938 = vpop.f32.mrb[0].mxu0
      %v2939 = vadd.f32 0.0, %v2938
      %v2940 = vpop.f32.mrb[0].mxu0
      %2941 = vmatprep.mubr.f32.mxu0 0.0
      %2942 = vmatmul.mubr.f32.gmra.mrb[0].mxu0 %v2725
      %v2943 = vpop.f32.mrb[0].mxu0
      %v2944 = vadd.f32 0.0, %v2943
      %v2945 = vpop.f32.mrb[0].mxu0
      %2946 = vmatprep.mubr.f32.mxu0 0.0
      %2947 = vmatmul.mubr.f32.gmra.mrb[0].mxu0 %v2728
      %v2948 = vpop.f32.mrb[0].mxu0
      %v2949 = vadd.f32 0.0, %v2948
      %v2950 = vpop.f32.mrb[0].mxu0
      %2951 = vmatprep.mubr.f32.mxu0 0.0
      %2952 = vmatmul.mubr.f32.gmra.mrb[0].mxu0 %v2731
      %v2953 = vpop.f32.mrb[0].mxu0
      %v2954 = vadd.f32 0.0, %v2953
      %v2955 = vpop.f32.mrb[0].mxu0
      %2956 = vmatprep.mubr.f32.mxu0 0.0
      %2957 = vmatmul.mubr.f32.gmra.mrb[0].mxu0 %v2734
      %v2958 = vpop.f32.mrb[0].mxu0
      %v2959 = vadd.f32 0.0, %v2958
      %v2960 = vpop.f32.mrb[0].mxu0
      %2961 = vmatprep.mubr.f32.mxu0 0.0
      %2962 = vmatmul.mubr.f32.gmra.mrb[0].mxu0 %v2737
      %v2963 = vpop.f32.mrb[0].mxu0
      %v2964 = vadd.f32 0.0, %v2963
      %v2965 = vpop.f32.mrb[0].mxu0
      %2966 = vdwg.mxu0
      %v2967 = vadd.f32 %v2578, %v2809
      %v2968 = vadd.f32 %v2579, %v2814
      %v2969 = vadd.f32 %v2580, %v2819
      %v2970 = vadd.f32 %v2581, %v2824
      %v2971 = vadd.f32 %v2582, %v2829
      %v2972 = vadd.f32 %v2583, %v2834
      %v2973 = vadd.f32 %v2584, %v2839
      %v2974 = vadd.f32 %v2585, %v2844
      %v2975 = vadd.f32 %v2586, %v2849
      %v2976 = vadd.f32 %v2587, %v2854
      %v2977 = vadd.f32 %v2588, %v2859
      %v2978 = vadd.f32 %v2589, %v2864
      %v2979 = vadd.f32 %v2590, %v2869
      %v2980 = vadd.f32 %v2591, %v2874
      %v2981 = vadd.f32 %v2592, %v2879
      %v2982 = vadd.f32 %v2593, %v2884
      %v2983 = vadd.f32 %v2594, %v2889
      %v2984 = vadd.f32 %v2595, %v2894
      %v2985 = vadd.f32 %v2596, %v2899
      %v2986 = vadd.f32 %v2597, %v2904
      %v2987 = vadd.f32 %v2598, %v2909
      %v2988 = vadd.f32 %v2599, %v2914
      %v2989 = vadd.f32 %v2600, %v2919
      %v2990 = vadd.f32 %v2601, %v2924
      %v2991 = vadd.f32 %v2602, %v2929
      %v2992 = vadd.f32 %v2603, %v2934
      %v2993 = vadd.f32 %v2604, %v2939
      %v2994 = vadd.f32 %v2605, %v2944
      %v2995 = vadd.f32 %v2606, %v2949
      %v2996 = vadd.f32 %v2607, %v2954
      %v2997 = vadd.f32 %v2608, %v2959
      %v2998 = vadd.f32 %v2609, %v2964
      %v2999 = vld [vmem:[%s2610 + $0x1] sm:$0xff]
      %v3000 = vld [vmem:[%s2610 + $0x9] sm:$0xff]
      %v3001 = vld [vmem:[%s2610 + $0x19] sm:$0xff]
      %v3002 = vld [vmem:[%s2610 + $0x21] sm:$0xff]
      %v3003 = vld [vmem:[%s2610 + $0x31] sm:$0xff]
      %v3004 = vld [vmem:[%s2610 + $0x39] sm:$0xff]
      %v3005 = vld [vmem:[%s2610 + $0x49] sm:$0xff]
      %v3006 = vld [vmem:[%s2610 + $0x51] sm:$0xff]
      %v3007 = vld [vmem:[%s2610 + $0x61] sm:$0xff]
      %v3008 = vld [vmem:[%s2610 + $0x69] sm:$0xff]
      %v3009 = vld [vmem:[%s2610 + $0x79] sm:$0xff]
      %v3010 = vld [vmem:[%s2610 + $0x81] sm:$0xff]
      %v3011 = vld [vmem:[%s2610 + $0x91] sm:$0xff]
      %v3012 = vld [vmem:[%s2610 + $0x99] sm:$0xff]
      %v3013 = vld [vmem:[%s2610 + $0xa9] sm:$0xff]
      %v3014 = vld [vmem:[%s2610 + $0xb1] sm:$0xff]
      %v3015 = vld [vmem:[%s2610 + $0xc1] sm:$0xff]
      %v3016 = vld [vmem:[%s2610 + $0xc9] sm:$0xff]
      %v3017 = vld [vmem:[%s2610 + $0xd9] sm:$0xff]
      %v3018 = vld [vmem:[%s2610 + $0xe1] sm:$0xff]
      %v3019 = vld [vmem:[%s2610 + $0xf1] sm:$0xff]
      %v3020 = vld [vmem:[%s2610 + $0xf9] sm:$0xff]
      %v3021 = vld [vmem:[%s2610 + $0x109] sm:$0xff]
      %v3022 = vld [vmem:[%s2610 + $0x111] sm:$0xff]
      %v3023 = vld [vmem:[%s2610 + $0x121] sm:$0xff]
      %v3024 = vld [vmem:[%s2610 + $0x129] sm:$0xff]
      %v3025 = vld [vmem:[%s2610 + $0x139] sm:$0xff]
      %v3026 = vld [vmem:[%s2610 + $0x141] sm:$0xff]
      %v3027 = vld [vmem:[%s2610 + $0x151] sm:$0xff]
      %v3028 = vld [vmem:[%s2610 + $0x159] sm:$0xff]
      %v3029 = vld [vmem:[%s2610 + $0x169] sm:$0xff]
      %v3030 = vld [vmem:[%s2610 + $0x171] sm:$0xff]
      %v3032 = vsel %vm215, %v2999, 0
      %v3035 = vsel %vm215, %v3000, 0
      %v3038 = vsel %vm215, %v3001, 0
      %v3041 = vsel %vm215, %v3002, 0
      %v3044 = vsel %vm215, %v3003, 0
      %v3047 = vsel %vm215, %v3004, 0
      %v3050 = vsel %vm215, %v3005, 0
      %v3053 = vsel %vm215, %v3006, 0
      %v3056 = vsel %vm215, %v3007, 0
      %v3059 = vsel %vm215, %v3008, 0
      %v3062 = vsel %vm215, %v3009, 0
      %v3065 = vsel %vm215, %v3010, 0
      %v3068 = vsel %vm215, %v3011, 0
      %v3071 = vsel %vm215, %v3012, 0
      %v3074 = vsel %vm215, %v3013, 0
      %v3077 = vsel %vm215, %v3014, 0
      %v3080 = vsel %vm215, %v3015, 0
      %v3083 = vsel %vm215, %v3016, 0
      %v3086 = vsel %vm215, %v3017, 0
      %v3089 = vsel %vm215, %v3018, 0
      %v3092 = vsel %vm215, %v3019, 0
      %v3095 = vsel %vm215, %v3020, 0
      %v3098 = vsel %vm215, %v3021, 0
      %v3101 = vsel %vm215, %v3022, 0
      %v3104 = vsel %vm215, %v3023, 0
      %v3107 = vsel %vm215, %v3024, 0
      %v3110 = vsel %vm215, %v3025, 0
      %v3113 = vsel %vm215, %v3026, 0
      %v3116 = vsel %vm215, %v3027, 0
      %v3119 = vsel %vm215, %v3028, 0
      %v3122 = vsel %vm215, %v3029, 0
      %v3125 = vsel %vm215, %v3030, 0
      %v3128 = vsel %vm505, %v343, 0
      %3130 = vmatprep.subr.mxu0 0.0
      %3131 = vmatpush1.msra.mxu0 %v3128
      %3132 = vmatprep.subr.mxu0 0.0
      %3133 = vmatpush1.msra.mxu0 0.0
      %3134 = vmatprep.subr.mxu0 0.0
      %3135 = vmatpush1.msra.mxu0 0.0
      %3136 = vmatprep.subr.mxu0 0.0
      %3137 = vmatpush1.msra.mxu0 0.0
      %3138 = vmatprep.subr.mxu0 0.0
      %3139 = vmatpush1.msra.mxu0 0.0
      %3140 = vmatprep.subr.mxu0 0.0
      %3141 = vmatpush1.msra.mxu0 0.0
      %3142 = vmatprep.subr.mxu0 0.0
      %3143 = vmatpush1.msra.mxu0 0.0
      %3144 = vmatprep.subr.mxu0 0.0
      %3145 = vmatpush1.msra.mxu0 0.0
      %3146 = vmatprep.subr.mxu0 0.0
      %3147 = vmatpush1.msra.mxu0 0.0
      %3148 = vmatprep.subr.mxu0 0.0
      %3149 = vmatpush1.msra.mxu0 0.0
      %3150 = vmatprep.subr.mxu0 0.0
      %3151 = vmatpush1.msra.mxu0 0.0
      %3152 = vmatprep.subr.mxu0 0.0
      %3153 = vmatpush1.msra.mxu0 0.0
      %3154 = vmatprep.subr.mxu0 0.0
      %3155 = vmatpush1.msra.mxu0 0.0
      %3156 = vmatprep.subr.mxu0 0.0
      %3157 = vmatpush1.msra.mxu0 0.0
      %3158 = vmatprep.subr.mxu0 0.0
      %3159 = vmatpush1.msra.mxu0 0.0
      %3160 = vmatprep.subr.mxu0 0.0
      %3161 = vmatpush1.msra.mxu0 0.0
      %3162 = vmatprep.subr.mxu0 0.0
      %3163 = vmatpush1.msra.mxu0 0.0
      %3164 = vmatprep.subr.mxu0 0.0
      %3165 = vmatpush1.msra.mxu0 0.0
      %3166 = vmatprep.subr.mxu0 0.0
      %3167 = vmatpush1.msra.mxu0 0.0
      %3168 = vmatprep.subr.mxu0 0.0
      %3169 = vmatpush1.msra.mxu0 0.0
      %3170 = vmatprep.subr.mxu0 0.0
      %3171 = vmatpush1.msra.mxu0 0.0
      %3172 = vmatprep.subr.mxu0 0.0
      %3173 = vmatpush1.msra.mxu0 0.0
      %3174 = vmatprep.subr.mxu0 0.0
      %3175 = vmatpush1.msra.mxu0 0.0
      %3176 = vmatprep.subr.mxu0 0.0
      %3177 = vmatpush1.msra.mxu0 0.0
      %3178 = vmatprep.subr.mxu0 0.0
      %3179 = vmatpush1.msra.mxu0 0.0
      %3180 = vmatprep.subr.mxu0 0.0
      %3181 = vmatpush1.msra.mxu0 0.0
      %3182 = vmatprep.subr.mxu0 0.0
      %3183 = vmatpush1.msra.mxu0 0.0
      %3184 = vmatprep.subr.mxu0 0.0
      %3185 = vmatpush1.msra.mxu0 0.0
      %3186 = vmatprep.subr.mxu0 0.0
      %3187 = vmatpush1.msra.mxu0 0.0
      %3188 = vmatprep.subr.mxu0 0.0
      %3189 = vmatpush1.msra.mxu0 0.0
      %3190 = vmatprep.subr.mxu0 0.0
      %3191 = vmatpush1.msra.mxu0 0.0
      %3192 = vmatprep.subr.mxu0 0.0
      %3193 = vmatpush1.msra.mxu0 0.0
      %3194 = vmatprep.mubr.f32.mxu0 0.0
      %3195 = vmatmul.mubr.f32.gmra.mrb[0].mxu0 %v3032
      %v3196 = vpop.f32.mrb[0].mxu0
      %v3197 = vadd.f32 0.0, %v3196
      %v3198 = vpop.f32.mrb[0].mxu0
      %3199 = vmatprep.mubr.f32.mxu0 0.0
      %3200 = vmatmul.mubr.f32.gmra.mrb[0].mxu0 %v3035
      %v3201 = vpop.f32.mrb[0].mxu0
      %v3202 = vadd.f32 0.0, %v3201
      %v3203 = vpop.f32.mrb[0].mxu0
      %3204 = vmatprep.mubr.f32.mxu0 0.0
      %3205 = vmatmul.mubr.f32.gmra.mrb[0].mxu0 %v3038
      %v3206 = vpop.f32.mrb[0].mxu0
      %v3207 = vadd.f32 0.0, %v3206
      %v3208 = vpop.f32.mrb[0].mxu0
      %3209 = vmatprep.mubr.f32.mxu0 0.0
      %3210 = vmatmul.mubr.f32.gmra.mrb[0].mxu0 %v3041
      %v3211 = vpop.f32.mrb[0].mxu0
      %v3212 = vadd.f32 0.0, %v3211
      %v3213 = vpop.f32.mrb[0].mxu0
      %3214 = vmatprep.mubr.f32.mxu0 0.0
      %3215 = vmatmul.mubr.f32.gmra.mrb[0].mxu0 %v3044
      %v3216 = vpop.f32.mrb[0].mxu0
      %v3217 = vadd.f32 0.0, %v3216
      %v3218 = vpop.f32.mrb[0].mxu0
      %3219 = vmatprep.mubr.f32.mxu0 0.0
      %3220 = vmatmul.mubr.f32.gmra.mrb[0].mxu0 %v3047
      %v3221 = vpop.f32.mrb[0].mxu0
      %v3222 = vadd.f32 0.0, %v3221
      %v3223 = vpop.f32.mrb[0].mxu0
      %3224 = vmatprep.mubr.f32.mxu0 0.0
      %3225 = vmatmul.mubr.f32.gmra.mrb[0].mxu0 %v3050
      %v3226 = vpop.f32.mrb[0].mxu0
      %v3227 = vadd.f32 0.0, %v3226
      %v3228 = vpop.f32.mrb[0].mxu0
      %3229 = vmatprep.mubr.f32.mxu0 0.0
      %3230 = vmatmul.mubr.f32.gmra.mrb[0].mxu0 %v3053
      %v3231 = vpop.f32.mrb[0].mxu0
      %v3232 = vadd.f32 0.0, %v3231
      %v3233 = vpop.f32.mrb[0].mxu0
      %3234 = vmatprep.mubr.f32.mxu0 0.0
      %3235 = vmatmul.mubr.f32.gmra.mrb[0].mxu0 %v3056
      %v3236 = vpop.f32.mrb[0].mxu0
      %v3237 = vadd.f32 0.0, %v3236
      %v3238 = vpop.f32.mrb[0].mxu0
      %3239 = vmatprep.mubr.f32.mxu0 0.0
      %3240 = vmatmul.mubr.f32.gmra.mrb[0].mxu0 %v3059
      %v3241 = vpop.f32.mrb[0].mxu0
      %v3242 = vadd.f32 0.0, %v3241
      %v3243 = vpop.f32.mrb[0].mxu0
      %3244 = vmatprep.mubr.f32.mxu0 0.0
      %3245 = vmatmul.mubr.f32.gmra.mrb[0].mxu0 %v3062
      %v3246 = vpop.f32.mrb[0].mxu0
      %v3247 = vadd.f32 0.0, %v3246
      %v3248 = vpop.f32.mrb[0].mxu0
      %3249 = vmatprep.mubr.f32.mxu0 0.0
      %3250 = vmatmul.mubr.f32.gmra.mrb[0].mxu0 %v3065
      %v3251 = vpop.f32.mrb[0].mxu0
      %v3252 = vadd.f32 0.0, %v3251
      %v3253 = vpop.f32.mrb[0].mxu0
      %3254 = vmatprep.mubr.f32.mxu0 0.0
      %3255 = vmatmul.mubr.f32.gmra.mrb[0].mxu0 %v3068
      %v3256 = vpop.f32.mrb[0].mxu0
      %v3257 = vadd.f32 0.0, %v3256
      %v3258 = vpop.f32.mrb[0].mxu0
      %3259 = vmatprep.mubr.f32.mxu0 0.0
      %3260 = vmatmul.mubr.f32.gmra.mrb[0].mxu0 %v3071
      %v3261 = vpop.f32.mrb[0].mxu0
      %v3262 = vadd.f32 0.0, %v3261
      %v3263 = vpop.f32.mrb[0].mxu0
      %3264 = vmatprep.mubr.f32.mxu0 0.0
      %3265 = vmatmul.mubr.f32.gmra.mrb[0].mxu0 %v3074
      %v3266 = vpop.f32.mrb[0].mxu0
      %v3267 = vadd.f32 0.0, %v3266
      %v3268 = vpop.f32.mrb[0].mxu0
      %3269 = vmatprep.mubr.f32.mxu0 0.0
      %3270 = vmatmul.mubr.f32.gmra.mrb[0].mxu0 %v3077
      %v3271 = vpop.f32.mrb[0].mxu0
      %v3272 = vadd.f32 0.0, %v3271
      %v3273 = vpop.f32.mrb[0].mxu0
      %3274 = vmatprep.mubr.f32.mxu0 0.0
      %3275 = vmatmul.mubr.f32.gmra.mrb[0].mxu0 %v3080
      %v3276 = vpop.f32.mrb[0].mxu0
      %v3277 = vadd.f32 0.0, %v3276
      %v3278 = vpop.f32.mrb[0].mxu0
      %3279 = vmatprep.mubr.f32.mxu0 0.0
      %3280 = vmatmul.mubr.f32.gmra.mrb[0].mxu0 %v3083
      %v3281 = vpop.f32.mrb[0].mxu0
      %v3282 = vadd.f32 0.0, %v3281
      %v3283 = vpop.f32.mrb[0].mxu0
      %3284 = vmatprep.mubr.f32.mxu0 0.0
      %3285 = vmatmul.mubr.f32.gmra.mrb[0].mxu0 %v3086
      %v3286 = vpop.f32.mrb[0].mxu0
      %v3287 = vadd.f32 0.0, %v3286
      %v3288 = vpop.f32.mrb[0].mxu0
      %3289 = vmatprep.mubr.f32.mxu0 0.0
      %3290 = vmatmul.mubr.f32.gmra.mrb[0].mxu0 %v3089
      %v3291 = vpop.f32.mrb[0].mxu0
      %v3292 = vadd.f32 0.0, %v3291
      %v3293 = vpop.f32.mrb[0].mxu0
      %3294 = vmatprep.mubr.f32.mxu0 0.0
      %3295 = vmatmul.mubr.f32.gmra.mrb[0].mxu0 %v3092
      %v3296 = vpop.f32.mrb[0].mxu0
      %v3297 = vadd.f32 0.0, %v3296
      %v3298 = vpop.f32.mrb[0].mxu0
      %3299 = vmatprep.mubr.f32.mxu0 0.0
      %3300 = vmatmul.mubr.f32.gmra.mrb[0].mxu0 %v3095
      %v3301 = vpop.f32.mrb[0].mxu0
      %v3302 = vadd.f32 0.0, %v3301
      %v3303 = vpop.f32.mrb[0].mxu0
      %3304 = vmatprep.mubr.f32.mxu0 0.0
      %3305 = vmatmul.mubr.f32.gmra.mrb[0].mxu0 %v3098
      %v3306 = vpop.f32.mrb[0].mxu0
      %v3307 = vadd.f32 0.0, %v3306
      %v3308 = vpop.f32.mrb[0].mxu0
      %3309 = vmatprep.mubr.f32.mxu0 0.0
      %3310 = vmatmul.mubr.f32.gmra.mrb[0].mxu0 %v3101
      %v3311 = vpop.f32.mrb[0].mxu0
      %v3312 = vadd.f32 0.0, %v3311
      %v3313 = vpop.f32.mrb[0].mxu0
      %3314 = vmatprep.mubr.f32.mxu0 0.0
      %3315 = vmatmul.mubr.f32.gmra.mrb[0].mxu0 %v3104
      %v3316 = vpop.f32.mrb[0].mxu0
      %v3317 = vadd.f32 0.0, %v3316
      %v3318 = vpop.f32.mrb[0].mxu0
      %3319 = vmatprep.mubr.f32.mxu0 0.0
      %3320 = vmatmul.mubr.f32.gmra.mrb[0].mxu0 %v3107
      %v3321 = vpop.f32.mrb[0].mxu0
      %v3322 = vadd.f32 0.0, %v3321
      %v3323 = vpop.f32.mrb[0].mxu0
      %3324 = vmatprep.mubr.f32.mxu0 0.0
      %3325 = vmatmul.mubr.f32.gmra.mrb[0].mxu0 %v3110
      %v3326 = vpop.f32.mrb[0].mxu0
      %v3327 = vadd.f32 0.0, %v3326
      %v3328 = vpop.f32.mrb[0].mxu0
      %3329 = vmatprep.mubr.f32.mxu0 0.0
      %3330 = vmatmul.mubr.f32.gmra.mrb[0].mxu0 %v3113
      %v3331 = vpop.f32.mrb[0].mxu0
      %v3332 = vadd.f32 0.0, %v3331
      %v3333 = vpop.f32.mrb[0].mxu0
      %3334 = vmatprep.mubr.f32.mxu0 0.0
      %3335 = vmatmul.mubr.f32.gmra.mrb[0].mxu0 %v3116
      %v3336 = vpop.f32.mrb[0].mxu0
      %v3337 = vadd.f32 0.0, %v3336
      %v3338 = vpop.f32.mrb[0].mxu0
      %3339 = vmatprep.mubr.f32.mxu0 0.0
      %3340 = vmatmul.mubr.f32.gmra.mrb[0].mxu0 %v3119
      %v3341 = vpop.f32.mrb[0].mxu0
      %v3342 = vadd.f32 0.0, %v3341
      %v3343 = vpop.f32.mrb[0].mxu0
      %3344 = vmatprep.mubr.f32.mxu0 0.0
      %3345 = vmatmul.mubr.f32.gmra.mrb[0].mxu0 %v3122
      %v3346 = vpop.f32.mrb[0].mxu0
      %v3347 = vadd.f32 0.0, %v3346
      %v3348 = vpop.f32.mrb[0].mxu0
      %3349 = vmatprep.mubr.f32.mxu0 0.0
      %3350 = vmatmul.mubr.f32.gmra.mrb[0].mxu0 %v3125
      %v3351 = vpop.f32.mrb[0].mxu0
      %v3352 = vadd.f32 0.0, %v3351
      %v3353 = vpop.f32.mrb[0].mxu0
      %3354 = vdwg.mxu0
      %v3355 = vadd.f32 %v2967, %v3197
      %v3356 = vadd.f32 %v2968, %v3202
      %v3357 = vadd.f32 %v2969, %v3207
      %v3358 = vadd.f32 %v2970, %v3212
      %v3359 = vadd.f32 %v2971, %v3217
      %v3360 = vadd.f32 %v2972, %v3222
      %v3361 = vadd.f32 %v2973, %v3227
      %v3362 = vadd.f32 %v2974, %v3232
      %v3363 = vadd.f32 %v2975, %v3237
      %v3364 = vadd.f32 %v2976, %v3242
      %v3365 = vadd.f32 %v2977, %v3247
      %v3366 = vadd.f32 %v2978, %v3252
      %v3367 = vadd.f32 %v2979, %v3257
      %v3368 = vadd.f32 %v2980, %v3262
      %v3369 = vadd.f32 %v2981, %v3267
      %v3370 = vadd.f32 %v2982, %v3272
      %v3371 = vadd.f32 %v2983, %v3277
      %v3372 = vadd.f32 %v2984, %v3282
      %v3373 = vadd.f32 %v2985, %v3287
      %v3374 = vadd.f32 %v2986, %v3292
      %v3375 = vadd.f32 %v2987, %v3297
      %v3376 = vadd.f32 %v2988, %v3302
      %v3377 = vadd.f32 %v2989, %v3307
      %v3378 = vadd.f32 %v2990, %v3312
      %v3379 = vadd.f32 %v2991, %v3317
      %v3380 = vadd.f32 %v2992, %v3322
      %v3381 = vadd.f32 %v2993, %v3327
      %v3382 = vadd.f32 %v2994, %v3332
      %v3383 = vadd.f32 %v2995, %v3337
      %v3384 = vadd.f32 %v2996, %v3342
      %v3385 = vadd.f32 %v2997, %v3347
      %v3386 = vadd.f32 %v2998, %v3352
      %v3387 = vld [vmem:[%s2610 + $0x2] sm:$0xff]
      %v3388 = vld [vmem:[%s2610 + $0xa] sm:$0xff]
      %v3389 = vld [vmem:[%s2610 + $0x1a] sm:$0xff]
      %v3390 = vld [vmem:[%s2610 + $0x22] sm:$0xff]
      %v3391 = vld [vmem:[%s2610 + $0x32] sm:$0xff]
      %v3392 = vld [vmem:[%s2610 + $0x3a] sm:$0xff]
      %v3393 = vld [vmem:[%s2610 + $0x4a] sm:$0xff]
      %v3394 = vld [vmem:[%s2610 + $0x52] sm:$0xff]
      %v3395 = vld [vmem:[%s2610 + $0x62] sm:$0xff]
      %v3396 = vld [vmem:[%s2610 + $0x6a] sm:$0xff]
      %v3397 = vld [vmem:[%s2610 + $0x7a] sm:$0xff]
      %v3398 = vld [vmem:[%s2610 + $0x82] sm:$0xff]
      %v3399 = vld [vmem:[%s2610 + $0x92] sm:$0xff]
      %v3400 = vld [vmem:[%s2610 + $0x9a] sm:$0xff]
      %v3401 = vld [vmem:[%s2610 + $0xaa] sm:$0xff]
      %v3402 = vld [vmem:[%s2610 + $0xb2] sm:$0xff]
      %v3403 = vld [vmem:[%s2610 + $0xc2] sm:$0xff]
      %v3404 = vld [vmem:[%s2610 + $0xca] sm:$0xff]
      %v3405 = vld [vmem:[%s2610 + $0xda] sm:$0xff]
      %v3406 = vld [vmem:[%s2610 + $0xe2] sm:$0xff]
      %v3407 = vld [vmem:[%s2610 + $0xf2] sm:$0xff]
      %v3408 = vld [vmem:[%s2610 + $0xfa] sm:$0xff]
      %v3409 = vld [vmem:[%s2610 + $0x10a] sm:$0xff]
      %v3410 = vld [vmem:[%s2610 + $0x112] sm:$0xff]
      %v3411 = vld [vmem:[%s2610 + $0x122] sm:$0xff]
      %v3412 = vld [vmem:[%s2610 + $0x12a] sm:$0xff]
      %v3413 = vld [vmem:[%s2610 + $0x13a] sm:$0xff]
      %v3414 = vld [vmem:[%s2610 + $0x142] sm:$0xff]
      %v3415 = vld [vmem:[%s2610 + $0x152] sm:$0xff]
      %v3416 = vld [vmem:[%s2610 + $0x15a] sm:$0xff]
      %v3417 = vld [vmem:[%s2610 + $0x16a] sm:$0xff]
      %v3418 = vld [vmem:[%s2610 + $0x172] sm:$0xff]
      %v3420 = vsel %vm215, %v3387, 0
      %v3423 = vsel %vm215, %v3388, 0
      %v3426 = vsel %vm215, %v3389, 0
      %v3429 = vsel %vm215, %v3390, 0
      %v3432 = vsel %vm215, %v3391, 0
      %v3435 = vsel %vm215, %v3392, 0
      %v3438 = vsel %vm215, %v3393, 0
      %v3441 = vsel %vm215, %v3394, 0
      %v3444 = vsel %vm215, %v3395, 0
      %v3447 = vsel %vm215, %v3396, 0
      %v3450 = vsel %vm215, %v3397, 0
      %v3453 = vsel %vm215, %v3398, 0
      %v3456 = vsel %vm215, %v3399, 0
      %v3459 = vsel %vm215, %v3400, 0
      %v3462 = vsel %vm215, %v3401, 0
      %v3465 = vsel %vm215, %v3402, 0
      %v3468 = vsel %vm215, %v3403, 0
      %v3471 = vsel %vm215, %v3404, 0
      %v3474 = vsel %vm215, %v3405, 0
      %v3477 = vsel %vm215, %v3406, 0
      %v3480 = vsel %vm215, %v3407, 0
      %v3483 = vsel %vm215, %v3408, 0
      %v3486 = vsel %vm215, %v3409, 0
      %v3489 = vsel %vm215, %v3410, 0
      %v3492 = vsel %vm215, %v3411, 0
      %v3495 = vsel %vm215, %v3412, 0
      %v3498 = vsel %vm215, %v3413, 0
      %v3501 = vsel %vm215, %v3414, 0
      %v3504 = vsel %vm215, %v3415, 0
      %v3507 = vsel %vm215, %v3416, 0
      %v3510 = vsel %vm215, %v3417, 0
      %v3513 = vsel %vm215, %v3418, 0
      %v3516 = vsel %vm505, %v344, 0
      %3518 = vmatprep.subr.mxu0 0.0
      %3519 = vmatpush1.msra.mxu0 %v3516
      %3520 = vmatprep.subr.mxu0 0.0
      %3521 = vmatpush1.msra.mxu0 0.0
      %3522 = vmatprep.subr.mxu0 0.0
      %3523 = vmatpush1.msra.mxu0 0.0
      %3524 = vmatprep.subr.mxu0 0.0
      %3525 = vmatpush1.msra.mxu0 0.0
      %3526 = vmatprep.subr.mxu0 0.0
      %3527 = vmatpush1.msra.mxu0 0.0
      %3528 = vmatprep.subr.mxu0 0.0
      %3529 = vmatpush1.msra.mxu0 0.0
      %3530 = vmatprep.subr.mxu0 0.0
      %3531 = vmatpush1.msra.mxu0 0.0
      %3532 = vmatprep.subr.mxu0 0.0
      %3533 = vmatpush1.msra.mxu0 0.0
      %3534 = vmatprep.subr.mxu0 0.0
      %3535 = vmatpush1.msra.mxu0 0.0
      %3536 = vmatprep.subr.mxu0 0.0
      %3537 = vmatpush1.msra.mxu0 0.0
      %3538 = vmatprep.subr.mxu0 0.0
      %3539 = vmatpush1.msra.mxu0 0.0
      %3540 = vmatprep.subr.mxu0 0.0
      %3541 = vmatpush1.msra.mxu0 0.0
      %3542 = vmatprep.subr.mxu0 0.0
      %3543 = vmatpush1.msra.mxu0 0.0
      %3544 = vmatprep.subr.mxu0 0.0
      %3545 = vmatpush1.msra.mxu0 0.0
      %3546 = vmatprep.subr.mxu0 0.0
      %3547 = vmatpush1.msra.mxu0 0.0
      %3548 = vmatprep.subr.mxu0 0.0
      %3549 = vmatpush1.msra.mxu0 0.0
      %3550 = vmatprep.subr.mxu0 0.0
      %3551 = vmatpush1.msra.mxu0 0.0
      %3552 = vmatprep.subr.mxu0 0.0
      %3553 = vmatpush1.msra.mxu0 0.0
      %3554 = vmatprep.subr.mxu0 0.0
      %3555 = vmatpush1.msra.mxu0 0.0
      %3556 = vmatprep.subr.mxu0 0.0
      %3557 = vmatpush1.msra.mxu0 0.0
      %3558 = vmatprep.subr.mxu0 0.0
      %3559 = vmatpush1.msra.mxu0 0.0
      %3560 = vmatprep.subr.mxu0 0.0
      %3561 = vmatpush1.msra.mxu0 0.0
      %3562 = vmatprep.subr.mxu0 0.0
      %3563 = vmatpush1.msra.mxu0 0.0
      %3564 = vmatprep.subr.mxu0 0.0
      %3565 = vmatpush1.msra.mxu0 0.0
      %3566 = vmatprep.subr.mxu0 0.0
      %3567 = vmatpush1.msra.mxu0 0.0
      %3568 = vmatprep.subr.mxu0 0.0
      %3569 = vmatpush1.msra.mxu0 0.0
      %3570 = vmatprep.subr.mxu0 0.0
      %3571 = vmatpush1.msra.mxu0 0.0
      %3572 = vmatprep.subr.mxu0 0.0
      %3573 = vmatpush1.msra.mxu0 0.0
      %3574 = vmatprep.subr.mxu0 0.0
      %3575 = vmatpush1.msra.mxu0 0.0
      %3576 = vmatprep.subr.mxu0 0.0
      %3577 = vmatpush1.msra.mxu0 0.0
      %3578 = vmatprep.subr.mxu0 0.0
      %3579 = vmatpush1.msra.mxu0 0.0
      %3580 = vmatprep.subr.mxu0 0.0
      %3581 = vmatpush1.msra.mxu0 0.0
      %3582 = vmatprep.mubr.f32.mxu0 0.0
      %3583 = vmatmul.mubr.f32.gmra.mrb[0].mxu0 %v3420
      %v3584 = vpop.f32.mrb[0].mxu0
      %v3585 = vadd.f32 0.0, %v3584
      %v3586 = vpop.f32.mrb[0].mxu0
      %3587 = vmatprep.mubr.f32.mxu0 0.0
      %3588 = vmatmul.mubr.f32.gmra.mrb[0].mxu0 %v3423
      %v3589 = vpop.f32.mrb[0].mxu0
      %v3590 = vadd.f32 0.0, %v3589
      %v3591 = vpop.f32.mrb[0].mxu0
      %3592 = vmatprep.mubr.f32.mxu0 0.0
      %3593 = vmatmul.mubr.f32.gmra.mrb[0].mxu0 %v3426
      %v3594 = vpop.f32.mrb[0].mxu0
      %v3595 = vadd.f32 0.0, %v3594
      %v3596 = vpop.f32.mrb[0].mxu0
      %3597 = vmatprep.mubr.f32.mxu0 0.0
      %3598 = vmatmul.mubr.f32.gmra.mrb[0].mxu0 %v3429
      %v3599 = vpop.f32.mrb[0].mxu0
      %v3600 = vadd.f32 0.0, %v3599
      %v3601 = vpop.f32.mrb[0].mxu0
      %3602 = vmatprep.mubr.f32.mxu0 0.0
      %3603 = vmatmul.mubr.f32.gmra.mrb[0].mxu0 %v3432
      %v3604 = vpop.f32.mrb[0].mxu0
      %v3605 = vadd.f32 0.0, %v3604
      %v3606 = vpop.f32.mrb[0].mxu0
      %3607 = vmatprep.mubr.f32.mxu0 0.0
      %3608 = vmatmul.mubr.f32.gmra.mrb[0].mxu0 %v3435
      %v3609 = vpop.f32.mrb[0].mxu0
      %v3610 = vadd.f32 0.0, %v3609
      %v3611 = vpop.f32.mrb[0].mxu0
      %3612 = vmatprep.mubr.f32.mxu0 0.0
      %3613 = vmatmul.mubr.f32.gmra.mrb[0].mxu0 %v3438
      %v3614 = vpop.f32.mrb[0].mxu0
      %v3615 = vadd.f32 0.0, %v3614
      %v3616 = vpop.f32.mrb[0].mxu0
      %3617 = vmatprep.mubr.f32.mxu0 0.0
      %3618 = vmatmul.mubr.f32.gmra.mrb[0].mxu0 %v3441
      %v3619 = vpop.f32.mrb[0].mxu0
      %v3620 = vadd.f32 0.0, %v3619
      %v3621 = vpop.f32.mrb[0].mxu0
      %3622 = vmatprep.mubr.f32.mxu0 0.0
      %3623 = vmatmul.mubr.f32.gmra.mrb[0].mxu0 %v3444
      %v3624 = vpop.f32.mrb[0].mxu0
      %v3625 = vadd.f32 0.0, %v3624
      %v3626 = vpop.f32.mrb[0].mxu0
      %3627 = vmatprep.mubr.f32.mxu0 0.0
      %3628 = vmatmul.mubr.f32.gmra.mrb[0].mxu0 %v3447
      %v3629 = vpop.f32.mrb[0].mxu0
      %v3630 = vadd.f32 0.0, %v3629
      %v3631 = vpop.f32.mrb[0].mxu0
      %3632 = vmatprep.mubr.f32.mxu0 0.0
      %3633 = vmatmul.mubr.f32.gmra.mrb[0].mxu0 %v3450
      %v3634 = vpop.f32.mrb[0].mxu0
      %v3635 = vadd.f32 0.0, %v3634
      %v3636 = vpop.f32.mrb[0].mxu0
      %3637 = vmatprep.mubr.f32.mxu0 0.0
      %3638 = vmatmul.mubr.f32.gmra.mrb[0].mxu0 %v3453
      %v3639 = vpop.f32.mrb[0].mxu0
      %v3640 = vadd.f32 0.0, %v3639
      %v3641 = vpop.f32.mrb[0].mxu0
      %3642 = vmatprep.mubr.f32.mxu0 0.0
      %3643 = vmatmul.mubr.f32.gmra.mrb[0].mxu0 %v3456
      %v3644 = vpop.f32.mrb[0].mxu0
      %v3645 = vadd.f32 0.0, %v3644
      %v3646 = vpop.f32.mrb[0].mxu0
      %3647 = vmatprep.mubr.f32.mxu0 0.0
      %3648 = vmatmul.mubr.f32.gmra.mrb[0].mxu0 %v3459
      %v3649 = vpop.f32.mrb[0].mxu0
      %v3650 = vadd.f32 0.0, %v3649
      %v3651 = vpop.f32.mrb[0].mxu0
      %3652 = vmatprep.mubr.f32.mxu0 0.0
      %3653 = vmatmul.mubr.f32.gmra.mrb[0].mxu0 %v3462
      %v3654 = vpop.f32.mrb[0].mxu0
      %v3655 = vadd.f32 0.0, %v3654
      %v3656 = vpop.f32.mrb[0].mxu0
      %3657 = vmatprep.mubr.f32.mxu0 0.0
      %3658 = vmatmul.mubr.f32.gmra.mrb[0].mxu0 %v3465
      %v3659 = vpop.f32.mrb[0].mxu0
      %v3660 = vadd.f32 0.0, %v3659
      %v3661 = vpop.f32.mrb[0].mxu0
      %3662 = vmatprep.mubr.f32.mxu0 0.0
      %3663 = vmatmul.mubr.f32.gmra.mrb[0].mxu0 %v3468
      %v3664 = vpop.f32.mrb[0].mxu0
      %v3665 = vadd.f32 0.0, %v3664
      %v3666 = vpop.f32.mrb[0].mxu0
      %3667 = vmatprep.mubr.f32.mxu0 0.0
      %3668 = vmatmul.mubr.f32.gmra.mrb[0].mxu0 %v3471
      %v3669 = vpop.f32.mrb[0].mxu0
      %v3670 = vadd.f32 0.0, %v3669
      %v3671 = vpop.f32.mrb[0].mxu0
      %3672 = vmatprep.mubr.f32.mxu0 0.0
      %3673 = vmatmul.mubr.f32.gmra.mrb[0].mxu0 %v3474
      %v3674 = vpop.f32.mrb[0].mxu0
      %v3675 = vadd.f32 0.0, %v3674
      %v3676 = vpop.f32.mrb[0].mxu0
      %3677 = vmatprep.mubr.f32.mxu0 0.0
      %3678 = vmatmul.mubr.f32.gmra.mrb[0].mxu0 %v3477
      %v3679 = vpop.f32.mrb[0].mxu0
      %v3680 = vadd.f32 0.0, %v3679
      %v3681 = vpop.f32.mrb[0].mxu0
      %3682 = vmatprep.mubr.f32.mxu0 0.0
      %3683 = vmatmul.mubr.f32.gmra.mrb[0].mxu0 %v3480
      %v3684 = vpop.f32.mrb[0].mxu0
      %v3685 = vadd.f32 0.0, %v3684
      %v3686 = vpop.f32.mrb[0].mxu0
      %3687 = vmatprep.mubr.f32.mxu0 0.0
      %3688 = vmatmul.mubr.f32.gmra.mrb[0].mxu0 %v3483
      %v3689 = vpop.f32.mrb[0].mxu0
      %v3690 = vadd.f32 0.0, %v3689
      %v3691 = vpop.f32.mrb[0].mxu0
      %3692 = vmatprep.mubr.f32.mxu0 0.0
      %3693 = vmatmul.mubr.f32.gmra.mrb[0].mxu0 %v3486
      %v3694 = vpop.f32.mrb[0].mxu0
      %v3695 = vadd.f32 0.0, %v3694
      %v3696 = vpop.f32.mrb[0].mxu0
      %3697 = vmatprep.mubr.f32.mxu0 0.0
      %3698 = vmatmul.mubr.f32.gmra.mrb[0].mxu0 %v3489
      %v3699 = vpop.f32.mrb[0].mxu0
      %v3700 = vadd.f32 0.0, %v3699
      %v3701 = vpop.f32.mrb[0].mxu0
      %3702 = vmatprep.mubr.f32.mxu0 0.0
      %3703 = vmatmul.mubr.f32.gmra.mrb[0].mxu0 %v3492
      %v3704 = vpop.f32.mrb[0].mxu0
      %v3705 = vadd.f32 0.0, %v3704
      %v3706 = vpop.f32.mrb[0].mxu0
      %3707 = vmatprep.mubr.f32.mxu0 0.0
      %3708 = vmatmul.mubr.f32.gmra.mrb[0].mxu0 %v3495
      %v3709 = vpop.f32.mrb[0].mxu0
      %v3710 = vadd.f32 0.0, %v3709
      %v3711 = vpop.f32.mrb[0].mxu0
      %3712 = vmatprep.mubr.f32.mxu0 0.0
      %3713 = vmatmul.mubr.f32.gmra.mrb[0].mxu0 %v3498
      %v3714 = vpop.f32.mrb[0].mxu0
      %v3715 = vadd.f32 0.0, %v3714
      %v3716 = vpop.f32.mrb[0].mxu0
      %3717 = vmatprep.mubr.f32.mxu0 0.0
      %3718 = vmatmul.mubr.f32.gmra.mrb[0].mxu0 %v3501
      %v3719 = vpop.f32.mrb[0].mxu0
      %v3720 = vadd.f32 0.0, %v3719
      %v3721 = vpop.f32.mrb[0].mxu0
      %3722 = vmatprep.mubr.f32.mxu0 0.0
      %3723 = vmatmul.mubr.f32.gmra.mrb[0].mxu0 %v3504
      %v3724 = vpop.f32.mrb[0].mxu0
      %v3725 = vadd.f32 0.0, %v3724
      %v3726 = vpop.f32.mrb[0].mxu0
      %3727 = vmatprep.mubr.f32.mxu0 0.0
      %3728 = vmatmul.mubr.f32.gmra.mrb[0].mxu0 %v3507
      %v3729 = vpop.f32.mrb[0].mxu0
      %v3730 = vadd.f32 0.0, %v3729
      %v3731 = vpop.f32.mrb[0].mxu0
      %3732 = vmatprep.mubr.f32.mxu0 0.0
      %3733 = vmatmul.mubr.f32.gmra.mrb[0].mxu0 %v3510
      %v3734 = vpop.f32.mrb[0].mxu0
      %v3735 = vadd.f32 0.0, %v3734
      %v3736 = vpop.f32.mrb[0].mxu0
      %3737 = vmatprep.mubr.f32.mxu0 0.0
      %3738 = vmatmul.mubr.f32.gmra.mrb[0].mxu0 %v3513
      %v3739 = vpop.f32.mrb[0].mxu0
      %v3740 = vadd.f32 0.0, %v3739
      %v3741 = vpop.f32.mrb[0].mxu0
      %3742 = vdwg.mxu0
      %v3743 = vadd.f32 %v3355, %v3585
      %v3744 = vadd.f32 %v3356, %v3590
      %v3745 = vadd.f32 %v3357, %v3595
      %v3746 = vadd.f32 %v3358, %v3600
      %v3747 = vadd.f32 %v3359, %v3605
      %v3748 = vadd.f32 %v3360, %v3610
      %v3749 = vadd.f32 %v3361, %v3615
      %v3750 = vadd.f32 %v3362, %v3620
      %v3751 = vadd.f32 %v3363, %v3625
      %v3752 = vadd.f32 %v3364, %v3630
      %v3753 = vadd.f32 %v3365, %v3635
      %v3754 = vadd.f32 %v3366, %v3640
      %v3755 = vadd.f32 %v3367, %v3645
      %v3756 = vadd.f32 %v3368, %v3650
      %v3757 = vadd.f32 %v3369, %v3655
      %v3758 = vadd.f32 %v3370, %v3660
      %v3759 = vadd.f32 %v3371, %v3665
      %v3760 = vadd.f32 %v3372, %v3670
      %v3761 = vadd.f32 %v3373, %v3675
      %v3762 = vadd.f32 %v3374, %v3680
      %v3763 = vadd.f32 %v3375, %v3685
      %v3764 = vadd.f32 %v3376, %v3690
      %v3765 = vadd.f32 %v3377, %v3695
      %v3766 = vadd.f32 %v3378, %v3700
      %v3767 = vadd.f32 %v3379, %v3705
      %v3768 = vadd.f32 %v3380, %v3710
      %v3769 = vadd.f32 %v3381, %v3715
      %v3770 = vadd.f32 %v3382, %v3720
      %v3771 = vadd.f32 %v3383, %v3725
      %v3772 = vadd.f32 %v3384, %v3730
      %v3773 = vadd.f32 %v3385, %v3735
      %v3774 = vadd.f32 %v3386, %v3740
      %vm3775 = vcmask 64512
      %3776 = vst.msk [vmem:[%s208] sm:$0xff] %vm3775, %v3743
      %3777 = vst.msk [vmem:[%s208 + $0x8] sm:$0xff] %vm3775, %v3744
      %3778 = vst.msk [vmem:[%s208 + $0x10] sm:$0xff] %vm3775, %v3745
      %3779 = vst.msk [vmem:[%s208 + $0x18] sm:$0xff] %vm3775, %v3746
      %3780 = vst.msk [vmem:[%s208 + $0x20] sm:$0xff] %vm3775, %v3747
      %3781 = vst.msk [vmem:[%s208 + $0x28] sm:$0xff] %vm3775, %v3748
      %3782 = vst.msk [vmem:[%s208 + $0x30] sm:$0xff] %vm3775, %v3749
      %3783 = vst.msk [vmem:[%s208 + $0x38] sm:$0xff] %vm3775, %v3750
      %3784 = vst.msk [vmem:[%s208 + $0x40] sm:$0xff] %vm3775, %v3751
      %3785 = vst.msk [vmem:[%s208 + $0x48] sm:$0xff] %vm3775, %v3752
      %3786 = vst.msk [vmem:[%s208 + $0x50] sm:$0xff] %vm3775, %v3753
      %3787 = vst.msk [vmem:[%s208 + $0x58] sm:$0xff] %vm3775, %v3754
      %3788 = vst.msk [vmem:[%s208 + $0x60] sm:$0xff] %vm3775, %v3755
      %3789 = vst.msk [vmem:[%s208 + $0x68] sm:$0xff] %vm3775, %v3756
      %3790 = vst.msk [vmem:[%s208 + $0x70] sm:$0xff] %vm3775, %v3757
      %3791 = vst.msk [vmem:[%s208 + $0x78] sm:$0xff] %vm3775, %v3758
      %3792 = vst.msk [vmem:[%s208 + $0x80] sm:$0xff] %vm3775, %v3759
      %3793 = vst.msk [vmem:[%s208 + $0x88] sm:$0xff] %vm3775, %v3760
      %3794 = vst.msk [vmem:[%s208 + $0x90] sm:$0xff] %vm3775, %v3761
      %3795 = vst.msk [vmem:[%s208 + $0x98] sm:$0xff] %vm3775, %v3762
      %3796 = vst.msk [vmem:[%s208 + $0xa0] sm:$0xff] %vm3775, %v3763
      %3797 = vst.msk [vmem:[%s208 + $0xa8] sm:$0xff] %vm3775, %v3764
      %3798 = vst.msk [vmem:[%s208 + $0xb0] sm:$0xff] %vm3775, %v3765
      %3799 = vst.msk [vmem:[%s208 + $0xb8] sm:$0xff] %vm3775, %v3766
      %3800 = vst.msk [vmem:[%s208 + $0xc0] sm:$0xff] %vm3775, %v3767
      %3801 = vst.msk [vmem:[%s208 + $0xc8] sm:$0xff] %vm3775, %v3768
      %3802 = vst.msk [vmem:[%s208 + $0xd0] sm:$0xff] %vm3775, %v3769
      %3803 = vst.msk [vmem:[%s208 + $0xd8] sm:$0xff] %vm3775, %v3770
      %3804 = vst.msk [vmem:[%s208 + $0xe0] sm:$0xff] %vm3775, %v3771
      %3805 = vst.msk [vmem:[%s208 + $0xe8] sm:$0xff] %vm3775, %v3772
      %3806 = vst.msk [vmem:[%s208 + $0xf0] sm:$0xff] %vm3775, %v3773
      %3807 = vst.msk [vmem:[%s208 + $0xf8] sm:$0xff] %vm3775, %v3774
      %v3808 = vsel %vm3775, %v3743, 0.0
      %v3809 = vsel %vm3775, %v3744, 0.0
      %v3810 = vadd.f32 %v3808, %v3809
      %v3811 = vsel %vm3775, %v3745, 0.0
      %v3812 = vadd.f32 %v3810, %v3811
      %v3813 = vsel %vm3775, %v3746, 0.0
      %v3814 = vadd.f32 %v3812, %v3813
      %v3815 = vsel %vm3775, %v3747, 0.0
      %v3816 = vadd.f32 %v3814, %v3815
      %v3817 = vsel %vm3775, %v3748, 0.0
      %v3818 = vadd.f32 %v3816, %v3817
      %v3819 = vsel %vm3775, %v3749, 0.0
      %v3820 = vadd.f32 %v3818, %v3819
      %v3821 = vsel %vm3775, %v3750, 0.0
      %v3822 = vadd.f32 %v3820, %v3821
      %v3823 = vsel %vm3775, %v3751, 0.0
      %v3824 = vadd.f32 %v3822, %v3823
      %v3825 = vsel %vm3775, %v3752, 0.0
      %v3826 = vadd.f32 %v3824, %v3825
      %v3827 = vsel %vm3775, %v3753, 0.0
      %v3828 = vadd.f32 %v3826, %v3827
      %v3829 = vsel %vm3775, %v3754, 0.0
      %v3830 = vadd.f32 %v3828, %v3829
      %v3831 = vsel %vm3775, %v3755, 0.0
      %v3832 = vadd.f32 %v3830, %v3831
      %v3833 = vsel %vm3775, %v3756, 0.0
      %v3834 = vadd.f32 %v3832, %v3833
      %v3835 = vsel %vm3775, %v3757, 0.0
      %v3836 = vadd.f32 %v3834, %v3835
      %v3837 = vsel %vm3775, %v3758, 0.0
      %v3838 = vadd.f32 %v3836, %v3837
      %v3839 = vsel %vm3775, %v3759, 0.0
      %v3840 = vadd.f32 %v3838, %v3839
      %v3841 = vsel %vm3775, %v3760, 0.0
      %v3842 = vadd.f32 %v3840, %v3841
      %v3843 = vsel %vm3775, %v3761, 0.0
      %v3844 = vadd.f32 %v3842, %v3843
      %v3845 = vsel %vm3775, %v3762, 0.0
      %v3846 = vadd.f32 %v3844, %v3845
      %v3847 = vsel %vm3775, %v3763, 0.0
      %v3848 = vadd.f32 %v3846, %v3847
      %v3849 = vsel %vm3775, %v3764, 0.0
      %v3850 = vadd.f32 %v3848, %v3849
      %v3851 = vsel %vm3775, %v3765, 0.0
      %v3852 = vadd.f32 %v3850, %v3851
      %v3853 = vsel %vm3775, %v3766, 0.0
      %v3854 = vadd.f32 %v3852, %v3853
      %v3855 = vsel %vm3775, %v3767, 0.0
      %v3856 = vadd.f32 %v3854, %v3855
      %v3857 = vsel %vm3775, %v3768, 0.0
      %v3858 = vadd.f32 %v3856, %v3857
      %v3859 = vsel %vm3775, %v3769, 0.0
      %v3860 = vadd.f32 %v3858, %v3859
      %v3861 = vsel %vm3775, %v3770, 0.0
      %v3862 = vadd.f32 %v3860, %v3861
      %v3863 = vsel %vm3775, %v3771, 0.0
      %v3864 = vadd.f32 %v3862, %v3863
      %v3865 = vsel %vm3775, %v3772, 0.0
      %v3866 = vadd.f32 %v3864, %v3865
      %v3867 = vsel %vm3775, %v3773, 0.0
      %v3868 = vadd.f32 %v3866, %v3867
      %v3869 = vsel %vm3775, %v3774, 0.0
      %v3870 = vadd.f32 %v3868, %v3869
      %v3871 = vrot.slane %v3870, 4
      %v3872 = vadd.f32 %v3870, %v3871
      %v3873 = vrot.slane %v3872, 2
      %v3874 = vadd.f32 %v3872, %v3873
      %v3875 = vrot.slane %v3874, 1
      %v3876 = vadd.f32 %v3874, %v3875
      %vm3877 = vcmask 57344
      %3878 = vst.msk [vmem:[%s211] sm:$0x1] %vm3877, %v3876
      %v3879 = vmul.f32 %v3743, %v3743
      %v3880 = vmul.f32 %v3744, %v3744
      %v3881 = vmul.f32 %v3745, %v3745
      %v3882 = vmul.f32 %v3746, %v3746
      %v3883 = vmul.f32 %v3747, %v3747
      %v3884 = vmul.f32 %v3748, %v3748
      %v3885 = vmul.f32 %v3749, %v3749
      %v3886 = vmul.f32 %v3750, %v3750
      %v3887 = vmul.f32 %v3751, %v3751
      %v3888 = vmul.f32 %v3752, %v3752
      %v3889 = vmul.f32 %v3753, %v3753
      %v3890 = vmul.f32 %v3754, %v3754
      %v3891 = vmul.f32 %v3755, %v3755
      %v3892 = vmul.f32 %v3756, %v3756
      %v3893 = vmul.f32 %v3757, %v3757
      %v3894 = vmul.f32 %v3758, %v3758
      %v3895 = vmul.f32 %v3759, %v3759
      %v3896 = vmul.f32 %v3760, %v3760
      %v3897 = vmul.f32 %v3761, %v3761
      %v3898 = vmul.f32 %v3762, %v3762
      %v3899 = vmul.f32 %v3763, %v3763
      %v3900 = vmul.f32 %v3764, %v3764
      %v3901 = vmul.f32 %v3765, %v3765
      %v3902 = vmul.f32 %v3766, %v3766
      %v3903 = vmul.f32 %v3767, %v3767
      %v3904 = vmul.f32 %v3768, %v3768
      %v3905 = vmul.f32 %v3769, %v3769
      %v3906 = vmul.f32 %v3770, %v3770
      %v3907 = vmul.f32 %v3771, %v3771
      %v3908 = vmul.f32 %v3772, %v3772
      %v3909 = vmul.f32 %v3773, %v3773
      %v3910 = vmul.f32 %v3774, %v3774
      %v3911 = vsel %vm3775, %v3879, 0.0
      %v3912 = vsel %vm3775, %v3880, 0.0
      %v3913 = vadd.f32 %v3911, %v3912
      %v3914 = vsel %vm3775, %v3881, 0.0
      %v3915 = vadd.f32 %v3913, %v3914
      %v3916 = vsel %vm3775, %v3882, 0.0
      %v3917 = vadd.f32 %v3915, %v3916
      %v3918 = vsel %vm3775, %v3883, 0.0
      %v3919 = vadd.f32 %v3917, %v3918
      %v3920 = vsel %vm3775, %v3884, 0.0
      %v3921 = vadd.f32 %v3919, %v3920
      %v3922 = vsel %vm3775, %v3885, 0.0
      %v3923 = vadd.f32 %v3921, %v3922
      %v3924 = vsel %vm3775, %v3886, 0.0
      %v3925 = vadd.f32 %v3923, %v3924
      %v3926 = vsel %vm3775, %v3887, 0.0
      %v3927 = vadd.f32 %v3925, %v3926
      %v3928 = vsel %vm3775, %v3888, 0.0
      %v3929 = vadd.f32 %v3927, %v3928
      %v3930 = vsel %vm3775, %v3889, 0.0
      %v3931 = vadd.f32 %v3929, %v3930
      %v3932 = vsel %vm3775, %v3890, 0.0
      %v3933 = vadd.f32 %v3931, %v3932
      %v3934 = vsel %vm3775, %v3891, 0.0
      %v3935 = vadd.f32 %v3933, %v3934
      %v3936 = vsel %vm3775, %v3892, 0.0
      %v3937 = vadd.f32 %v3935, %v3936
      %v3938 = vsel %vm3775, %v3893, 0.0
      %v3939 = vadd.f32 %v3937, %v3938
      %v3940 = vsel %vm3775, %v3894, 0.0
      %v3941 = vadd.f32 %v3939, %v3940
      %v3942 = vsel %vm3775, %v3895, 0.0
      %v3943 = vadd.f32 %v3941, %v3942
      %v3944 = vsel %vm3775, %v3896, 0.0
      %v3945 = vadd.f32 %v3943, %v3944
      %v3946 = vsel %vm3775, %v3897, 0.0
      %v3947 = vadd.f32 %v3945, %v3946
      %v3948 = vsel %vm3775, %v3898, 0.0
      %v3949 = vadd.f32 %v3947, %v3948
      %v3950 = vsel %vm3775, %v3899, 0.0
      %v3951 = vadd.f32 %v3949, %v3950
      %v3952 = vsel %vm3775, %v3900, 0.0
      %v3953 = vadd.f32 %v3951, %v3952
      %v3954 = vsel %vm3775, %v3901, 0.0
      %v3955 = vadd.f32 %v3953, %v3954
      %v3956 = vsel %vm3775, %v3902, 0.0
      %v3957 = vadd.f32 %v3955, %v3956
      %v3958 = vsel %vm3775, %v3903, 0.0
      %v3959 = vadd.f32 %v3957, %v3958
      %v3960 = vsel %vm3775, %v3904, 0.0
      %v3961 = vadd.f32 %v3959, %v3960
      %v3962 = vsel %vm3775, %v3905, 0.0
      %v3963 = vadd.f32 %v3961, %v3962
      %v3964 = vsel %vm3775, %v3906, 0.0
      %v3965 = vadd.f32 %v3963, %v3964
      %v3966 = vsel %vm3775, %v3907, 0.0
      %v3967 = vadd.f32 %v3965, %v3966
      %v3968 = vsel %vm3775, %v3908, 0.0
      %v3969 = vadd.f32 %v3967, %v3968
      %v3970 = vsel %vm3775, %v3909, 0.0
      %v3971 = vadd.f32 %v3969, %v3970
      %v3972 = vsel %vm3775, %v3910, 0.0
      %v3973 = vadd.f32 %v3971, %v3972
      %v3974 = vrot.slane %v3973, 4
      %v3975 = vadd.f32 %v3973, %v3974
      %v3976 = vrot.slane %v3975, 2
      %v3977 = vadd.f32 %v3975, %v3976
      %v3978 = vrot.slane %v3977, 1
      %v3979 = vadd.f32 %v3977, %v3978
      %3980 = vst.msk [vmem:[%s214] sm:$0x1] %vm3877, %v3979
      %p3981 = scmp.lt.s32.totalorder %s16, 1
      %s3982 = scalar_select %p3981, %s16, 1
      %s3983 = smul.addr %s3982, 32
      %s3984 = smul.addr %s3983, 8
      %s3985 = scalar_lea.vmem %s2, %s3984
      %p3986 = scmp.lt.s32.totalorder %s16, 1
      %s3987 = scalar_select %p3986, %s16, 1
      %s3988 = scalar_lea.vmem %s3, %s3987
      %p3989 = scmp.lt.s32.totalorder %s16, 1
      %s3990 = scalar_select %p3989, %s16, 1
      %s3991 = scalar_lea.vmem %s4, %s3990
      // Predicated region
      $region29: #{conv_block_forward.2} parent=27 // pred_check
        %p3992 = pneg %p81
      $region30: #{conv_block_forward.2} parent=27 // pred_check_branch
        %3994 = sbr.rel (%p3992) target = $region32
      $region31: #{conv_block_forward.2} parent=27 // pred_region
        _
      $region32: #{conv_block_forward.2} parent=27 // pred_fallthru
        _
      // Predicated region
      $region33: #{conv_block_forward.2} parent=27 // pred_check
        %p3995 = pneg %p107
      $region34: #{conv_block_forward.2} parent=27 // pred_check_branch
        %3997 = sbr.rel (%p3995) target = $region36
      $region35: #{conv_block_forward.2} parent=27 // pred_region
        _
      $region36: #{conv_block_forward.2} parent=27 // pred_fallthru
        _
      // Predicated region
      $region37: #{conv_block_forward.2} parent=27 // pred_check
        %p3998 = pneg %p133
      $region38: #{conv_block_forward.2} parent=27 // pred_check_branch
        %4000 = sbr.rel (%p3998) target = $region40
      $region39: #{conv_block_forward.2} parent=27 // pred_region
        _
      $region40: #{conv_block_forward.2} parent=27 // pred_fallthru
        _
    $region28: #{conv_block_forward.2} parent=5 // pred_fallthru
      _
    %p4001 = scmp.le.s32.totalorder 2, %s11
    // Predicated region
    $region41: #{conv_block_forward.2} parent=5 // pred_check
      %p4002 = pneg %p4001
    $region42: #{conv_block_forward.2} parent=5 // pred_check_branch
      %4004 = sbr.rel (%p4002) target = $region44
    $region43: #{conv_block_forward.2} parent=5 // pred_region
      %s4005 = ssub.s32 %s11, 2
      // Predicated region
      $region45: #{conv_block_forward.2} parent=43 // pred_check
        %p4006 = pneg %p87
      $region46: #{conv_block_forward.2} parent=43 // pred_check_branch
        %4008 = sbr.rel (%p4006) target = $region48
      $region47: #{conv_block_forward.2} parent=43 // pred_region
        %p4009 = scmp.lt.s32.totalorder %s17, 1
        %s4010 = scalar_select %p4009, %s17, 1
        %s4011 = smul.addr %s4010, 32
        %s4012 = smul.addr %s4011, 8
        %s4013 = scalar_lea.vmem %s2, %s4012
      $region48: #{conv_block_forward.2} parent=43 // pred_fallthru
        _
      // Predicated region
      $region49: #{conv_block_forward.2} parent=43 // pred_check
        %p4014 = pneg %p113
      $region50: #{conv_block_forward.2} parent=43 // pred_check_branch
        %4016 = sbr.rel (%p4014) target = $region52
      $region51: #{conv_block_forward.2} parent=43 // pred_region
        %p4017 = scmp.lt.s32.totalorder %s17, 1
        %s4018 = scalar_select %p4017, %s17, 1
        %s4019 = scalar_lea.vmem %s3, %s4018
      $region52: #{conv_block_forward.2} parent=43 // pred_fallthru
        _
      // Predicated region
      $region53: #{conv_block_forward.2} parent=43 // pred_check
        %p4020 = pneg %p139
      $region54: #{conv_block_forward.2} parent=43 // pred_check_branch
        %4022 = sbr.rel (%p4020) target = $region56
      $region55: #{conv_block_forward.2} parent=43 // pred_region
        %p4023 = scmp.lt.s32.totalorder %s17, 1
        %s4024 = scalar_select %p4023, %s17, 1
        %s4025 = scalar_lea.vmem %s4, %s4024
      $region56: #{conv_block_forward.2} parent=43 // pred_fallthru
        _
    $region44: #{conv_block_forward.2} parent=5 // pred_fallthru
      _
  $region6: #{conv_block_forward.2} parent=0 // loop_footer
    %s15 = sadd.s32 1, %s11
  $region7: #{conv_block_forward.2} parent=0 // loop_footer_branch
    %10 = sbr.rel target = $region3
  $region8: #{conv_block_forward.2} parent=0 // loop_exit
    _

</llo_original>
